<compile_context>
chip_gen: v7x
topology: tpu7x:2x2x1
jax: 0.10.0
libtpu: 0.0.40
codegen_flags: <defaults>
</compile_context>

<pallas_src>
import functools

import numpy as np
import jax
import jax.numpy as jnp
from jax import lax
from jax.experimental import pallas as pl
from jax.experimental.pallas import tpu as pltpu

_VMEM_LIMIT = 48 * 1024 * 1024  # leaves headroom inside v7x's 64 MiB physical VMEM


# --------------------------------------------------------------------------
# Host-side construction of the tiny pyrdown operator matrices
# --------------------------------------------------------------------------
def _reflect_idx(i: int, n: int) -> int:
    if n == 1:
        return 0
    while i < 0 or i >= n:
        i = -i if i < 0 else 2 * (n - 1) - i
    return i


def _pyrdown_matrix(n: int) -> np.ndarray:
    """(n//2, n) operator: 1-D [1,4,6,4,1]/16 blur with reflect padding followed
    by a bilinear factor-2 downsample (average of adjacent pairs). This is the
    1-D factor of kornia.geometry.transform.pyrdown."""
    w = np.array([1.0, 4.0, 6.0, 4.0, 1.0], dtype=np.float64) / 16.0
    K = np.zeros((n, n), dtype=np.float64)
    for i in range(n):
        for t in range(-2, 3):
            K[i, _reflect_idx(i + t, n)] += w[t + 2]
    no = n // 2
    D = np.zeros((no, n), dtype=np.float64)
    for i in range(no):
        D[i, 2 * i] = 0.5
        D[i, 2 * i + 1] = 0.5
    return (D @ K).astype(np.float32)


# --------------------------------------------------------------------------
# In-kernel helpers
# --------------------------------------------------------------------------
def _edge_masks(shape):
    """Precompute first/last boolean edge masks along H (sublane) and W (lane).

    Returns (eh, ew); each is (first_mask, last_mask) of shape (1, H, W) when
    the pltpu.roll path is usable for that axis, else None (slice+concat
    fallback). Rolls are used only when the dim is a multiple of the native
    vreg tile (8 sublanes / 128 lanes) -- the cheap, well-supported case.
    Masks are built once and reused so the iotas are not re-emitted per shift.
    """
    _, H, W = shape
    mshape = (1, H, W)
    eh = ew = None
    if H > 1 and H % 8 == 0:
        ri = lax.broadcasted_iota(jnp.int32, mshape, 1)
        eh = (ri == 0, ri == H - 1)
    if W > 1 and W % 128 == 0:
        ci = lax.broadcasted_iota(jnp.int32, mshape, 2)
        ew = (ci == 0, ci == W - 1)
    return eh, ew


def _rshift(x, axis, delta, edge):
    """Replicate-padded shift: out[..., i, ...] = x[..., clamp(i + delta), ...]."""
    n = x.shape[axis]
    if n == 1:
        return x
    if edge is not None:
        # pltpu.roll follows jnp.roll semantics; pass a non-negative shift and
        # fix the single wrapped-around row/column with a cheap select.
        rolled = pltpu.roll(x, (-delta) % n, axis)
        m = edge[1] if delta == 1 else edge[0]
        return jnp.where(m, x, rolled)
    if delta == 1:
        return jnp.concatenate(
            [lax.slice_in_dim(x, 1, n, axis=axis),
             lax.slice_in_dim(x, n - 1, n, axis=axis)], axis=axis)
    return jnp.concatenate(
        [lax.slice_in_dim(x, 0, 1, axis=axis),
         lax.slice_in_dim(x, 0, n - 1, axis=axis)], axis=axis)


def _sobel(x, eh, ew):
    """kornia.filters.spatial_gradient (mode='sobel', normalized, replicate pad).
    x: (C, H, W) -> (gx, gy) (up to an overall sign the loss is blind to)."""
    t = _rshift(x, 2, +1, ew) - _rshift(x, 2, -1, ew)
    gx = (_rshift(t, 1, -1, eh) + 2.0 * t + _rshift(t, 1, +1, eh)) * 0.125
    s = _rshift(x, 1, +1, eh) - _rshift(x, 1, -1, eh)
    gy = (_rshift(s, 2, -1, ew) + 2.0 * s + _rshift(s, 2, +1, ew)) * 0.125
    return gx, gy


def _masked_grad_terms(gt, pd):
    """Masked |grad(pd) - grad(gt)| sum and selected-element count for one
    (C, H, W) image pair (== masked_select semantics of the reference)."""
    C = gt.shape[0]
    eh, ew = _edge_masks(gt.shape)
    ggx, ggy = _sobel(gt, eh, ew)           # gt gradients -> finiteness mask only
    dgx, dgy = _sobel(pd - gt, eh, ew)      # sobel linearity: == sobel(pd) - sobel(gt)
    finx = jnp.abs(ggx) < jnp.inf           # isfinite (NaN comparisons are False)
    finy = jnp.abs(ggy) < jnp.inf
    if C > 1:                               # .all(dim=channel); skipped for depth (C==1)
        finx = jnp.min(finx.astype(jnp.float32), axis=0, keepdims=True) > 0.5
        finy = jnp.min(finy.astype(jnp.float32), axis=0, keepdims=True) > 0.5
    err = (jnp.where(finx, jnp.abs(dgx), 0.0)
           + jnp.where(finy, jnp.abs(dgy), 0.0))
    sel = finx.astype(jnp.float32) + finy.astype(jnp.float32)
    return jnp.sum(err), float(C) * jnp.sum(sel)


def _pyrdown_image(x, ph, pwt):
    """kornia pyrdown of one (C, H, W) image via two small MXU matmuls."""
    C, H, W = x.shape
    t = jnp.dot(x.reshape(C * H, W), pwt, preferred_element_type=jnp.float32)
    if C == 1:
        return jnp.dot(ph, t, preferred_element_type=jnp.float32)[None]
    t = t.reshape(C, H, t.shape[-1])
    return jnp.stack(
        [jnp.dot(ph, t[c], preferred_element_type=jnp.float32) for c in range(C)],
        axis=0)
    # TODO(synk): the matmul formulation spreads a non-finite input pixel over a
    # whole row/col of the downsampled image instead of the local 5x5/2x2 window
    # a direct conv would touch; it only differs from kornia for non-finite gt.


# --------------------------------------------------------------------------
# Kernels: fused grad-loss + pyrdown (scales 0..n-2), loss-only (last scale)
# --------------------------------------------------------------------------
def _loss_pyr_kernel(gt_ref, pd_ref, ph_ref, pwt_ref,
                     sum_ref, cnt_ref, gtd_ref, pdd_ref, acc_ref):
    b = pl.program_id(0)
    nb = pl.num_programs(0)

    @pl.when(b == 0)
    def _init():
        acc_ref[0] = jnp.float32(0.0)
        acc_ref[1] = jnp.float32(0.0)

    gt = gt_ref[0]                      # (C, H, W)
    pd = pd_ref[0]

    s, c = _masked_grad_terms(gt, pd)
    acc_ref[0] += s
    acc_ref[1] += c

    # Next-scale images from the same VMEM-resident tiles (no extra HBM read).
    gtd_ref[0] = _pyrdown_image(gt, ph_ref[...], pwt_ref[...])
    pdd_ref[0] = _pyrdown_image(pd, ph_ref[...], pwt_ref[...])

    @pl.when(b == nb - 1)
    def _finalize():
        sum_ref[0] = acc_ref[0]
        cnt_ref[0] = acc_ref[1]


def _loss_only_kernel(gt_ref, pd_ref, sum_ref, cnt_ref, acc_ref):
    b = pl.program_id(0)
    nb = pl.num_programs(0)

    @pl.when(b == 0)
    def _init():
        acc_ref[0] = jnp.float32(0.0)
        acc_ref[1] = jnp.float32(0.0)

    s, c = _masked_grad_terms(gt_ref[0], pd_ref[0])
    acc_ref[0] += s
    acc_ref[1] += c

    @pl.when(b == nb - 1)
    def _finalize():
        sum_ref[0] = acc_ref[0]
        cnt_ref[0] = acc_ref[1]


def _scalar_out_spec():
    return pl.BlockSpec((1,), lambda b: (0,), memory_space=pltpu.MemorySpace.SMEM)


def _loss_and_pyrdown(gt, pd):
    """One scale: returns (sum, cnt, pyrdown(gt), pyrdown(pd))."""
    B, C, H, W = gt.shape
    Ho, Wo = H // 2, W // 2
    ph = jnp.asarray(_pyrdown_matrix(H))        # (Ho, H)
    pwt = jnp.asarray(_pyrdown_matrix(W).T)     # (W, Wo)
    img_spec = pl.BlockSpec((1, C, H, W), lambda b: (b, 0, 0, 0))
    out_img_spec = pl.BlockSpec((1, C, Ho, Wo), lambda b: (b, 0, 0, 0))
    return pl.pallas_call(
        _loss_pyr_kernel,
        grid=(B,),
        in_specs=[img_spec, img_spec,
                  pl.BlockSpec((Ho, H), lambda b: (0, 0)),
                  pl.BlockSpec((W, Wo), lambda b: (0, 0))],
        out_specs=(_scalar_out_spec(), _scalar_out_spec(),
                   out_img_spec, out_img_spec),
        out_shape=(jax.ShapeDtypeStruct((1,), jnp.float32),
                   jax.ShapeDtypeStruct((1,), jnp.float32),
                   jax.ShapeDtypeStruct((B, C, Ho, Wo), jnp.float32),
                   jax.ShapeDtypeStruct((B, C, Ho, Wo), jnp.float32)),
        scratch_shapes=[pltpu.SMEM((2,), jnp.float32)],
        compiler_params=pltpu.CompilerParams(
            # scalar loss accumulates across the B axis -> "arbitrary"
            dimension_semantics=("arbitrary",),
            vmem_limit_bytes=_VMEM_LIMIT),
    )(gt, pd, ph, pwt)


def _loss_only(gt, pd):
    B, C, H, W = gt.shape
    img_spec = pl.BlockSpec((1, C, H, W), lambda b: (b, 0, 0, 0))
    return pl.pallas_call(
        _loss_only_kernel,
        grid=(B,),
        in_specs=[img_spec, img_spec],
        out_specs=(_scalar_out_spec(), _scalar_out_spec()),
        out_shape=(jax.ShapeDtypeStruct((1,), jnp.float32),
                   jax.ShapeDtypeStruct((1,), jnp.float32)),
        scratch_shapes=[pltpu.SMEM((2,), jnp.float32)],
        compiler_params=pltpu.CompilerParams(
            dimension_semantics=("arbitrary",),
            vmem_limit_bytes=_VMEM_LIMIT),
    )(gt, pd)


# --------------------------------------------------------------------------
# Top-level forward pass (== MSGradientLoss(num_scales).forward)
# --------------------------------------------------------------------------
@functools.partial(jax.jit, static_argnames=("num_scales",))
def ms_gradient_loss(depth_gt: jax.Array, depth_pred: jax.Array,
                     num_scales: int = 4) -> jax.Array:
    gt = depth_gt.astype(jnp.float32)
    pd = depth_pred.astype(jnp.float32)
    loss = jnp.float32(0.0)
    for s in range(num_scales):
        if s < num_scales - 1:
            ssum, cnt, gt, pd = _loss_and_pyrdown(gt, pd)
        else:
            ssum, cnt = _loss_only(gt, pd)
        # masked_select(...).mean()  ==  masked sum / selected count
        loss = loss + ssum[0] / cnt[0]
    return loss


# --------------------------------------------------------------------------
# Pure-JAX (XLA) reference, used only for a numerical self-check
# --------------------------------------------------------------------------
def _ref_shift(x, axis, d):
    n = x.shape[axis]
    if d == 1:
        return jnp.concatenate([lax.slice_in_dim(x, 1, n, axis=axis),
                                lax.slice_in_dim(x, n - 1, n, axis=axis)], axis=axis)
    return jnp.concatenate([lax.slice_in_dim(x, 0, 1, axis=axis),
                            lax.slice_in_dim(x, 0, n - 1, axis=axis)], axis=axis)


def _ref_sobel(x):  # x: (B, C, H, W)
    t = _ref_shift(x, 3, +1) - _ref_shift(x, 3, -1)
    gx = (_ref_shift(t, 2, -1) + 2.0 * t + _ref_shift(t, 2, +1)) * 0.125
    s = _ref_shift(x, 2, +1) - _ref_shift(x, 2, -1)
    gy = (_ref_shift(s, 3, -1) + 2.0 * s + _ref_shift(s, 3, +1)) * 0.125
    return gx, gy


def _ref_pyrdown(x):
    _, _, H, W = x.shape
    ph = jnp.asarray(_pyrdown_matrix(H))
    pw = jnp.asarray(_pyrdown_matrix(W))
    return jnp.einsum("oh,bchw,pw->bcop", ph, x, pw,
                      precision=lax.Precision.HIGHEST)


def ms_gradient_loss_reference(depth_gt, depth_pred, num_scales: int = 4):
    gt = depth_gt.astype(jnp.float32)
    pd = depth_pred.astype(jnp.float32)
    loss = jnp.float32(0.0)
    for s in range(num_scales):
        if s > 0:
            gt = _ref_pyrdown(gt)
            pd = _ref_pyrdown(pd)
        C = gt.shape[1]
        ggx, ggy = _ref_sobel(gt)
        pgx, pgy = _ref_sobel(pd)
        mx = jnp.all(jnp.isfinite(ggx), axis=1, keepdims=True)
        my = jnp.all(jnp.isfinite(ggy), axis=1, keepdims=True)
        num = (jnp.sum(jnp.where(mx, jnp.abs(pgx - ggx), 0.0))
               + jnp.sum(jnp.where(my, jnp.abs(pgy - ggy), 0.0)))
        den = C * (jnp.sum(mx) + jnp.sum(my))
        loss = loss + num / den
    return loss


if __name__ == "__main__":
    key = jax.random.PRNGKey(0)
    k1, k2 = jax.random.split(key)
    B, C, H, W = 2, 1, 16, 16
    depth_gt = jax.random.uniform(k1, (B, C, H, W), jnp.float32, 0.5, 5.0)
    depth_pred = jax.random.uniform(k2, (B, C, H, W), jnp.float32, 0.5, 5.0)

    loss = ms_gradient_loss(depth_gt, depth_pred, num_scales=4)
    jax.block_until_ready(loss)

    ref = ms_gradient_loss_reference(depth_gt, depth_pred, num_scales=4)
    np.testing.assert_allclose(np.asarray(loss), np.asarray(ref),
                               rtol=5e-4, atol=1e-5)
    print("KERNEL_OK")
</pallas_src>

<mosaic_0001>
module attributes {stable_mosaic.version = 11 : i64} {
  func.func @_loss_only_kernel(%arg0: i32, %arg1: memref<1x1x2x2xf32, #tpu.memory_space<vmem>>, %arg2: memref<1x1x2x2xf32, #tpu.memory_space<vmem>>, %arg3: memref<1xf32, #tpu.memory_space<smem>>, %arg4: memref<1xf32, #tpu.memory_space<smem>>, %arg5: memref<2xf32, #tpu.memory_space<smem>>) attributes {dimension_semantics = [#tpu.dimension_semantics<arbitrary>], iteration_bounds = array<i64: 2>, scalar_prefetch = 0 : i64, scratch_operands = 1 : i64, tpu.core_type = #tpu.core_type<tc>, window_params = [{transform_indices = @transform_0, window_bounds = array<i64: 1, 1, 2, 2>}, {transform_indices = @transform_1, window_bounds = array<i64: 1, 1, 2, 2>}, {transform_indices = @transform_2, window_bounds = array<i64: 1>}, {transform_indices = @transform_3, window_bounds = array<i64: 1>}]} {
    %c0_i32 = arith.constant 0 : i32
    %0 = arith.cmpi eq, %arg0, %c0_i32 : i32
    %1 = arith.extui %0 : i1 to i32
    %c0_i32_0 = arith.constant 0 : i32
    %2 = arith.cmpi ne, %1, %c0_i32_0 : i32
    scf.if %2 {
      %cst_26 = arith.constant 0.000000e+00 : f32
      %c0_27 = arith.constant 0 : index
      %120 = memref.load %arg5[%c0_27] : memref<2xf32, #tpu.memory_space<smem>>
      memref.store %cst_26, %arg5[%c0_27] : memref<2xf32, #tpu.memory_space<smem>>
      %cst_28 = arith.constant 0.000000e+00 : f32
      %c1_29 = arith.constant 1 : index
      %121 = memref.load %arg5[%c1_29] : memref<2xf32, #tpu.memory_space<smem>>
      memref.store %cst_28, %arg5[%c1_29] : memref<2xf32, #tpu.memory_space<smem>>
    } else {
    }
    %c0 = arith.constant 0 : index
    %c0_1 = arith.constant 0 : index
    %c0_2 = arith.constant 0 : index
    %c0_3 = arith.constant 0 : index
    %3 = vector.load %arg1[%c0, %c0_1, %c0_2, %c0_3] : memref<1x1x2x2xf32, #tpu.memory_space<vmem>>, vector<1x1x2x2xf32>
    %4 = vector.shape_cast %3 : vector<1x1x2x2xf32> to vector<1x2x2xf32>
    %c0_4 = arith.constant 0 : index
    %c0_5 = arith.constant 0 : index
    %c0_6 = arith.constant 0 : index
    %c0_7 = arith.constant 0 : index
    %5 = vector.load %arg2[%c0_4, %c0_5, %c0_6, %c0_7] : memref<1x1x2x2xf32, #tpu.memory_space<vmem>>, vector<1x1x2x2xf32>
    %6 = vector.shape_cast %5 : vector<1x1x2x2xf32> to vector<1x2x2xf32>
    %7 = vector.extract_strided_slice %4 {offsets = [0, 0, 1], sizes = [1, 2, 1], strides = [1, 1, 1]} : vector<1x2x2xf32> to vector<1x2x1xf32>
    %8 = vector.extract_strided_slice %4 {offsets = [0, 0, 1], sizes = [1, 2, 1], strides = [1, 1, 1]} : vector<1x2x2xf32> to vector<1x2x1xf32>
    %9 = tpu.concatenate %7, %8 in 2 : vector<1x2x1xf32>, vector<1x2x1xf32> -> vector<1x2x2xf32>
    %10 = vector.extract_strided_slice %4 {offsets = [0, 0, 0], sizes = [1, 2, 1], strides = [1, 1, 1]} : vector<1x2x2xf32> to vector<1x2x1xf32>
    %11 = vector.extract_strided_slice %4 {offsets = [0, 0, 0], sizes = [1, 2, 1], strides = [1, 1, 1]} : vector<1x2x2xf32> to vector<1x2x1xf32>
    %12 = tpu.concatenate %10, %11 in 2 : vector<1x2x1xf32>, vector<1x2x1xf32> -> vector<1x2x2xf32>
    %13 = arith.subf %9, %12 : vector<1x2x2xf32>
    %14 = vector.extract_strided_slice %13 {offsets = [0, 0, 0], sizes = [1, 1, 2], strides = [1, 1, 1]} : vector<1x2x2xf32> to vector<1x1x2xf32>
    %15 = vector.extract_strided_slice %13 {offsets = [0, 0, 0], sizes = [1, 1, 2], strides = [1, 1, 1]} : vector<1x2x2xf32> to vector<1x1x2xf32>
    %16 = tpu.concatenate %14, %15 in 1 : vector<1x1x2xf32>, vector<1x1x2xf32> -> vector<1x2x2xf32>
    %cst = arith.constant 2.000000e+00 : f32
    %17 = vector.broadcast %cst : f32 to vector<1x2x2xf32>
    %18 = arith.mulf %17, %13 : vector<1x2x2xf32>
    %19 = arith.addf %16, %18 : vector<1x2x2xf32>
    %20 = vector.extract_strided_slice %13 {offsets = [0, 1, 0], sizes = [1, 1, 2], strides = [1, 1, 1]} : vector<1x2x2xf32> to vector<1x1x2xf32>
    %21 = vector.extract_strided_slice %13 {offsets = [0, 1, 0], sizes = [1, 1, 2], strides = [1, 1, 1]} : vector<1x2x2xf32> to vector<1x1x2xf32>
    %22 = tpu.concatenate %20, %21 in 1 : vector<1x1x2xf32>, vector<1x1x2xf32> -> vector<1x2x2xf32>
    %23 = arith.addf %19, %22 : vector<1x2x2xf32>
    %cst_8 = arith.constant 1.250000e-01 : f32
    %24 = vector.broadcast %cst_8 : f32 to vector<1x2x2xf32>
    %25 = arith.mulf %23, %24 : vector<1x2x2xf32>
    %26 = vector.extract_strided_slice %4 {offsets = [0, 1, 0], sizes = [1, 1, 2], strides = [1, 1, 1]} : vector<1x2x2xf32> to vector<1x1x2xf32>
    %27 = vector.extract_strided_slice %4 {offsets = [0, 1, 0], sizes = [1, 1, 2], strides = [1, 1, 1]} : vector<1x2x2xf32> to vector<1x1x2xf32>
    %28 = tpu.concatenate %26, %27 in 1 : vector<1x1x2xf32>, vector<1x1x2xf32> -> vector<1x2x2xf32>
    %29 = vector.extract_strided_slice %4 {offsets = [0, 0, 0], sizes = [1, 1, 2], strides = [1, 1, 1]} : vector<1x2x2xf32> to vector<1x1x2xf32>
    %30 = vector.extract_strided_slice %4 {offsets = [0, 0, 0], sizes = [1, 1, 2], strides = [1, 1, 1]} : vector<1x2x2xf32> to vector<1x1x2xf32>
    %31 = tpu.concatenate %29, %30 in 1 : vector<1x1x2xf32>, vector<1x1x2xf32> -> vector<1x2x2xf32>
    %32 = arith.subf %28, %31 : vector<1x2x2xf32>
    %33 = vector.extract_strided_slice %32 {offsets = [0, 0, 0], sizes = [1, 2, 1], strides = [1, 1, 1]} : vector<1x2x2xf32> to vector<1x2x1xf32>
    %34 = vector.extract_strided_slice %32 {offsets = [0, 0, 0], sizes = [1, 2, 1], strides = [1, 1, 1]} : vector<1x2x2xf32> to vector<1x2x1xf32>
    %35 = tpu.concatenate %33, %34 in 2 : vector<1x2x1xf32>, vector<1x2x1xf32> -> vector<1x2x2xf32>
    %cst_9 = arith.constant 2.000000e+00 : f32
    %36 = vector.broadcast %cst_9 : f32 to vector<1x2x2xf32>
    %37 = arith.mulf %36, %32 : vector<1x2x2xf32>
    %38 = arith.addf %35, %37 : vector<1x2x2xf32>
    %39 = vector.extract_strided_slice %32 {offsets = [0, 0, 1], sizes = [1, 2, 1], strides = [1, 1, 1]} : vector<1x2x2xf32> to vector<1x2x1xf32>
    %40 = vector.extract_strided_slice %32 {offsets = [0, 0, 1], sizes = [1, 2, 1], strides = [1, 1, 1]} : vector<1x2x2xf32> to vector<1x2x1xf32>
    %41 = tpu.concatenate %39, %40 in 2 : vector<1x2x1xf32>, vector<1x2x1xf32> -> vector<1x2x2xf32>
    %42 = arith.addf %38, %41 : vector<1x2x2xf32>
    %cst_10 = arith.constant 1.250000e-01 : f32
    %43 = vector.broadcast %cst_10 : f32 to vector<1x2x2xf32>
    %44 = arith.mulf %42, %43 : vector<1x2x2xf32>
    %45 = arith.subf %6, %4 : vector<1x2x2xf32>
    %46 = vector.extract_strided_slice %45 {offsets = [0, 0, 1], sizes = [1, 2, 1], strides = [1, 1, 1]} : vector<1x2x2xf32> to vector<1x2x1xf32>
    %47 = vector.extract_strided_slice %45 {offsets = [0, 0, 1], sizes = [1, 2, 1], strides = [1, 1, 1]} : vector<1x2x2xf32> to vector<1x2x1xf32>
    %48 = tpu.concatenate %46, %47 in 2 : vector<1x2x1xf32>, vector<1x2x1xf32> -> vector<1x2x2xf32>
    %49 = vector.extract_strided_slice %45 {offsets = [0, 0, 0], sizes = [1, 2, 1], strides = [1, 1, 1]} : vector<1x2x2xf32> to vector<1x2x1xf32>
    %50 = vector.extract_strided_slice %45 {offsets = [0, 0, 0], sizes = [1, 2, 1], strides = [1, 1, 1]} : vector<1x2x2xf32> to vector<1x2x1xf32>
    %51 = tpu.concatenate %49, %50 in 2 : vector<1x2x1xf32>, vector<1x2x1xf32> -> vector<1x2x2xf32>
    %52 = arith.subf %48, %51 : vector<1x2x2xf32>
    %53 = vector.extract_strided_slice %52 {offsets = [0, 0, 0], sizes = [1, 1, 2], strides = [1, 1, 1]} : vector<1x2x2xf32> to vector<1x1x2xf32>
    %54 = vector.extract_strided_slice %52 {offsets = [0, 0, 0], sizes = [1, 1, 2], strides = [1, 1, 1]} : vector<1x2x2xf32> to vector<1x1x2xf32>
    %55 = tpu.concatenate %53, %54 in 1 : vector<1x1x2xf32>, vector<1x1x2xf32> -> vector<1x2x2xf32>
    %cst_11 = arith.constant 2.000000e+00 : f32
    %56 = vector.broadcast %cst_11 : f32 to vector<1x2x2xf32>
    %57 = arith.mulf %56, %52 : vector<1x2x2xf32>
    %58 = arith.addf %55, %57 : vector<1x2x2xf32>
    %59 = vector.extract_strided_slice %52 {offsets = [0, 1, 0], sizes = [1, 1, 2], strides = [1, 1, 1]} : vector<1x2x2xf32> to vector<1x1x2xf32>
    %60 = vector.extract_strided_slice %52 {offsets = [0, 1, 0], sizes = [1, 1, 2], strides = [1, 1, 1]} : vector<1x2x2xf32> to vector<1x1x2xf32>
    %61 = tpu.concatenate %59, %60 in 1 : vector<1x1x2xf32>, vector<1x1x2xf32> -> vector<1x2x2xf32>
    %62 = arith.addf %58, %61 : vector<1x2x2xf32>
    %cst_12 = arith.constant 1.250000e-01 : f32
    %63 = vector.broadcast %cst_12 : f32 to vector<1x2x2xf32>
    %64 = arith.mulf %62, %63 : vector<1x2x2xf32>
    %65 = vector.extract_strided_slice %45 {offsets = [0, 1, 0], sizes = [1, 1, 2], strides = [1, 1, 1]} : vector<1x2x2xf32> to vector<1x1x2xf32>
    %66 = vector.extract_strided_slice %45 {offsets = [0, 1, 0], sizes = [1, 1, 2], strides = [1, 1, 1]} : vector<1x2x2xf32> to vector<1x1x2xf32>
    %67 = tpu.concatenate %65, %66 in 1 : vector<1x1x2xf32>, vector<1x1x2xf32> -> vector<1x2x2xf32>
    %68 = vector.extract_strided_slice %45 {offsets = [0, 0, 0], sizes = [1, 1, 2], strides = [1, 1, 1]} : vector<1x2x2xf32> to vector<1x1x2xf32>
    %69 = vector.extract_strided_slice %45 {offsets = [0, 0, 0], sizes = [1, 1, 2], strides = [1, 1, 1]} : vector<1x2x2xf32> to vector<1x1x2xf32>
    %70 = tpu.concatenate %68, %69 in 1 : vector<1x1x2xf32>, vector<1x1x2xf32> -> vector<1x2x2xf32>
    %71 = arith.subf %67, %70 : vector<1x2x2xf32>
    %72 = vector.extract_strided_slice %71 {offsets = [0, 0, 0], sizes = [1, 2, 1], strides = [1, 1, 1]} : vector<1x2x2xf32> to vector<1x2x1xf32>
    %73 = vector.extract_strided_slice %71 {offsets = [0, 0, 0], sizes = [1, 2, 1], strides = [1, 1, 1]} : vector<1x2x2xf32> to vector<1x2x1xf32>
    %74 = tpu.concatenate %72, %73 in 2 : vector<1x2x1xf32>, vector<1x2x1xf32> -> vector<1x2x2xf32>
    %cst_13 = arith.constant 2.000000e+00 : f32
    %75 = vector.broadcast %cst_13 : f32 to vector<1x2x2xf32>
    %76 = arith.mulf %75, %71 : vector<1x2x2xf32>
    %77 = arith.addf %74, %76 : vector<1x2x2xf32>
    %78 = vector.extract_strided_slice %71 {offsets = [0, 0, 1], sizes = [1, 2, 1], strides = [1, 1, 1]} : vector<1x2x2xf32> to vector<1x2x1xf32>
    %79 = vector.extract_strided_slice %71 {offsets = [0, 0, 1], sizes = [1, 2, 1], strides = [1, 1, 1]} : vector<1x2x2xf32> to vector<1x2x1xf32>
    %80 = tpu.concatenate %78, %79 in 2 : vector<1x2x1xf32>, vector<1x2x1xf32> -> vector<1x2x2xf32>
    %81 = arith.addf %77, %80 : vector<1x2x2xf32>
    %cst_14 = arith.constant 1.250000e-01 : f32
    %82 = vector.broadcast %cst_14 : f32 to vector<1x2x2xf32>
    %83 = arith.mulf %81, %82 : vector<1x2x2xf32>
    %84 = math.absf %25 : vector<1x2x2xf32>
    %cst_15 = arith.constant 0x7F800000 : f32
    %85 = vector.broadcast %cst_15 : f32 to vector<1x2x2xf32>
    %86 = arith.cmpf olt, %84, %85 : vector<1x2x2xf32>
    %87 = math.absf %44 : vector<1x2x2xf32>
    %cst_16 = arith.constant 0x7F800000 : f32
    %88 = vector.broadcast %cst_16 : f32 to vector<1x2x2xf32>
    %89 = arith.cmpf olt, %87, %88 : vector<1x2x2xf32>
    %90 = math.absf %64 : vector<1x2x2xf32>
    %cst_17 = arith.constant 0.000000e+00 : f32
    %91 = vector.broadcast %cst_17 : f32 to vector<1x2x2xf32>
    %92 = arith.select %86, %90, %91 : vector<1x2x2xi1>, vector<1x2x2xf32>
    %93 = math.absf %83 : vector<1x2x2xf32>
    %cst_18 = arith.constant 0.000000e+00 : f32
    %94 = vector.broadcast %cst_18 : f32 to vector<1x2x2xf32>
    %95 = arith.select %89, %93, %94 : vector<1x2x2xi1>, vector<1x2x2xf32>
    %96 = arith.addf %92, %95 : vector<1x2x2xf32>
    %97 = arith.extui %86 : vector<1x2x2xi1> to vector<1x2x2xi32>
    %98 = arith.sitofp %97 : vector<1x2x2xi32> to vector<1x2x2xf32>
    %99 = arith.extui %89 : vector<1x2x2xi1> to vector<1x2x2xi32>
    %100 = arith.sitofp %99 : vector<1x2x2xi32> to vector<1x2x2xf32>
    %101 = arith.addf %98, %100 : vector<1x2x2xf32>
    %102 = vector.shape_cast %96 : vector<1x2x2xf32> to vector<1x1x2x2xf32>
    %cst_19 = arith.constant dense<0.000000e+00> : vector<1xf32>
    %103 = vector.multi_reduction <add>, %102, %cst_19 [1, 2, 3] : vector<1x1x2x2xf32> to vector<1xf32>
    %104 = vector.shape_cast %103 : vector<1xf32> to vector<1x1x1x1xf32>
    %105 = vector.extract %104[0, 0, 0, 0] : f32 from vector<1x1x1x1xf32>
    %106 = vector.shape_cast %101 : vector<1x2x2xf32> to vector<1x1x2x2xf32>
    %cst_20 = arith.constant dense<0.000000e+00> : vector<1xf32>
    %107 = vector.multi_reduction <add>, %106, %cst_20 [1, 2, 3] : vector<1x1x2x2xf32> to vector<1xf32>
    %108 = vector.shape_cast %107 : vector<1xf32> to vector<1x1x1x1xf32>
    %109 = vector.extract %108[0, 0, 0, 0] : f32 from vector<1x1x1x1xf32>
    %cst_21 = arith.constant 1.000000e+00 : f32
    %110 = arith.mulf %cst_21, %109 : f32
    %c0_22 = arith.constant 0 : index
    %111 = memref.load %arg5[%c0_22] : memref<2xf32, #tpu.memory_space<smem>>
    %112 = arith.addf %111, %105 : f32
    %c0_23 = arith.constant 0 : index
    %113 = memref.load %arg5[%c0_23] : memref<2xf32, #tpu.memory_space<smem>>
    memref.store %112, %arg5[%c0_23] : memref<2xf32, #tpu.memory_space<smem>>
    %c1 = arith.constant 1 : index
    %114 = memref.load %arg5[%c1] : memref<2xf32, #tpu.memory_space<smem>>
    %115 = arith.addf %114, %110 : f32
    %c1_24 = arith.constant 1 : index
    %116 = memref.load %arg5[%c1_24] : memref<2xf32, #tpu.memory_space<smem>>
    memref.store %115, %arg5[%c1_24] : memref<2xf32, #tpu.memory_space<smem>>
    %c1_i32 = arith.constant 1 : i32
    %117 = arith.cmpi eq, %arg0, %c1_i32 : i32
    %118 = arith.extui %117 : i1 to i32
    %c0_i32_25 = arith.constant 0 : i32
    %119 = arith.cmpi ne, %118, %c0_i32_25 : i32
    scf.if %119 {
      %c0_26 = arith.constant 0 : index
      %120 = memref.load %arg5[%c0_26] : memref<2xf32, #tpu.memory_space<smem>>
      %c0_27 = arith.constant 0 : index
      %121 = memref.load %arg3[%c0_27] : memref<1xf32, #tpu.memory_space<smem>>
      memref.store %120, %arg3[%c0_27] : memref<1xf32, #tpu.memory_space<smem>>
      %c1_28 = arith.constant 1 : index
      %122 = memref.load %arg5[%c1_28] : memref<2xf32, #tpu.memory_space<smem>>
      %c0_29 = arith.constant 0 : index
      %123 = memref.load %arg4[%c0_29] : memref<1xf32, #tpu.memory_space<smem>>
      memref.store %122, %arg4[%c0_29] : memref<1xf32, #tpu.memory_space<smem>>
    } else {
    }
    return
  }
  func.func @transform_0(%arg0: i32) -> (i32, i32, i32, i32) {
    %c0_i32 = arith.constant 0 : i32
    %c0_i32_0 = arith.constant 0 : i32
    %c0_i32_1 = arith.constant 0 : i32
    %c0_i32_2 = arith.constant 0 : i32
    return %arg0, %c0_i32, %c0_i32_0, %c0_i32_1 : i32, i32, i32, i32
  }
  func.func @transform_1(%arg0: i32) -> (i32, i32, i32, i32) {
    %c0_i32 = arith.constant 0 : i32
    %c0_i32_0 = arith.constant 0 : i32
    %c0_i32_1 = arith.constant 0 : i32
    %c0_i32_2 = arith.constant 0 : i32
    return %arg0, %c0_i32, %c0_i32_0, %c0_i32_1 : i32, i32, i32, i32
  }
  func.func @transform_2(%arg0: i32) -> i32 {
    %c0_i32 = arith.constant 0 : i32
    %c0_i32_0 = arith.constant 0 : i32
    return %c0_i32 : i32
  }
  func.func @transform_3(%arg0: i32) -> i32 {
    %c0_i32 = arith.constant 0 : i32
    %c0_i32_0 = arith.constant 0 : i32
    return %c0_i32 : i32
  }
}

module attributes {stable_mosaic.version = 11 : i64} {
  func.func @_loss_pyr_kernel(%arg0: i32, %arg1: memref<1x1x16x16xf32, #tpu.memory_space<vmem>>, %arg2: memref<1x1x16x16xf32, #tpu.memory_space<vmem>>, %arg3: memref<8x16xf32, #tpu.memory_space<vmem>>, %arg4: memref<16x8xf32, #tpu.memory_space<vmem>>, %arg5: memref<1xf32, #tpu.memory_space<smem>>, %arg6: memref<1xf32, #tpu.memory_space<smem>>, %arg7: memref<1x1x8x8xf32, #tpu.memory_space<vmem>>, %arg8: memref<1x1x8x8xf32, #tpu.memory_space<vmem>>, %arg9: memref<2xf32, #tpu.memory_space<smem>>) attributes {dimension_semantics = [#tpu.dimension_semantics<arbitrary>], iteration_bounds = array<i64: 2>, scalar_prefetch = 0 : i64, scratch_operands = 1 : i64, tpu.core_type = #tpu.core_type<tc>, window_params = [{transform_indices = @transform_0, window_bounds = array<i64: 1, 1, 16, 16>}, {transform_indices = @transform_1, window_bounds = array<i64: 1, 1, 16, 16>}, {pipeline_mode = #tpu.pipeline_mode<synchronous>, transform_indices = @transform_2, window_bounds = array<i64: 8, 16>}, {pipeline_mode = #tpu.pipeline_mode<synchronous>, transform_indices = @transform_3, window_bounds = array<i64: 16, 8>}, {transform_indices = @transform_4, window_bounds = array<i64: 1>}, {transform_indices = @transform_5, window_bounds = array<i64: 1>}, {transform_indices = @transform_6, window_bounds = array<i64: 1, 1, 8, 8>}, {transform_indices = @transform_7, window_bounds = array<i64: 1, 1, 8, 8>}]} {
    %c0_i32 = arith.constant 0 : i32
    %0 = arith.cmpi eq, %arg0, %c0_i32 : i32
    %1 = arith.extui %0 : i1 to i32
    %c0_i32_0 = arith.constant 0 : i32
    %2 = arith.cmpi ne, %1, %c0_i32_0 : i32
    scf.if %2 {
      %cst_55 = arith.constant 0.000000e+00 : f32
      %c0_56 = arith.constant 0 : index
      %135 = memref.load %arg9[%c0_56] : memref<2xf32, #tpu.memory_space<smem>>
      memref.store %cst_55, %arg9[%c0_56] : memref<2xf32, #tpu.memory_space<smem>>
      %cst_57 = arith.constant 0.000000e+00 : f32
      %c1_58 = arith.constant 1 : index
      %136 = memref.load %arg9[%c1_58] : memref<2xf32, #tpu.memory_space<smem>>
      memref.store %cst_57, %arg9[%c1_58] : memref<2xf32, #tpu.memory_space<smem>>
    } else {
    }
    %c0 = arith.constant 0 : index
    %c0_1 = arith.constant 0 : index
    %c0_2 = arith.constant 0 : index
    %c0_3 = arith.constant 0 : index
    %3 = vector.load %arg1[%c0, %c0_1, %c0_2, %c0_3] : memref<1x1x16x16xf32, #tpu.memory_space<vmem>>, vector<1x1x16x16xf32>
    %4 = vector.shape_cast %3 : vector<1x1x16x16xf32> to vector<1x16x16xf32>
    %c0_4 = arith.constant 0 : index
    %c0_5 = arith.constant 0 : index
    %c0_6 = arith.constant 0 : index
    %c0_7 = arith.constant 0 : index
    %5 = vector.load %arg2[%c0_4, %c0_5, %c0_6, %c0_7] : memref<1x1x16x16xf32, #tpu.memory_space<vmem>>, vector<1x1x16x16xf32>
    %6 = vector.shape_cast %5 : vector<1x1x16x16xf32> to vector<1x16x16xf32>
    %7 = tpu.iota {dimensions = array<i32: 1>} : vector<1x16x16xi32>
    %c0_i32_8 = arith.constant 0 : i32
    %8 = vector.broadcast %c0_i32_8 : i32 to vector<1x16x16xi32>
    %9 = arith.cmpi eq, %7, %8 : vector<1x16x16xi32>
    %c15_i32 = arith.constant 15 : i32
    %10 = vector.broadcast %c15_i32 : i32 to vector<1x16x16xi32>
    %11 = arith.cmpi eq, %7, %10 : vector<1x16x16xi32>
    %12 = vector.extract_strided_slice %4 {offsets = [0, 0, 1], sizes = [1, 16, 15], strides = [1, 1, 1]} : vector<1x16x16xf32> to vector<1x16x15xf32>
    %13 = vector.extract_strided_slice %4 {offsets = [0, 0, 15], sizes = [1, 16, 1], strides = [1, 1, 1]} : vector<1x16x16xf32> to vector<1x16x1xf32>
    %14 = tpu.concatenate %12, %13 in 2 : vector<1x16x15xf32>, vector<1x16x1xf32> -> vector<1x16x16xf32>
    %15 = vector.extract_strided_slice %4 {offsets = [0, 0, 0], sizes = [1, 16, 1], strides = [1, 1, 1]} : vector<1x16x16xf32> to vector<1x16x1xf32>
    %16 = vector.extract_strided_slice %4 {offsets = [0, 0, 0], sizes = [1, 16, 15], strides = [1, 1, 1]} : vector<1x16x16xf32> to vector<1x16x15xf32>
    %17 = tpu.concatenate %15, %16 in 2 : vector<1x16x1xf32>, vector<1x16x15xf32> -> vector<1x16x16xf32>
    %18 = arith.subf %14, %17 : vector<1x16x16xf32>
    %c1_i32 = arith.constant 1 : i32
    %19 = tpu.dynamic_rotate %18 by %c1_i32 dim 1 : vector<1x16x16xf32>, i32 -> vector<1x16x16xf32>
    %20 = arith.select %9, %18, %19 : vector<1x16x16xi1>, vector<1x16x16xf32>
    %cst = arith.constant 2.000000e+00 : f32
    %21 = vector.broadcast %cst : f32 to vector<1x16x16xf32>
    %22 = arith.mulf %21, %18 : vector<1x16x16xf32>
    %23 = arith.addf %20, %22 : vector<1x16x16xf32>
    %c15_i32_9 = arith.constant 15 : i32
    %24 = tpu.dynamic_rotate %18 by %c15_i32_9 dim 1 : vector<1x16x16xf32>, i32 -> vector<1x16x16xf32>
    %25 = arith.select %11, %18, %24 : vector<1x16x16xi1>, vector<1x16x16xf32>
    %26 = arith.addf %23, %25 : vector<1x16x16xf32>
    %cst_10 = arith.constant 1.250000e-01 : f32
    %27 = vector.broadcast %cst_10 : f32 to vector<1x16x16xf32>
    %28 = arith.mulf %26, %27 : vector<1x16x16xf32>
    %c15_i32_11 = arith.constant 15 : i32
    %29 = tpu.dynamic_rotate %4 by %c15_i32_11 dim 1 : vector<1x16x16xf32>, i32 -> vector<1x16x16xf32>
    %30 = arith.select %11, %4, %29 : vector<1x16x16xi1>, vector<1x16x16xf32>
    %c1_i32_12 = arith.constant 1 : i32
    %31 = tpu.dynamic_rotate %4 by %c1_i32_12 dim 1 : vector<1x16x16xf32>, i32 -> vector<1x16x16xf32>
    %32 = arith.select %9, %4, %31 : vector<1x16x16xi1>, vector<1x16x16xf32>
    %33 = arith.subf %30, %32 : vector<1x16x16xf32>
    %34 = vector.extract_strided_slice %33 {offsets = [0, 0, 0], sizes = [1, 16, 1], strides = [1, 1, 1]} : vector<1x16x16xf32> to vector<1x16x1xf32>
    %35 = vector.extract_strided_slice %33 {offsets = [0, 0, 0], sizes = [1, 16, 15], strides = [1, 1, 1]} : vector<1x16x16xf32> to vector<1x16x15xf32>
    %36 = tpu.concatenate %34, %35 in 2 : vector<1x16x1xf32>, vector<1x16x15xf32> -> vector<1x16x16xf32>
    %cst_13 = arith.constant 2.000000e+00 : f32
    %37 = vector.broadcast %cst_13 : f32 to vector<1x16x16xf32>
    %38 = arith.mulf %37, %33 : vector<1x16x16xf32>
    %39 = arith.addf %36, %38 : vector<1x16x16xf32>
    %40 = vector.extract_strided_slice %33 {offsets = [0, 0, 1], sizes = [1, 16, 15], strides = [1, 1, 1]} : vector<1x16x16xf32> to vector<1x16x15xf32>
    %41 = vector.extract_strided_slice %33 {offsets = [0, 0, 15], sizes = [1, 16, 1], strides = [1, 1, 1]} : vector<1x16x16xf32> to vector<1x16x1xf32>
    %42 = tpu.concatenate %40, %41 in 2 : vector<1x16x15xf32>, vector<1x16x1xf32> -> vector<1x16x16xf32>
    %43 = arith.addf %39, %42 : vector<1x16x16xf32>
    %cst_14 = arith.constant 1.250000e-01 : f32
    %44 = vector.broadcast %cst_14 : f32 to vector<1x16x16xf32>
    %45 = arith.mulf %43, %44 : vector<1x16x16xf32>
    %46 = arith.subf %6, %4 : vector<1x16x16xf32>
    %47 = vector.extract_strided_slice %46 {offsets = [0, 0, 1], sizes = [1, 16, 15], strides = [1, 1, 1]} : vector<1x16x16xf32> to vector<1x16x15xf32>
    %48 = vector.extract_strided_slice %46 {offsets = [0, 0, 15], sizes = [1, 16, 1], strides = [1, 1, 1]} : vector<1x16x16xf32> to vector<1x16x1xf32>
    %49 = tpu.concatenate %47, %48 in 2 : vector<1x16x15xf32>, vector<1x16x1xf32> -> vector<1x16x16xf32>
    %50 = vector.extract_strided_slice %46 {offsets = [0, 0, 0], sizes = [1, 16, 1], strides = [1, 1, 1]} : vector<1x16x16xf32> to vector<1x16x1xf32>
    %51 = vector.extract_strided_slice %46 {offsets = [0, 0, 0], sizes = [1, 16, 15], strides = [1, 1, 1]} : vector<1x16x16xf32> to vector<1x16x15xf32>
    %52 = tpu.concatenate %50, %51 in 2 : vector<1x16x1xf32>, vector<1x16x15xf32> -> vector<1x16x16xf32>
    %53 = arith.subf %49, %52 : vector<1x16x16xf32>
    %c1_i32_15 = arith.constant 1 : i32
    %54 = tpu.dynamic_rotate %53 by %c1_i32_15 dim 1 : vector<1x16x16xf32>, i32 -> vector<1x16x16xf32>
    %55 = arith.select %9, %53, %54 : vector<1x16x16xi1>, vector<1x16x16xf32>
    %cst_16 = arith.constant 2.000000e+00 : f32
    %56 = vector.broadcast %cst_16 : f32 to vector<1x16x16xf32>
    %57 = arith.mulf %56, %53 : vector<1x16x16xf32>
    %58 = arith.addf %55, %57 : vector<1x16x16xf32>
    %c15_i32_17 = arith.constant 15 : i32
    %59 = tpu.dynamic_rotate %53 by %c15_i32_17 dim 1 : vector<1x16x16xf32>, i32 -> vector<1x16x16xf32>
    %60 = arith.select %11, %53, %59 : vector<1x16x16xi1>, vector<1x16x16xf32>
    %61 = arith.addf %58, %60 : vector<1x16x16xf32>
    %cst_18 = arith.constant 1.250000e-01 : f32
    %62 = vector.broadcast %cst_18 : f32 to vector<1x16x16xf32>
    %63 = arith.mulf %61, %62 : vector<1x16x16xf32>
    %c15_i32_19 = arith.constant 15 : i32
    %64 = tpu.dynamic_rotate %46 by %c15_i32_19 dim 1 : vector<1x16x16xf32>, i32 -> vector<1x16x16xf32>
    %65 = arith.select %11, %46, %64 : vector<1x16x16xi1>, vector<1x16x16xf32>
    %c1_i32_20 = arith.constant 1 : i32
    %66 = tpu.dynamic_rotate %46 by %c1_i32_20 dim 1 : vector<1x16x16xf32>, i32 -> vector<1x16x16xf32>
    %67 = arith.select %9, %46, %66 : vector<1x16x16xi1>, vector<1x16x16xf32>
    %68 = arith.subf %65, %67 : vector<1x16x16xf32>
    %69 = vector.extract_strided_slice %68 {offsets = [0, 0, 0], sizes = [1, 16, 1], strides = [1, 1, 1]} : vector<1x16x16xf32> to vector<1x16x1xf32>
    %70 = vector.extract_strided_slice %68 {offsets = [0, 0, 0], sizes = [1, 16, 15], strides = [1, 1, 1]} : vector<1x16x16xf32> to vector<1x16x15xf32>
    %71 = tpu.concatenate %69, %70 in 2 : vector<1x16x1xf32>, vector<1x16x15xf32> -> vector<1x16x16xf32>
    %cst_21 = arith.constant 2.000000e+00 : f32
    %72 = vector.broadcast %cst_21 : f32 to vector<1x16x16xf32>
    %73 = arith.mulf %72, %68 : vector<1x16x16xf32>
    %74 = arith.addf %71, %73 : vector<1x16x16xf32>
    %75 = vector.extract_strided_slice %68 {offsets = [0, 0, 1], sizes = [1, 16, 15], strides = [1, 1, 1]} : vector<1x16x16xf32> to vector<1x16x15xf32>
    %76 = vector.extract_strided_slice %68 {offsets = [0, 0, 15], sizes = [1, 16, 1], strides = [1, 1, 1]} : vector<1x16x16xf32> to vector<1x16x1xf32>
    %77 = tpu.concatenate %75, %76 in 2 : vector<1x16x15xf32>, vector<1x16x1xf32> -> vector<1x16x16xf32>
    %78 = arith.addf %74, %77 : vector<1x16x16xf32>
    %cst_22 = arith.constant 1.250000e-01 : f32
    %79 = vector.broadcast %cst_22 : f32 to vector<1x16x16xf32>
    %80 = arith.mulf %78, %79 : vector<1x16x16xf32>
    %81 = math.absf %28 : vector<1x16x16xf32>
    %cst_23 = arith.constant 0x7F800000 : f32
    %82 = vector.broadcast %cst_23 : f32 to vector<1x16x16xf32>
    %83 = arith.cmpf olt, %81, %82 : vector<1x16x16xf32>
    %84 = math.absf %45 : vector<1x16x16xf32>
    %cst_24 = arith.constant 0x7F800000 : f32
    %85 = vector.broadcast %cst_24 : f32 to vector<1x16x16xf32>
    %86 = arith.cmpf olt, %84, %85 : vector<1x16x16xf32>
    %87 = math.absf %63 : vector<1x16x16xf32>
    %cst_25 = arith.constant 0.000000e+00 : f32
    %88 = vector.broadcast %cst_25 : f32 to vector<1x16x16xf32>
    %89 = arith.select %83, %87, %88 : vector<1x16x16xi1>, vector<1x16x16xf32>
    %90 = math.absf %80 : vector<1x16x16xf32>
    %cst_26 = arith.constant 0.000000e+00 : f32
    %91 = vector.broadcast %cst_26 : f32 to vector<1x16x16xf32>
    %92 = arith.select %86, %90, %91 : vector<1x16x16xi1>, vector<1x16x16xf32>
    %93 = arith.addf %89, %92 : vector<1x16x16xf32>
    %94 = arith.extui %83 : vector<1x16x16xi1> to vector<1x16x16xi32>
    %95 = arith.sitofp %94 : vector<1x16x16xi32> to vector<1x16x16xf32>
    %96 = arith.extui %86 : vector<1x16x16xi1> to vector<1x16x16xi32>
    %97 = arith.sitofp %96 : vector<1x16x16xi32> to vector<1x16x16xf32>
    %98 = arith.addf %95, %97 : vector<1x16x16xf32>
    %99 = vector.shape_cast %93 : vector<1x16x16xf32> to vector<1x1x16x16xf32>
    %cst_27 = arith.constant dense<0.000000e+00> : vector<1xf32>
    %100 = vector.multi_reduction <add>, %99, %cst_27 [1, 2, 3] : vector<1x1x16x16xf32> to vector<1xf32>
    %101 = vector.shape_cast %100 : vector<1xf32> to vector<1x1x1x1xf32>
    %102 = vector.extract %101[0, 0, 0, 0] : f32 from vector<1x1x1x1xf32>
    %103 = vector.shape_cast %98 : vector<1x16x16xf32> to vector<1x1x16x16xf32>
    %cst_28 = arith.constant dense<0.000000e+00> : vector<1xf32>
    %104 = vector.multi_reduction <add>, %103, %cst_28 [1, 2, 3] : vector<1x1x16x16xf32> to vector<1xf32>
    %105 = vector.shape_cast %104 : vector<1xf32> to vector<1x1x1x1xf32>
    %106 = vector.extract %105[0, 0, 0, 0] : f32 from vector<1x1x1x1xf32>
    %cst_29 = arith.constant 1.000000e+00 : f32
    %107 = arith.mulf %cst_29, %106 : f32
    %c0_30 = arith.constant 0 : index
    %108 = memref.load %arg9[%c0_30] : memref<2xf32, #tpu.memory_space<smem>>
    %109 = arith.addf %108, %102 : f32
    %c0_31 = arith.constant 0 : index
    %110 = memref.load %arg9[%c0_31] : memref<2xf32, #tpu.memory_space<smem>>
    memref.store %109, %arg9[%c0_31] : memref<2xf32, #tpu.memory_space<smem>>
    %c1 = arith.constant 1 : index
    %111 = memref.load %arg9[%c1] : memref<2xf32, #tpu.memory_space<smem>>
    %112 = arith.addf %111, %107 : f32
    %c1_32 = arith.constant 1 : index
    %113 = memref.load %arg9[%c1_32] : memref<2xf32, #tpu.memory_space<smem>>
    memref.store %112, %arg9[%c1_32] : memref<2xf32, #tpu.memory_space<smem>>
    %c0_33 = arith.constant 0 : index
    %c0_34 = arith.constant 0 : index
    %114 = vector.load %arg3[%c0_33, %c0_34] : memref<8x16xf32, #tpu.memory_space<vmem>>, vector<8x16xf32>
    %c0_35 = arith.constant 0 : index
    %c0_36 = arith.constant 0 : index
    %115 = vector.load %arg4[%c0_35, %c0_36] : memref<16x8xf32, #tpu.memory_space<vmem>>, vector<16x8xf32>
    %116 = vector.shape_cast %4 : vector<1x16x16xf32> to vector<16x16xf32>
    %cst_37 = arith.constant dense<0.000000e+00> : vector<16x8xf32>
    %117 = tpu.matmul %116, %115, %cst_37 {dimension_numbers = #tpu.dot_dimension_numbers<[1], [0], [0], [1], [0, 0, 1, 1], [], []>} : vector<16x16xf32>, vector<16x8xf32>, vector<16x8xf32> -> vector<16x8xf32>
    %cst_38 = arith.constant dense<0.000000e+00> : vector<8x8xf32>
    %118 = tpu.matmul %114, %117, %cst_38 {dimension_numbers = #tpu.dot_dimension_numbers<[1], [0], [0], [1], [0, 0, 1, 1], [], []>} : vector<8x16xf32>, vector<16x8xf32>, vector<8x8xf32> -> vector<8x8xf32>
    %119 = vector.shape_cast %118 : vector<8x8xf32> to vector<1x8x8xf32>
    %c0_39 = arith.constant 0 : index
    %c0_40 = arith.constant 0 : index
    %c0_41 = arith.constant 0 : index
    %c0_42 = arith.constant 0 : index
    %120 = vector.load %arg7[%c0_39, %c0_40, %c0_41, %c0_42] : memref<1x1x8x8xf32, #tpu.memory_space<vmem>>, vector<1x1x8x8xf32>
    %121 = vector.shape_cast %120 : vector<1x1x8x8xf32> to vector<1x8x8xf32>
    %122 = vector.shape_cast %119 : vector<1x8x8xf32> to vector<1x1x8x8xf32>
    tpu.vector_store %arg7[%c0_39, %c0_40, %c0_41, %c0_42], %122 {strides = array<i32>} : memref<1x1x8x8xf32, #tpu.memory_space<vmem>>, vector<1x1x8x8xf32>,
    %c0_43 = arith.constant 0 : index
    %c0_44 = arith.constant 0 : index
    %123 = vector.load %arg3[%c0_43, %c0_44] : memref<8x16xf32, #tpu.memory_space<vmem>>, vector<8x16xf32>
    %c0_45 = arith.constant 0 : index
    %c0_46 = arith.constant 0 : index
    %124 = vector.load %arg4[%c0_45, %c0_46] : memref<16x8xf32, #tpu.memory_space<vmem>>, vector<16x8xf32>
    %125 = vector.shape_cast %6 : vector<1x16x16xf32> to vector<16x16xf32>
    %cst_47 = arith.constant dense<0.000000e+00> : vector<16x8xf32>
    %126 = tpu.matmul %125, %124, %cst_47 {dimension_numbers = #tpu.dot_dimension_numbers<[1], [0], [0], [1], [0, 0, 1, 1], [], []>} : vector<16x16xf32>, vector<16x8xf32>, vector<16x8xf32> -> vector<16x8xf32>
    %cst_48 = arith.constant dense<0.000000e+00> : vector<8x8xf32>
    %127 = tpu.matmul %123, %126, %cst_48 {dimension_numbers = #tpu.dot_dimension_numbers<[1], [0], [0], [1], [0, 0, 1, 1], [], []>} : vector<8x16xf32>, vector<16x8xf32>, vector<8x8xf32> -> vector<8x8xf32>
    %128 = vector.shape_cast %127 : vector<8x8xf32> to vector<1x8x8xf32>
    %c0_49 = arith.constant 0 : index
    %c0_50 = arith.constant 0 : index
    %c0_51 = arith.constant 0 : index
    %c0_52 = arith.constant 0 : index
    %129 = vector.load %arg8[%c0_49, %c0_50, %c0_51, %c0_52] : memref<1x1x8x8xf32, #tpu.memory_space<vmem>>, vector<1x1x8x8xf32>
    %130 = vector.shape_cast %129 : vector<1x1x8x8xf32> to vector<1x8x8xf32>
    %131 = vector.shape_cast %128 : vector<1x8x8xf32> to vector<1x1x8x8xf32>
    tpu.vector_store %arg8[%c0_49, %c0_50, %c0_51, %c0_52], %131 {strides = array<i32>} : memref<1x1x8x8xf32, #tpu.memory_space<vmem>>, vector<1x1x8x8xf32>,
    %c1_i32_53 = arith.constant 1 : i32
    %132 = arith.cmpi eq, %arg0, %c1_i32_53 : i32
    %133 = arith.extui %132 : i1 to i32
    %c0_i32_54 = arith.constant 0 : i32
    %134 = arith.cmpi ne, %133, %c0_i32_54 : i32
    scf.if %134 {
      %c0_55 = arith.constant 0 : index
      %135 = memref.load %arg9[%c0_55] : memref<2xf32, #tpu.memory_space<smem>>
      %c0_56 = arith.constant 0 : index
      %136 = memref.load %arg5[%c0_56] : memref<1xf32, #tpu.memory_space<smem>>
      memref.store %135, %arg5[%c0_56] : memref<1xf32, #tpu.memory_space<smem>>
      %c1_57 = arith.constant 1 : index
      %137 = memref.load %arg9[%c1_57] : memref<2xf32, #tpu.memory_space<smem>>
      %c0_58 = arith.constant 0 : index
      %138 = memref.load %arg6[%c0_58] : memref<1xf32, #tpu.memory_space<smem>>
      memref.store %137, %arg6[%c0_58] : memref<1xf32, #tpu.memory_space<smem>>
    } else {
    }
    return
  }
  func.func @transform_0(%arg0: i32) -> (i32, i32, i32, i32) {
    %c0_i32 = arith.constant 0 : i32
    %c0_i32_0 = arith.constant 0 : i32
    %c0_i32_1 = arith.constant 0 : i32
    %c0_i32_2 = arith.constant 0 : i32
    return %arg0, %c0_i32, %c0_i32_0, %c0_i32_1 : i32, i32, i32, i32
  }
  func.func @transform_1(%arg0: i32) -> (i32, i32, i32, i32) {
    %c0_i32 = arith.constant 0 : i32
    %c0_i32_0 = arith.constant 0 : i32
    %c0_i32_1 = arith.constant 0 : i32
    %c0_i32_2 = arith.constant 0 : i32
    return %arg0, %c0_i32, %c0_i32_0, %c0_i32_1 : i32, i32, i32, i32
  }
  func.func @transform_2(%arg0: i32) -> (i32, i32) {
    %c0_i32 = arith.constant 0 : i32
    %c0_i32_0 = arith.constant 0 : i32
    %c0_i32_1 = arith.constant 0 : i32
    return %c0_i32, %c0_i32_0 : i32, i32
  }
  func.func @transform_3(%arg0: i32) -> (i32, i32) {
    %c0_i32 = arith.constant 0 : i32
    %c0_i32_0 = arith.constant 0 : i32
    %c0_i32_1 = arith.constant 0 : i32
    return %c0_i32, %c0_i32_0 : i32, i32
  }
  func.func @transform_4(%arg0: i32) -> i32 {
    %c0_i32 = arith.constant 0 : i32
    %c0_i32_0 = arith.constant 0 : i32
    return %c0_i32 : i32
  }
  func.func @transform_5(%arg0: i32) -> i32 {
    %c0_i32 = arith.constant 0 : i32
    %c0_i32_0 = arith.constant 0 : i32
    return %c0_i32 : i32
  }
  func.func @transform_6(%arg0: i32) -> (i32, i32, i32, i32) {
    %c0_i32 = arith.constant 0 : i32
    %c0_i32_0 = arith.constant 0 : i32
    %c0_i32_1 = arith.constant 0 : i32
    %c0_i32_2 = arith.constant 0 : i32
    return %arg0, %c0_i32, %c0_i32_0, %c0_i32_1 : i32, i32, i32, i32
  }
  func.func @transform_7(%arg0: i32) -> (i32, i32, i32, i32) {
    %c0_i32 = arith.constant 0 : i32
    %c0_i32_0 = arith.constant 0 : i32
    %c0_i32_1 = arith.constant 0 : i32
    %c0_i32_2 = arith.constant 0 : i32
    return %arg0, %c0_i32, %c0_i32_0, %c0_i32_1 : i32, i32, i32, i32
  }
}

module attributes {stable_mosaic.version = 11 : i64} {
  func.func @_loss_pyr_kernel(%arg0: i32, %arg1: memref<1x1x8x8xf32, #tpu.memory_space<vmem>>, %arg2: memref<1x1x8x8xf32, #tpu.memory_space<vmem>>, %arg3: memref<4x8xf32, #tpu.memory_space<vmem>>, %arg4: memref<8x4xf32, #tpu.memory_space<vmem>>, %arg5: memref<1xf32, #tpu.memory_space<smem>>, %arg6: memref<1xf32, #tpu.memory_space<smem>>, %arg7: memref<1x1x4x4xf32, #tpu.memory_space<vmem>>, %arg8: memref<1x1x4x4xf32, #tpu.memory_space<vmem>>, %arg9: memref<2xf32, #tpu.memory_space<smem>>) attributes {dimension_semantics = [#tpu.dimension_semantics<arbitrary>], iteration_bounds = array<i64: 2>, scalar_prefetch = 0 : i64, scratch_operands = 1 : i64, tpu.core_type = #tpu.core_type<tc>, window_params = [{transform_indices = @transform_0, window_bounds = array<i64: 1, 1, 8, 8>}, {transform_indices = @transform_1, window_bounds = array<i64: 1, 1, 8, 8>}, {pipeline_mode = #tpu.pipeline_mode<synchronous>, transform_indices = @transform_2, window_bounds = array<i64: 4, 8>}, {pipeline_mode = #tpu.pipeline_mode<synchronous>, transform_indices = @transform_3, window_bounds = array<i64: 8, 4>}, {transform_indices = @transform_4, window_bounds = array<i64: 1>}, {transform_indices = @transform_5, window_bounds = array<i64: 1>}, {transform_indices = @transform_6, window_bounds = array<i64: 1, 1, 4, 4>}, {transform_indices = @transform_7, window_bounds = array<i64: 1, 1, 4, 4>}]} {
    %c0_i32 = arith.constant 0 : i32
    %0 = arith.cmpi eq, %arg0, %c0_i32 : i32
    %1 = arith.extui %0 : i1 to i32
    %c0_i32_0 = arith.constant 0 : i32
    %2 = arith.cmpi ne, %1, %c0_i32_0 : i32
    scf.if %2 {
      %cst_55 = arith.constant 0.000000e+00 : f32
      %c0_56 = arith.constant 0 : index
      %135 = memref.load %arg9[%c0_56] : memref<2xf32, #tpu.memory_space<smem>>
      memref.store %cst_55, %arg9[%c0_56] : memref<2xf32, #tpu.memory_space<smem>>
      %cst_57 = arith.constant 0.000000e+00 : f32
      %c1_58 = arith.constant 1 : index
      %136 = memref.load %arg9[%c1_58] : memref<2xf32, #tpu.memory_space<smem>>
      memref.store %cst_57, %arg9[%c1_58] : memref<2xf32, #tpu.memory_space<smem>>
    } else {
    }
    %c0 = arith.constant 0 : index
    %c0_1 = arith.constant 0 : index
    %c0_2 = arith.constant 0 : index
    %c0_3 = arith.constant 0 : index
    %3 = vector.load %arg1[%c0, %c0_1, %c0_2, %c0_3] : memref<1x1x8x8xf32, #tpu.memory_space<vmem>>, vector<1x1x8x8xf32>
    %4 = vector.shape_cast %3 : vector<1x1x8x8xf32> to vector<1x8x8xf32>
    %c0_4 = arith.constant 0 : index
    %c0_5 = arith.constant 0 : index
    %c0_6 = arith.constant 0 : index
    %c0_7 = arith.constant 0 : index
    %5 = vector.load %arg2[%c0_4, %c0_5, %c0_6, %c0_7] : memref<1x1x8x8xf32, #tpu.memory_space<vmem>>, vector<1x1x8x8xf32>
    %6 = vector.shape_cast %5 : vector<1x1x8x8xf32> to vector<1x8x8xf32>
    %7 = tpu.iota {dimensions = array<i32: 1>} : vector<1x8x8xi32>
    %c0_i32_8 = arith.constant 0 : i32
    %8 = vector.broadcast %c0_i32_8 : i32 to vector<1x8x8xi32>
    %9 = arith.cmpi eq, %7, %8 : vector<1x8x8xi32>
    %c7_i32 = arith.constant 7 : i32
    %10 = vector.broadcast %c7_i32 : i32 to vector<1x8x8xi32>
    %11 = arith.cmpi eq, %7, %10 : vector<1x8x8xi32>
    %12 = vector.extract_strided_slice %4 {offsets = [0, 0, 1], sizes = [1, 8, 7], strides = [1, 1, 1]} : vector<1x8x8xf32> to vector<1x8x7xf32>
    %13 = vector.extract_strided_slice %4 {offsets = [0, 0, 7], sizes = [1, 8, 1], strides = [1, 1, 1]} : vector<1x8x8xf32> to vector<1x8x1xf32>
    %14 = tpu.concatenate %12, %13 in 2 : vector<1x8x7xf32>, vector<1x8x1xf32> -> vector<1x8x8xf32>
    %15 = vector.extract_strided_slice %4 {offsets = [0, 0, 0], sizes = [1, 8, 1], strides = [1, 1, 1]} : vector<1x8x8xf32> to vector<1x8x1xf32>
    %16 = vector.extract_strided_slice %4 {offsets = [0, 0, 0], sizes = [1, 8, 7], strides = [1, 1, 1]} : vector<1x8x8xf32> to vector<1x8x7xf32>
    %17 = tpu.concatenate %15, %16 in 2 : vector<1x8x1xf32>, vector<1x8x7xf32> -> vector<1x8x8xf32>
    %18 = arith.subf %14, %17 : vector<1x8x8xf32>
    %c1_i32 = arith.constant 1 : i32
    %19 = tpu.dynamic_rotate %18 by %c1_i32 dim 1 : vector<1x8x8xf32>, i32 -> vector<1x8x8xf32>
    %20 = arith.select %9, %18, %19 : vector<1x8x8xi1>, vector<1x8x8xf32>
    %cst = arith.constant 2.000000e+00 : f32
    %21 = vector.broadcast %cst : f32 to vector<1x8x8xf32>
    %22 = arith.mulf %21, %18 : vector<1x8x8xf32>
    %23 = arith.addf %20, %22 : vector<1x8x8xf32>
    %c7_i32_9 = arith.constant 7 : i32
    %24 = tpu.dynamic_rotate %18 by %c7_i32_9 dim 1 : vector<1x8x8xf32>, i32 -> vector<1x8x8xf32>
    %25 = arith.select %11, %18, %24 : vector<1x8x8xi1>, vector<1x8x8xf32>
    %26 = arith.addf %23, %25 : vector<1x8x8xf32>
    %cst_10 = arith.constant 1.250000e-01 : f32
    %27 = vector.broadcast %cst_10 : f32 to vector<1x8x8xf32>
    %28 = arith.mulf %26, %27 : vector<1x8x8xf32>
    %c7_i32_11 = arith.constant 7 : i32
    %29 = tpu.dynamic_rotate %4 by %c7_i32_11 dim 1 : vector<1x8x8xf32>, i32 -> vector<1x8x8xf32>
    %30 = arith.select %11, %4, %29 : vector<1x8x8xi1>, vector<1x8x8xf32>
    %c1_i32_12 = arith.constant 1 : i32
    %31 = tpu.dynamic_rotate %4 by %c1_i32_12 dim 1 : vector<1x8x8xf32>, i32 -> vector<1x8x8xf32>
    %32 = arith.select %9, %4, %31 : vector<1x8x8xi1>, vector<1x8x8xf32>
    %33 = arith.subf %30, %32 : vector<1x8x8xf32>
    %34 = vector.extract_strided_slice %33 {offsets = [0, 0, 0], sizes = [1, 8, 1], strides = [1, 1, 1]} : vector<1x8x8xf32> to vector<1x8x1xf32>
    %35 = vector.extract_strided_slice %33 {offsets = [0, 0, 0], sizes = [1, 8, 7], strides = [1, 1, 1]} : vector<1x8x8xf32> to vector<1x8x7xf32>
    %36 = tpu.concatenate %34, %35 in 2 : vector<1x8x1xf32>, vector<1x8x7xf32> -> vector<1x8x8xf32>
    %cst_13 = arith.constant 2.000000e+00 : f32
    %37 = vector.broadcast %cst_13 : f32 to vector<1x8x8xf32>
    %38 = arith.mulf %37, %33 : vector<1x8x8xf32>
    %39 = arith.addf %36, %38 : vector<1x8x8xf32>
    %40 = vector.extract_strided_slice %33 {offsets = [0, 0, 1], sizes = [1, 8, 7], strides = [1, 1, 1]} : vector<1x8x8xf32> to vector<1x8x7xf32>
    %41 = vector.extract_strided_slice %33 {offsets = [0, 0, 7], sizes = [1, 8, 1], strides = [1, 1, 1]} : vector<1x8x8xf32> to vector<1x8x1xf32>
    %42 = tpu.concatenate %40, %41 in 2 : vector<1x8x7xf32>, vector<1x8x1xf32> -> vector<1x8x8xf32>
    %43 = arith.addf %39, %42 : vector<1x8x8xf32>
    %cst_14 = arith.constant 1.250000e-01 : f32
    %44 = vector.broadcast %cst_14 : f32 to vector<1x8x8xf32>
    %45 = arith.mulf %43, %44 : vector<1x8x8xf32>
    %46 = arith.subf %6, %4 : vector<1x8x8xf32>
    %47 = vector.extract_strided_slice %46 {offsets = [0, 0, 1], sizes = [1, 8, 7], strides = [1, 1, 1]} : vector<1x8x8xf32> to vector<1x8x7xf32>
    %48 = vector.extract_strided_slice %46 {offsets = [0, 0, 7], sizes = [1, 8, 1], strides = [1, 1, 1]} : vector<1x8x8xf32> to vector<1x8x1xf32>
    %49 = tpu.concatenate %47, %48 in 2 : vector<1x8x7xf32>, vector<1x8x1xf32> -> vector<1x8x8xf32>
    %50 = vector.extract_strided_slice %46 {offsets = [0, 0, 0], sizes = [1, 8, 1], strides = [1, 1, 1]} : vector<1x8x8xf32> to vector<1x8x1xf32>
    %51 = vector.extract_strided_slice %46 {offsets = [0, 0, 0], sizes = [1, 8, 7], strides = [1, 1, 1]} : vector<1x8x8xf32> to vector<1x8x7xf32>
    %52 = tpu.concatenate %50, %51 in 2 : vector<1x8x1xf32>, vector<1x8x7xf32> -> vector<1x8x8xf32>
    %53 = arith.subf %49, %52 : vector<1x8x8xf32>
    %c1_i32_15 = arith.constant 1 : i32
    %54 = tpu.dynamic_rotate %53 by %c1_i32_15 dim 1 : vector<1x8x8xf32>, i32 -> vector<1x8x8xf32>
    %55 = arith.select %9, %53, %54 : vector<1x8x8xi1>, vector<1x8x8xf32>
    %cst_16 = arith.constant 2.000000e+00 : f32
    %56 = vector.broadcast %cst_16 : f32 to vector<1x8x8xf32>
    %57 = arith.mulf %56, %53 : vector<1x8x8xf32>
    %58 = arith.addf %55, %57 : vector<1x8x8xf32>
    %c7_i32_17 = arith.constant 7 : i32
    %59 = tpu.dynamic_rotate %53 by %c7_i32_17 dim 1 : vector<1x8x8xf32>, i32 -> vector<1x8x8xf32>
    %60 = arith.select %11, %53, %59 : vector<1x8x8xi1>, vector<1x8x8xf32>
    %61 = arith.addf %58, %60 : vector<1x8x8xf32>
    %cst_18 = arith.constant 1.250000e-01 : f32
    %62 = vector.broadcast %cst_18 : f32 to vector<1x8x8xf32>
    %63 = arith.mulf %61, %62 : vector<1x8x8xf32>
    %c7_i32_19 = arith.constant 7 : i32
    %64 = tpu.dynamic_rotate %46 by %c7_i32_19 dim 1 : vector<1x8x8xf32>, i32 -> vector<1x8x8xf32>
    %65 = arith.select %11, %46, %64 : vector<1x8x8xi1>, vector<1x8x8xf32>
    %c1_i32_20 = arith.constant 1 : i32
    %66 = tpu.dynamic_rotate %46 by %c1_i32_20 dim 1 : vector<1x8x8xf32>, i32 -> vector<1x8x8xf32>
    %67 = arith.select %9, %46, %66 : vector<1x8x8xi1>, vector<1x8x8xf32>
    %68 = arith.subf %65, %67 : vector<1x8x8xf32>
    %69 = vector.extract_strided_slice %68 {offsets = [0, 0, 0], sizes = [1, 8, 1], strides = [1, 1, 1]} : vector<1x8x8xf32> to vector<1x8x1xf32>
    %70 = vector.extract_strided_slice %68 {offsets = [0, 0, 0], sizes = [1, 8, 7], strides = [1, 1, 1]} : vector<1x8x8xf32> to vector<1x8x7xf32>
    %71 = tpu.concatenate %69, %70 in 2 : vector<1x8x1xf32>, vector<1x8x7xf32> -> vector<1x8x8xf32>
    %cst_21 = arith.constant 2.000000e+00 : f32
    %72 = vector.broadcast %cst_21 : f32 to vector<1x8x8xf32>
    %73 = arith.mulf %72, %68 : vector<1x8x8xf32>
    %74 = arith.addf %71, %73 : vector<1x8x8xf32>
    %75 = vector.extract_strided_slice %68 {offsets = [0, 0, 1], sizes = [1, 8, 7], strides = [1, 1, 1]} : vector<1x8x8xf32> to vector<1x8x7xf32>
    %76 = vector.extract_strided_slice %68 {offsets = [0, 0, 7], sizes = [1, 8, 1], strides = [1, 1, 1]} : vector<1x8x8xf32> to vector<1x8x1xf32>
    %77 = tpu.concatenate %75, %76 in 2 : vector<1x8x7xf32>, vector<1x8x1xf32> -> vector<1x8x8xf32>
    %78 = arith.addf %74, %77 : vector<1x8x8xf32>
    %cst_22 = arith.constant 1.250000e-01 : f32
    %79 = vector.broadcast %cst_22 : f32 to vector<1x8x8xf32>
    %80 = arith.mulf %78, %79 : vector<1x8x8xf32>
    %81 = math.absf %28 : vector<1x8x8xf32>
    %cst_23 = arith.constant 0x7F800000 : f32
    %82 = vector.broadcast %cst_23 : f32 to vector<1x8x8xf32>
    %83 = arith.cmpf olt, %81, %82 : vector<1x8x8xf32>
    %84 = math.absf %45 : vector<1x8x8xf32>
    %cst_24 = arith.constant 0x7F800000 : f32
    %85 = vector.broadcast %cst_24 : f32 to vector<1x8x8xf32>
    %86 = arith.cmpf olt, %84, %85 : vector<1x8x8xf32>
    %87 = math.absf %63 : vector<1x8x8xf32>
    %cst_25 = arith.constant 0.000000e+00 : f32
    %88 = vector.broadcast %cst_25 : f32 to vector<1x8x8xf32>
    %89 = arith.select %83, %87, %88 : vector<1x8x8xi1>, vector<1x8x8xf32>
    %90 = math.absf %80 : vector<1x8x8xf32>
    %cst_26 = arith.constant 0.000000e+00 : f32
    %91 = vector.broadcast %cst_26 : f32 to vector<1x8x8xf32>
    %92 = arith.select %86, %90, %91 : vector<1x8x8xi1>, vector<1x8x8xf32>
    %93 = arith.addf %89, %92 : vector<1x8x8xf32>
    %94 = arith.extui %83 : vector<1x8x8xi1> to vector<1x8x8xi32>
    %95 = arith.sitofp %94 : vector<1x8x8xi32> to vector<1x8x8xf32>
    %96 = arith.extui %86 : vector<1x8x8xi1> to vector<1x8x8xi32>
    %97 = arith.sitofp %96 : vector<1x8x8xi32> to vector<1x8x8xf32>
    %98 = arith.addf %95, %97 : vector<1x8x8xf32>
    %99 = vector.shape_cast %93 : vector<1x8x8xf32> to vector<1x1x8x8xf32>
    %cst_27 = arith.constant dense<0.000000e+00> : vector<1xf32>
    %100 = vector.multi_reduction <add>, %99, %cst_27 [1, 2, 3] : vector<1x1x8x8xf32> to vector<1xf32>
    %101 = vector.shape_cast %100 : vector<1xf32> to vector<1x1x1x1xf32>
    %102 = vector.extract %101[0, 0, 0, 0] : f32 from vector<1x1x1x1xf32>
    %103 = vector.shape_cast %98 : vector<1x8x8xf32> to vector<1x1x8x8xf32>
    %cst_28 = arith.constant dense<0.000000e+00> : vector<1xf32>
    %104 = vector.multi_reduction <add>, %103, %cst_28 [1, 2, 3] : vector<1x1x8x8xf32> to vector<1xf32>
    %105 = vector.shape_cast %104 : vector<1xf32> to vector<1x1x1x1xf32>
    %106 = vector.extract %105[0, 0, 0, 0] : f32 from vector<1x1x1x1xf32>
    %cst_29 = arith.constant 1.000000e+00 : f32
    %107 = arith.mulf %cst_29, %106 : f32
    %c0_30 = arith.constant 0 : index
    %108 = memref.load %arg9[%c0_30] : memref<2xf32, #tpu.memory_space<smem>>
    %109 = arith.addf %108, %102 : f32
    %c0_31 = arith.constant 0 : index
    %110 = memref.load %arg9[%c0_31] : memref<2xf32, #tpu.memory_space<smem>>
    memref.store %109, %arg9[%c0_31] : memref<2xf32, #tpu.memory_space<smem>>
    %c1 = arith.constant 1 : index
    %111 = memref.load %arg9[%c1] : memref<2xf32, #tpu.memory_space<smem>>
    %112 = arith.addf %111, %107 : f32
    %c1_32 = arith.constant 1 : index
    %113 = memref.load %arg9[%c1_32] : memref<2xf32, #tpu.memory_space<smem>>
    memref.store %112, %arg9[%c1_32] : memref<2xf32, #tpu.memory_space<smem>>
    %c0_33 = arith.constant 0 : index
    %c0_34 = arith.constant 0 : index
    %114 = vector.load %arg3[%c0_33, %c0_34] : memref<4x8xf32, #tpu.memory_space<vmem>>, vector<4x8xf32>
    %c0_35 = arith.constant 0 : index
    %c0_36 = arith.constant 0 : index
    %115 = vector.load %arg4[%c0_35, %c0_36] : memref<8x4xf32, #tpu.memory_space<vmem>>, vector<8x4xf32>
    %116 = vector.shape_cast %4 : vector<1x8x8xf32> to vector<8x8xf32>
    %cst_37 = arith.constant dense<0.000000e+00> : vector<8x4xf32>
    %117 = tpu.matmul %116, %115, %cst_37 {dimension_numbers = #tpu.dot_dimension_numbers<[1], [0], [0], [1], [0, 0, 1, 1], [], []>} : vector<8x8xf32>, vector<8x4xf32>, vector<8x4xf32> -> vector<8x4xf32>
    %cst_38 = arith.constant dense<0.000000e+00> : vector<4x4xf32>
    %118 = tpu.matmul %114, %117, %cst_38 {dimension_numbers = #tpu.dot_dimension_numbers<[1], [0], [0], [1], [0, 0, 1, 1], [], []>} : vector<4x8xf32>, vector<8x4xf32>, vector<4x4xf32> -> vector<4x4xf32>
    %119 = vector.shape_cast %118 : vector<4x4xf32> to vector<1x4x4xf32>
    %c0_39 = arith.constant 0 : index
    %c0_40 = arith.constant 0 : index
    %c0_41 = arith.constant 0 : index
    %c0_42 = arith.constant 0 : index
    %120 = vector.load %arg7[%c0_39, %c0_40, %c0_41, %c0_42] : memref<1x1x4x4xf32, #tpu.memory_space<vmem>>, vector<1x1x4x4xf32>
    %121 = vector.shape_cast %120 : vector<1x1x4x4xf32> to vector<1x4x4xf32>
    %122 = vector.shape_cast %119 : vector<1x4x4xf32> to vector<1x1x4x4xf32>
    tpu.vector_store %arg7[%c0_39, %c0_40, %c0_41, %c0_42], %122 {strides = array<i32>} : memref<1x1x4x4xf32, #tpu.memory_space<vmem>>, vector<1x1x4x4xf32>,
    %c0_43 = arith.constant 0 : index
    %c0_44 = arith.constant 0 : index
    %123 = vector.load %arg3[%c0_43, %c0_44] : memref<4x8xf32, #tpu.memory_space<vmem>>, vector<4x8xf32>
    %c0_45 = arith.constant 0 : index
    %c0_46 = arith.constant 0 : index
    %124 = vector.load %arg4[%c0_45, %c0_46] : memref<8x4xf32, #tpu.memory_space<vmem>>, vector<8x4xf32>
    %125 = vector.shape_cast %6 : vector<1x8x8xf32> to vector<8x8xf32>
    %cst_47 = arith.constant dense<0.000000e+00> : vector<8x4xf32>
    %126 = tpu.matmul %125, %124, %cst_47 {dimension_numbers = #tpu.dot_dimension_numbers<[1], [0], [0], [1], [0, 0, 1, 1], [], []>} : vector<8x8xf32>, vector<8x4xf32>, vector<8x4xf32> -> vector<8x4xf32>
    %cst_48 = arith.constant dense<0.000000e+00> : vector<4x4xf32>
    %127 = tpu.matmul %123, %126, %cst_48 {dimension_numbers = #tpu.dot_dimension_numbers<[1], [0], [0], [1], [0, 0, 1, 1], [], []>} : vector<4x8xf32>, vector<8x4xf32>, vector<4x4xf32> -> vector<4x4xf32>
    %128 = vector.shape_cast %127 : vector<4x4xf32> to vector<1x4x4xf32>
    %c0_49 = arith.constant 0 : index
    %c0_50 = arith.constant 0 : index
    %c0_51 = arith.constant 0 : index
    %c0_52 = arith.constant 0 : index
    %129 = vector.load %arg8[%c0_49, %c0_50, %c0_51, %c0_52] : memref<1x1x4x4xf32, #tpu.memory_space<vmem>>, vector<1x1x4x4xf32>
    %130 = vector.shape_cast %129 : vector<1x1x4x4xf32> to vector<1x4x4xf32>
    %131 = vector.shape_cast %128 : vector<1x4x4xf32> to vector<1x1x4x4xf32>
    tpu.vector_store %arg8[%c0_49, %c0_50, %c0_51, %c0_52], %131 {strides = array<i32>} : memref<1x1x4x4xf32, #tpu.memory_space<vmem>>, vector<1x1x4x4xf32>,
    %c1_i32_53 = arith.constant 1 : i32
    %132 = arith.cmpi eq, %arg0, %c1_i32_53 : i32
    %133 = arith.extui %132 : i1 to i32
    %c0_i32_54 = arith.constant 0 : i32
    %134 = arith.cmpi ne, %133, %c0_i32_54 : i32
    scf.if %134 {
      %c0_55 = arith.constant 0 : index
      %135 = memref.load %arg9[%c0_55] : memref<2xf32, #tpu.memory_space<smem>>
      %c0_56 = arith.constant 0 : index
      %136 = memref.load %arg5[%c0_56] : memref<1xf32, #tpu.memory_space<smem>>
      memref.store %135, %arg5[%c0_56] : memref<1xf32, #tpu.memory_space<smem>>
      %c1_57 = arith.constant 1 : index
      %137 = memref.load %arg9[%c1_57] : memref<2xf32, #tpu.memory_space<smem>>
      %c0_58 = arith.constant 0 : index
      %138 = memref.load %arg6[%c0_58] : memref<1xf32, #tpu.memory_space<smem>>
      memref.store %137, %arg6[%c0_58] : memref<1xf32, #tpu.memory_space<smem>>
    } else {
    }
    return
  }
  func.func @transform_0(%arg0: i32) -> (i32, i32, i32, i32) {
    %c0_i32 = arith.constant 0 : i32
    %c0_i32_0 = arith.constant 0 : i32
    %c0_i32_1 = arith.constant 0 : i32
    %c0_i32_2 = arith.constant 0 : i32
    return %arg0, %c0_i32, %c0_i32_0, %c0_i32_1 : i32, i32, i32, i32
  }
  func.func @transform_1(%arg0: i32) -> (i32, i32, i32, i32) {
    %c0_i32 = arith.constant 0 : i32
    %c0_i32_0 = arith.constant 0 : i32
    %c0_i32_1 = arith.constant 0 : i32
    %c0_i32_2 = arith.constant 0 : i32
    return %arg0, %c0_i32, %c0_i32_0, %c0_i32_1 : i32, i32, i32, i32
  }
  func.func @transform_2(%arg0: i32) -> (i32, i32) {
    %c0_i32 = arith.constant 0 : i32
    %c0_i32_0 = arith.constant 0 : i32
    %c0_i32_1 = arith.constant 0 : i32
    return %c0_i32, %c0_i32_0 : i32, i32
  }
  func.func @transform_3(%arg0: i32) -> (i32, i32) {
    %c0_i32 = arith.constant 0 : i32
    %c0_i32_0 = arith.constant 0 : i32
    %c0_i32_1 = arith.constant 0 : i32
    return %c0_i32, %c0_i32_0 : i32, i32
  }
  func.func @transform_4(%arg0: i32) -> i32 {
    %c0_i32 = arith.constant 0 : i32
    %c0_i32_0 = arith.constant 0 : i32
    return %c0_i32 : i32
  }
  func.func @transform_5(%arg0: i32) -> i32 {
    %c0_i32 = arith.constant 0 : i32
    %c0_i32_0 = arith.constant 0 : i32
    return %c0_i32 : i32
  }
  func.func @transform_6(%arg0: i32) -> (i32, i32, i32, i32) {
    %c0_i32 = arith.constant 0 : i32
    %c0_i32_0 = arith.constant 0 : i32
    %c0_i32_1 = arith.constant 0 : i32
    %c0_i32_2 = arith.constant 0 : i32
    return %arg0, %c0_i32, %c0_i32_0, %c0_i32_1 : i32, i32, i32, i32
  }
  func.func @transform_7(%arg0: i32) -> (i32, i32, i32, i32) {
    %c0_i32 = arith.constant 0 : i32
    %c0_i32_0 = arith.constant 0 : i32
    %c0_i32_1 = arith.constant 0 : i32
    %c0_i32_2 = arith.constant 0 : i32
    return %arg0, %c0_i32, %c0_i32_0, %c0_i32_1 : i32, i32, i32, i32
  }
}

module attributes {stable_mosaic.version = 11 : i64} {
  func.func @_loss_pyr_kernel(%arg0: i32, %arg1: memref<1x1x4x4xf32, #tpu.memory_space<vmem>>, %arg2: memref<1x1x4x4xf32, #tpu.memory_space<vmem>>, %arg3: memref<2x4xf32, #tpu.memory_space<vmem>>, %arg4: memref<4x2xf32, #tpu.memory_space<vmem>>, %arg5: memref<1xf32, #tpu.memory_space<smem>>, %arg6: memref<1xf32, #tpu.memory_space<smem>>, %arg7: memref<1x1x2x2xf32, #tpu.memory_space<vmem>>, %arg8: memref<1x1x2x2xf32, #tpu.memory_space<vmem>>, %arg9: memref<2xf32, #tpu.memory_space<smem>>) attributes {dimension_semantics = [#tpu.dimension_semantics<arbitrary>], iteration_bounds = array<i64: 2>, scalar_prefetch = 0 : i64, scratch_operands = 1 : i64, tpu.core_type = #tpu.core_type<tc>, window_params = [{transform_indices = @transform_0, window_bounds = array<i64: 1, 1, 4, 4>}, {transform_indices = @transform_1, window_bounds = array<i64: 1, 1, 4, 4>}, {pipeline_mode = #tpu.pipeline_mode<synchronous>, transform_indices = @transform_2, window_bounds = array<i64: 2, 4>}, {pipeline_mode = #tpu.pipeline_mode<synchronous>, transform_indices = @transform_3, window_bounds = array<i64: 4, 2>}, {transform_indices = @transform_4, window_bounds = array<i64: 1>}, {transform_indices = @transform_5, window_bounds = array<i64: 1>}, {transform_indices = @transform_6, window_bounds = array<i64: 1, 1, 2, 2>}, {transform_indices = @transform_7, window_bounds = array<i64: 1, 1, 2, 2>}]} {
    %c0_i32 = arith.constant 0 : i32
    %0 = arith.cmpi eq, %arg0, %c0_i32 : i32
    %1 = arith.extui %0 : i1 to i32
    %c0_i32_0 = arith.constant 0 : i32
    %2 = arith.cmpi ne, %1, %c0_i32_0 : i32
    scf.if %2 {
      %cst_46 = arith.constant 0.000000e+00 : f32
      %c0_47 = arith.constant 0 : index
      %138 = memref.load %arg9[%c0_47] : memref<2xf32, #tpu.memory_space<smem>>
      memref.store %cst_46, %arg9[%c0_47] : memref<2xf32, #tpu.memory_space<smem>>
      %cst_48 = arith.constant 0.000000e+00 : f32
      %c1_49 = arith.constant 1 : index
      %139 = memref.load %arg9[%c1_49] : memref<2xf32, #tpu.memory_space<smem>>
      memref.store %cst_48, %arg9[%c1_49] : memref<2xf32, #tpu.memory_space<smem>>
    } else {
    }
    %c0 = arith.constant 0 : index
    %c0_1 = arith.constant 0 : index
    %c0_2 = arith.constant 0 : index
    %c0_3 = arith.constant 0 : index
    %3 = vector.load %arg1[%c0, %c0_1, %c0_2, %c0_3] : memref<1x1x4x4xf32, #tpu.memory_space<vmem>>, vector<1x1x4x4xf32>
    %4 = vector.shape_cast %3 : vector<1x1x4x4xf32> to vector<1x4x4xf32>
    %c0_4 = arith.constant 0 : index
    %c0_5 = arith.constant 0 : index
    %c0_6 = arith.constant 0 : index
    %c0_7 = arith.constant 0 : index
    %5 = vector.load %arg2[%c0_4, %c0_5, %c0_6, %c0_7] : memref<1x1x4x4xf32, #tpu.memory_space<vmem>>, vector<1x1x4x4xf32>
    %6 = vector.shape_cast %5 : vector<1x1x4x4xf32> to vector<1x4x4xf32>
    %7 = vector.extract_strided_slice %4 {offsets = [0, 0, 1], sizes = [1, 4, 3], strides = [1, 1, 1]} : vector<1x4x4xf32> to vector<1x4x3xf32>
    %8 = vector.extract_strided_slice %4 {offsets = [0, 0, 3], sizes = [1, 4, 1], strides = [1, 1, 1]} : vector<1x4x4xf32> to vector<1x4x1xf32>
    %9 = tpu.concatenate %7, %8 in 2 : vector<1x4x3xf32>, vector<1x4x1xf32> -> vector<1x4x4xf32>
    %10 = vector.extract_strided_slice %4 {offsets = [0, 0, 0], sizes = [1, 4, 1], strides = [1, 1, 1]} : vector<1x4x4xf32> to vector<1x4x1xf32>
    %11 = vector.extract_strided_slice %4 {offsets = [0, 0, 0], sizes = [1, 4, 3], strides = [1, 1, 1]} : vector<1x4x4xf32> to vector<1x4x3xf32>
    %12 = tpu.concatenate %10, %11 in 2 : vector<1x4x1xf32>, vector<1x4x3xf32> -> vector<1x4x4xf32>
    %13 = arith.subf %9, %12 : vector<1x4x4xf32>
    %14 = vector.extract_strided_slice %13 {offsets = [0, 0, 0], sizes = [1, 1, 4], strides = [1, 1, 1]} : vector<1x4x4xf32> to vector<1x1x4xf32>
    %15 = vector.extract_strided_slice %13 {offsets = [0, 0, 0], sizes = [1, 3, 4], strides = [1, 1, 1]} : vector<1x4x4xf32> to vector<1x3x4xf32>
    %16 = tpu.concatenate %14, %15 in 1 : vector<1x1x4xf32>, vector<1x3x4xf32> -> vector<1x4x4xf32>
    %cst = arith.constant 2.000000e+00 : f32
    %17 = vector.broadcast %cst : f32 to vector<1x4x4xf32>
    %18 = arith.mulf %17, %13 : vector<1x4x4xf32>
    %19 = arith.addf %16, %18 : vector<1x4x4xf32>
    %20 = vector.extract_strided_slice %13 {offsets = [0, 1, 0], sizes = [1, 3, 4], strides = [1, 1, 1]} : vector<1x4x4xf32> to vector<1x3x4xf32>
    %21 = vector.extract_strided_slice %13 {offsets = [0, 3, 0], sizes = [1, 1, 4], strides = [1, 1, 1]} : vector<1x4x4xf32> to vector<1x1x4xf32>
    %22 = tpu.concatenate %20, %21 in 1 : vector<1x3x4xf32>, vector<1x1x4xf32> -> vector<1x4x4xf32>
    %23 = arith.addf %19, %22 : vector<1x4x4xf32>
    %cst_8 = arith.constant 1.250000e-01 : f32
    %24 = vector.broadcast %cst_8 : f32 to vector<1x4x4xf32>
    %25 = arith.mulf %23, %24 : vector<1x4x4xf32>
    %26 = vector.extract_strided_slice %4 {offsets = [0, 1, 0], sizes = [1, 3, 4], strides = [1, 1, 1]} : vector<1x4x4xf32> to vector<1x3x4xf32>
    %27 = vector.extract_strided_slice %4 {offsets = [0, 3, 0], sizes = [1, 1, 4], strides = [1, 1, 1]} : vector<1x4x4xf32> to vector<1x1x4xf32>
    %28 = tpu.concatenate %26, %27 in 1 : vector<1x3x4xf32>, vector<1x1x4xf32> -> vector<1x4x4xf32>
    %29 = vector.extract_strided_slice %4 {offsets = [0, 0, 0], sizes = [1, 1, 4], strides = [1, 1, 1]} : vector<1x4x4xf32> to vector<1x1x4xf32>
    %30 = vector.extract_strided_slice %4 {offsets = [0, 0, 0], sizes = [1, 3, 4], strides = [1, 1, 1]} : vector<1x4x4xf32> to vector<1x3x4xf32>
    %31 = tpu.concatenate %29, %30 in 1 : vector<1x1x4xf32>, vector<1x3x4xf32> -> vector<1x4x4xf32>
    %32 = arith.subf %28, %31 : vector<1x4x4xf32>
    %33 = vector.extract_strided_slice %32 {offsets = [0, 0, 0], sizes = [1, 4, 1], strides = [1, 1, 1]} : vector<1x4x4xf32> to vector<1x4x1xf32>
    %34 = vector.extract_strided_slice %32 {offsets = [0, 0, 0], sizes = [1, 4, 3], strides = [1, 1, 1]} : vector<1x4x4xf32> to vector<1x4x3xf32>
    %35 = tpu.concatenate %33, %34 in 2 : vector<1x4x1xf32>, vector<1x4x3xf32> -> vector<1x4x4xf32>
    %cst_9 = arith.constant 2.000000e+00 : f32
    %36 = vector.broadcast %cst_9 : f32 to vector<1x4x4xf32>
    %37 = arith.mulf %36, %32 : vector<1x4x4xf32>
    %38 = arith.addf %35, %37 : vector<1x4x4xf32>
    %39 = vector.extract_strided_slice %32 {offsets = [0, 0, 1], sizes = [1, 4, 3], strides = [1, 1, 1]} : vector<1x4x4xf32> to vector<1x4x3xf32>
    %40 = vector.extract_strided_slice %32 {offsets = [0, 0, 3], sizes = [1, 4, 1], strides = [1, 1, 1]} : vector<1x4x4xf32> to vector<1x4x1xf32>
    %41 = tpu.concatenate %39, %40 in 2 : vector<1x4x3xf32>, vector<1x4x1xf32> -> vector<1x4x4xf32>
    %42 = arith.addf %38, %41 : vector<1x4x4xf32>
    %cst_10 = arith.constant 1.250000e-01 : f32
    %43 = vector.broadcast %cst_10 : f32 to vector<1x4x4xf32>
    %44 = arith.mulf %42, %43 : vector<1x4x4xf32>
    %45 = arith.subf %6, %4 : vector<1x4x4xf32>
    %46 = vector.extract_strided_slice %45 {offsets = [0, 0, 1], sizes = [1, 4, 3], strides = [1, 1, 1]} : vector<1x4x4xf32> to vector<1x4x3xf32>
    %47 = vector.extract_strided_slice %45 {offsets = [0, 0, 3], sizes = [1, 4, 1], strides = [1, 1, 1]} : vector<1x4x4xf32> to vector<1x4x1xf32>
    %48 = tpu.concatenate %46, %47 in 2 : vector<1x4x3xf32>, vector<1x4x1xf32> -> vector<1x4x4xf32>
    %49 = vector.extract_strided_slice %45 {offsets = [0, 0, 0], sizes = [1, 4, 1], strides = [1, 1, 1]} : vector<1x4x4xf32> to vector<1x4x1xf32>
    %50 = vector.extract_strided_slice %45 {offsets = [0, 0, 0], sizes = [1, 4, 3], strides = [1, 1, 1]} : vector<1x4x4xf32> to vector<1x4x3xf32>
    %51 = tpu.concatenate %49, %50 in 2 : vector<1x4x1xf32>, vector<1x4x3xf32> -> vector<1x4x4xf32>
    %52 = arith.subf %48, %51 : vector<1x4x4xf32>
    %53 = vector.extract_strided_slice %52 {offsets = [0, 0, 0], sizes = [1, 1, 4], strides = [1, 1, 1]} : vector<1x4x4xf32> to vector<1x1x4xf32>
    %54 = vector.extract_strided_slice %52 {offsets = [0, 0, 0], sizes = [1, 3, 4], strides = [1, 1, 1]} : vector<1x4x4xf32> to vector<1x3x4xf32>
    %55 = tpu.concatenate %53, %54 in 1 : vector<1x1x4xf32>, vector<1x3x4xf32> -> vector<1x4x4xf32>
    %cst_11 = arith.constant 2.000000e+00 : f32
    %56 = vector.broadcast %cst_11 : f32 to vector<1x4x4xf32>
    %57 = arith.mulf %56, %52 : vector<1x4x4xf32>
    %58 = arith.addf %55, %57 : vector<1x4x4xf32>
    %59 = vector.extract_strided_slice %52 {offsets = [0, 1, 0], sizes = [1, 3, 4], strides = [1, 1, 1]} : vector<1x4x4xf32> to vector<1x3x4xf32>
    %60 = vector.extract_strided_slice %52 {offsets = [0, 3, 0], sizes = [1, 1, 4], strides = [1, 1, 1]} : vector<1x4x4xf32> to vector<1x1x4xf32>
    %61 = tpu.concatenate %59, %60 in 1 : vector<1x3x4xf32>, vector<1x1x4xf32> -> vector<1x4x4xf32>
    %62 = arith.addf %58, %61 : vector<1x4x4xf32>
    %cst_12 = arith.constant 1.250000e-01 : f32
    %63 = vector.broadcast %cst_12 : f32 to vector<1x4x4xf32>
    %64 = arith.mulf %62, %63 : vector<1x4x4xf32>
    %65 = vector.extract_strided_slice %45 {offsets = [0, 1, 0], sizes = [1, 3, 4], strides = [1, 1, 1]} : vector<1x4x4xf32> to vector<1x3x4xf32>
    %66 = vector.extract_strided_slice %45 {offsets = [0, 3, 0], sizes = [1, 1, 4], strides = [1, 1, 1]} : vector<1x4x4xf32> to vector<1x1x4xf32>
    %67 = tpu.concatenate %65, %66 in 1 : vector<1x3x4xf32>, vector<1x1x4xf32> -> vector<1x4x4xf32>
    %68 = vector.extract_strided_slice %45 {offsets = [0, 0, 0], sizes = [1, 1, 4], strides = [1, 1, 1]} : vector<1x4x4xf32> to vector<1x1x4xf32>
    %69 = vector.extract_strided_slice %45 {offsets = [0, 0, 0], sizes = [1, 3, 4], strides = [1, 1, 1]} : vector<1x4x4xf32> to vector<1x3x4xf32>
    %70 = tpu.concatenate %68, %69 in 1 : vector<1x1x4xf32>, vector<1x3x4xf32> -> vector<1x4x4xf32>
    %71 = arith.subf %67, %70 : vector<1x4x4xf32>
    %72 = vector.extract_strided_slice %71 {offsets = [0, 0, 0], sizes = [1, 4, 1], strides = [1, 1, 1]} : vector<1x4x4xf32> to vector<1x4x1xf32>
    %73 = vector.extract_strided_slice %71 {offsets = [0, 0, 0], sizes = [1, 4, 3], strides = [1, 1, 1]} : vector<1x4x4xf32> to vector<1x4x3xf32>
    %74 = tpu.concatenate %72, %73 in 2 : vector<1x4x1xf32>, vector<1x4x3xf32> -> vector<1x4x4xf32>
    %cst_13 = arith.constant 2.000000e+00 : f32
    %75 = vector.broadcast %cst_13 : f32 to vector<1x4x4xf32>
    %76 = arith.mulf %75, %71 : vector<1x4x4xf32>
    %77 = arith.addf %74, %76 : vector<1x4x4xf32>
    %78 = vector.extract_strided_slice %71 {offsets = [0, 0, 1], sizes = [1, 4, 3], strides = [1, 1, 1]} : vector<1x4x4xf32> to vector<1x4x3xf32>
    %79 = vector.extract_strided_slice %71 {offsets = [0, 0, 3], sizes = [1, 4, 1], strides = [1, 1, 1]} : vector<1x4x4xf32> to vector<1x4x1xf32>
    %80 = tpu.concatenate %78, %79 in 2 : vector<1x4x3xf32>, vector<1x4x1xf32> -> vector<1x4x4xf32>
    %81 = arith.addf %77, %80 : vector<1x4x4xf32>
    %cst_14 = arith.constant 1.250000e-01 : f32
    %82 = vector.broadcast %cst_14 : f32 to vector<1x4x4xf32>
    %83 = arith.mulf %81, %82 : vector<1x4x4xf32>
    %84 = math.absf %25 : vector<1x4x4xf32>
    %cst_15 = arith.constant 0x7F800000 : f32
    %85 = vector.broadcast %cst_15 : f32 to vector<1x4x4xf32>
    %86 = arith.cmpf olt, %84, %85 : vector<1x4x4xf32>
    %87 = math.absf %44 : vector<1x4x4xf32>
    %cst_16 = arith.constant 0x7F800000 : f32
    %88 = vector.broadcast %cst_16 : f32 to vector<1x4x4xf32>
    %89 = arith.cmpf olt, %87, %88 : vector<1x4x4xf32>
    %90 = math.absf %64 : vector<1x4x4xf32>
    %cst_17 = arith.constant 0.000000e+00 : f32
    %91 = vector.broadcast %cst_17 : f32 to vector<1x4x4xf32>
    %92 = arith.select %86, %90, %91 : vector<1x4x4xi1>, vector<1x4x4xf32>
    %93 = math.absf %83 : vector<1x4x4xf32>
    %cst_18 = arith.constant 0.000000e+00 : f32
    %94 = vector.broadcast %cst_18 : f32 to vector<1x4x4xf32>
    %95 = arith.select %89, %93, %94 : vector<1x4x4xi1>, vector<1x4x4xf32>
    %96 = arith.addf %92, %95 : vector<1x4x4xf32>
    %97 = arith.extui %86 : vector<1x4x4xi1> to vector<1x4x4xi32>
    %98 = arith.sitofp %97 : vector<1x4x4xi32> to vector<1x4x4xf32>
    %99 = arith.extui %89 : vector<1x4x4xi1> to vector<1x4x4xi32>
    %100 = arith.sitofp %99 : vector<1x4x4xi32> to vector<1x4x4xf32>
    %101 = arith.addf %98, %100 : vector<1x4x4xf32>
    %102 = vector.shape_cast %96 : vector<1x4x4xf32> to vector<1x1x4x4xf32>
    %cst_19 = arith.constant dense<0.000000e+00> : vector<1xf32>
    %103 = vector.multi_reduction <add>, %102, %cst_19 [1, 2, 3] : vector<1x1x4x4xf32> to vector<1xf32>
    %104 = vector.shape_cast %103 : vector<1xf32> to vector<1x1x1x1xf32>
    %105 = vector.extract %104[0, 0, 0, 0] : f32 from vector<1x1x1x1xf32>
    %106 = vector.shape_cast %101 : vector<1x4x4xf32> to vector<1x1x4x4xf32>
    %cst_20 = arith.constant dense<0.000000e+00> : vector<1xf32>
    %107 = vector.multi_reduction <add>, %106, %cst_20 [1, 2, 3] : vector<1x1x4x4xf32> to vector<1xf32>
    %108 = vector.shape_cast %107 : vector<1xf32> to vector<1x1x1x1xf32>
    %109 = vector.extract %108[0, 0, 0, 0] : f32 from vector<1x1x1x1xf32>
    %cst_21 = arith.constant 1.000000e+00 : f32
    %110 = arith.mulf %cst_21, %109 : f32
    %c0_22 = arith.constant 0 : index
    %111 = memref.load %arg9[%c0_22] : memref<2xf32, #tpu.memory_space<smem>>
    %112 = arith.addf %111, %105 : f32
    %c0_23 = arith.constant 0 : index
    %113 = memref.load %arg9[%c0_23] : memref<2xf32, #tpu.memory_space<smem>>
    memref.store %112, %arg9[%c0_23] : memref<2xf32, #tpu.memory_space<smem>>
    %c1 = arith.constant 1 : index
    %114 = memref.load %arg9[%c1] : memref<2xf32, #tpu.memory_space<smem>>
    %115 = arith.addf %114, %110 : f32
    %c1_24 = arith.constant 1 : index
    %116 = memref.load %arg9[%c1_24] : memref<2xf32, #tpu.memory_space<smem>>
    memref.store %115, %arg9[%c1_24] : memref<2xf32, #tpu.memory_space<smem>>
    %c0_25 = arith.constant 0 : index
    %c0_26 = arith.constant 0 : index
    %117 = vector.load %arg3[%c0_25, %c0_26] : memref<2x4xf32, #tpu.memory_space<vmem>>, vector<2x4xf32>
    %c0_27 = arith.constant 0 : index
    %c0_28 = arith.constant 0 : index
    %118 = vector.load %arg4[%c0_27, %c0_28] : memref<4x2xf32, #tpu.memory_space<vmem>>, vector<4x2xf32>
    %119 = vector.shape_cast %4 : vector<1x4x4xf32> to vector<4x4xf32>
    %cst_29 = arith.constant dense<0.000000e+00> : vector<4x2xf32>
    %120 = tpu.matmul %119, %118, %cst_29 {dimension_numbers = #tpu.dot_dimension_numbers<[1], [0], [0], [1], [0, 0, 1, 1], [], []>} : vector<4x4xf32>, vector<4x2xf32>, vector<4x2xf32> -> vector<4x2xf32>
    %cst_30 = arith.constant dense<0.000000e+00> : vector<2x2xf32>
    %121 = tpu.matmul %117, %120, %cst_30 {dimension_numbers = #tpu.dot_dimension_numbers<[1], [0], [0], [1], [0, 0, 1, 1], [], []>} : vector<2x4xf32>, vector<4x2xf32>, vector<2x2xf32> -> vector<2x2xf32>
    %122 = vector.shape_cast %121 : vector<2x2xf32> to vector<1x2x2xf32>
    %c0_31 = arith.constant 0 : index
    %c0_32 = arith.constant 0 : index
    %c0_33 = arith.constant 0 : index
    %c0_34 = arith.constant 0 : index
    %123 = vector.load %arg7[%c0_31, %c0_32, %c0_33, %c0_34] : memref<1x1x2x2xf32, #tpu.memory_space<vmem>>, vector<1x1x2x2xf32>
    %124 = vector.shape_cast %123 : vector<1x1x2x2xf32> to vector<1x2x2xf32>
    %125 = vector.shape_cast %122 : vector<1x2x2xf32> to vector<1x1x2x2xf32>
    tpu.vector_store %arg7[%c0_31, %c0_32, %c0_33, %c0_34], %125 {strides = array<i32>} : memref<1x1x2x2xf32, #tpu.memory_space<vmem>>, vector<1x1x2x2xf32>,
    %c0_35 = arith.constant 0 : index
    %c0_36 = arith.constant 0 : index
    %126 = vector.load %arg3[%c0_35, %c0_36] : memref<2x4xf32, #tpu.memory_space<vmem>>, vector<2x4xf32>
    %c0_37 = arith.constant 0 : index
    %c0_38 = arith.constant 0 : index
    %127 = vector.load %arg4[%c0_37, %c0_38] : memref<4x2xf32, #tpu.memory_space<vmem>>, vector<4x2xf32>
    %128 = vector.shape_cast %6 : vector<1x4x4xf32> to vector<4x4xf32>
    %cst_39 = arith.constant dense<0.000000e+00> : vector<4x2xf32>
    %129 = tpu.matmul %128, %127, %cst_39 {dimension_numbers = #tpu.dot_dimension_numbers<[1], [0], [0], [1], [0, 0, 1, 1], [], []>} : vector<4x4xf32>, vector<4x2xf32>, vector<4x2xf32> -> vector<4x2xf32>
    %cst_40 = arith.constant dense<0.000000e+00> : vector<2x2xf32>
    %130 = tpu.matmul %126, %129, %cst_40 {dimension_numbers = #tpu.dot_dimension_numbers<[1], [0], [0], [1], [0, 0, 1, 1], [], []>} : vector<2x4xf32>, vector<4x2xf32>, vector<2x2xf32> -> vector<2x2xf32>
    %131 = vector.shape_cast %130 : vector<2x2xf32> to vector<1x2x2xf32>
    %c0_41 = arith.constant 0 : index
    %c0_42 = arith.constant 0 : index
    %c0_43 = arith.constant 0 : index
    %c0_44 = arith.constant 0 : index
    %132 = vector.load %arg8[%c0_41, %c0_42, %c0_43, %c0_44] : memref<1x1x2x2xf32, #tpu.memory_space<vmem>>, vector<1x1x2x2xf32>
    %133 = vector.shape_cast %132 : vector<1x1x2x2xf32> to vector<1x2x2xf32>
    %134 = vector.shape_cast %131 : vector<1x2x2xf32> to vector<1x1x2x2xf32>
    tpu.vector_store %arg8[%c0_41, %c0_42, %c0_43, %c0_44], %134 {strides = array<i32>} : memref<1x1x2x2xf32, #tpu.memory_space<vmem>>, vector<1x1x2x2xf32>,
    %c1_i32 = arith.constant 1 : i32
    %135 = arith.cmpi eq, %arg0, %c1_i32 : i32
    %136 = arith.extui %135 : i1 to i32
    %c0_i32_45 = arith.constant 0 : i32
    %137 = arith.cmpi ne, %136, %c0_i32_45 : i32
    scf.if %137 {
      %c0_46 = arith.constant 0 : index
      %138 = memref.load %arg9[%c0_46] : memref<2xf32, #tpu.memory_space<smem>>
      %c0_47 = arith.constant 0 : index
      %139 = memref.load %arg5[%c0_47] : memref<1xf32, #tpu.memory_space<smem>>
      memref.store %138, %arg5[%c0_47] : memref<1xf32, #tpu.memory_space<smem>>
      %c1_48 = arith.constant 1 : index
      %140 = memref.load %arg9[%c1_48] : memref<2xf32, #tpu.memory_space<smem>>
      %c0_49 = arith.constant 0 : index
      %141 = memref.load %arg6[%c0_49] : memref<1xf32, #tpu.memory_space<smem>>
      memref.store %140, %arg6[%c0_49] : memref<1xf32, #tpu.memory_space<smem>>
    } else {
    }
    return
  }
  func.func @transform_0(%arg0: i32) -> (i32, i32, i32, i32) {
    %c0_i32 = arith.constant 0 : i32
    %c0_i32_0 = arith.constant 0 : i32
    %c0_i32_1 = arith.constant 0 : i32
    %c0_i32_2 = arith.constant 0 : i32
    return %arg0, %c0_i32, %c0_i32_0, %c0_i32_1 : i32, i32, i32, i32
  }
  func.func @transform_1(%arg0: i32) -> (i32, i32, i32, i32) {
    %c0_i32 = arith.constant 0 : i32
    %c0_i32_0 = arith.constant 0 : i32
    %c0_i32_1 = arith.constant 0 : i32
    %c0_i32_2 = arith.constant 0 : i32
    return %arg0, %c0_i32, %c0_i32_0, %c0_i32_1 : i32, i32, i32, i32
  }
  func.func @transform_2(%arg0: i32) -> (i32, i32) {
    %c0_i32 = arith.constant 0 : i32
    %c0_i32_0 = arith.constant 0 : i32
    %c0_i32_1 = arith.constant 0 : i32
    return %c0_i32, %c0_i32_0 : i32, i32
  }
  func.func @transform_3(%arg0: i32) -> (i32, i32) {
    %c0_i32 = arith.constant 0 : i32
    %c0_i32_0 = arith.constant 0 : i32
    %c0_i32_1 = arith.constant 0 : i32
    return %c0_i32, %c0_i32_0 : i32, i32
  }
  func.func @transform_4(%arg0: i32) -> i32 {
    %c0_i32 = arith.constant 0 : i32
    %c0_i32_0 = arith.constant 0 : i32
    return %c0_i32 : i32
  }
  func.func @transform_5(%arg0: i32) -> i32 {
    %c0_i32 = arith.constant 0 : i32
    %c0_i32_0 = arith.constant 0 : i32
    return %c0_i32 : i32
  }
  func.func @transform_6(%arg0: i32) -> (i32, i32, i32, i32) {
    %c0_i32 = arith.constant 0 : i32
    %c0_i32_0 = arith.constant 0 : i32
    %c0_i32_1 = arith.constant 0 : i32
    %c0_i32_2 = arith.constant 0 : i32
    return %arg0, %c0_i32, %c0_i32_0, %c0_i32_1 : i32, i32, i32, i32
  }
  func.func @transform_7(%arg0: i32) -> (i32, i32, i32, i32) {
    %c0_i32 = arith.constant 0 : i32
    %c0_i32_0 = arith.constant 0 : i32
    %c0_i32_1 = arith.constant 0 : i32
    %c0_i32_2 = arith.constant 0 : i32
    return %arg0, %c0_i32, %c0_i32_0, %c0_i32_1 : i32, i32, i32, i32
  }
}

</mosaic_0001>

<llo_original>
// kernel: ms_gradient_loss.5
$region0: #{ms_gradient_loss.5}
  #allocation0 [shape = 'u32[]', space=smem, size = 0x4, offset = 0x4, fixed_abs, tag = 'smem constant byte address 0x4 - core index']
  #allocation1 [shape = 'u32[144,128]{1,0:T(1,128)}', space=vmem, size = 0x12000, scoped, tag = 'internal scratch']
  #allocation2 [shape = 'f32[2]{0:T(128)}', space=smem, size = 0x200, scoped, tag = 'scratch operand']
  %s0 = inlined_call_operand.vmem [shape: f32[2,1,8,8], index: 0, kind: input, shape index: {}]
  %s1 = inlined_call_operand.vmem [shape: f32[2,1,8,8], index: 1, kind: input, shape index: {}]
  %s2 = inlined_call_operand.vmem [shape: f32[4,8], index: 2, kind: input, shape index: {}]
  %s3 = inlined_call_operand.vmem [shape: f32[8,4], index: 3, kind: input, shape index: {}]
  %s4 = inlined_call_operand.hbm [shape: f32[1], index: 4, kind: output, shape index: {0}]
  %s5 = inlined_call_operand.hbm [shape: f32[1], index: 5, kind: output, shape index: {1}]
  %s6 = inlined_call_operand.vmem [shape: f32[2,1,4,4], index: 6, kind: output, shape index: {2}]
  %s7 = inlined_call_operand.vmem [shape: f32[2,1,4,4], index: 7, kind: output, shape index: {3}]
  %8 = xla_tuple %s4, %s5, %s6, %s7
  %s9 = sld [smem:[#allocation0]]
  $region81: #{ms_gradient_loss.5} parent=0
    _
  %s11 = ssub.s32 1, %s9
  %s12 = scalar_select 0, %s11, %s9
  $region1: #{ms_gradient_loss.5} parent=0
    #allocation3 [shape = 'u8[512]{0}', space=smem, size = 0x200, scoped, tag = 'output window, operand 0, single buffered']
    #allocation4 [shape = 's32[2]{0}', space=sflag, size = 0x8, scoped, tag = 'scoped memory for ms_gradient_loss.5']
    #allocation5 [shape = 'u8[512]{0}', space=smem, size = 0x200, scoped, tag = 'output window, operand 1, single buffered']
    #allocation6 [shape = 's32[1]{0}', space=sflag, size = 0x4, scoped, tag = 'scoped memory for ms_gradient_loss.5']
    %13 = vsyncpa [#allocation4], 0
    %14 = vsyncpa [#allocation6], 0
    loop: start=0, step=1, limit=4
    $region2: #{ms_gradient_loss.5} parent=1 // loop_pre_header
      _
    $region3: #{ms_gradient_loss.5} parent=1 // loop_header
      %s16 = sphi 0, %s20
      %p17 = scmp.ge.s32.totalorder %s16, 4
      %s26 = sphi 0, %s28
      %s29 = sphi 0, %s26
      %s30 = sphi 0, %s29
      %s46 = sphi 0, %s30
      %s52 = sphi 0, %s54
      %s55 = sphi 0, %s52
      %s56 = sphi 0, %s55
      %s72 = sphi 0, %s56
      %s76 = sphi 0, %s76
      %s78 = sphi 0, %s76
      %s79 = sphi 0, %s78
      %s93 = sphi 0, %s79
      %s97 = sphi 0, %s97
      %s99 = sphi 0, %s97
      %s100 = sphi 0, %s99
      %s114 = sphi 0, %s100
      %s118 = sphi 0, %s118
      %s120 = sphi 0, %s118
      %s121 = sphi 0, %s120
      %s135 = sphi 0, %s121
      %s139 = sphi 0, %s139
      %s141 = sphi 0, %s139
      %s142 = sphi 0, %s141
      %s156 = sphi 0, %s142
      %s162 = sphi 0, %s164
      %s165 = sphi 0, %s162
      %s166 = sphi 0, %s165
      %s182 = sphi 0, %s166
      %s188 = sphi 0, %s190
      %s191 = sphi 0, %s188
      %s192 = sphi 0, %s191
      %s208 = sphi 0, %s192
    $region4: #{ms_gradient_loss.5} parent=1 // loop_header_branch
      %19 = sbr.rel (%p17) target = $region8
    $region5: #{ms_gradient_loss.5} parent=1 // loop_body
      %s21 = ssub.s32 %s16, 1
      %s22 = ssub.s32 %s16, 2
      %s23 = sadd.s32 %s16, 1
      %s24 = ssub.s32 %s16, %s23
      %p25 = scmp.eq.s32.totalorder %s24, 0
      %s27 = sadd.s32 %s26, 1
      %s28 = scalar_select %p25, %s26, %s27
      %p31 = pneg %p25
      %p32 = scmp.eq.s32.totalorder %s16, 1
      %p33 = por %p31, %p32
      %p34 = scmp.ne.s32.totalorder %s26, %s29
      %p35 = scmp.eq.s32.totalorder %s16, 0
      %p36 = por %p34, %p35
      %p37 = scmp.ne.s32.totalorder %s26, %s29
      %p38 = scmp.eq.s32.totalorder %s21, 1
      %p39 = por %p37, %p38
      %p40 = scmp.ne.s32.totalorder %s29, %s30
      %p41 = scmp.eq.s32.totalorder %s21, 0
      %p42 = por %p40, %p41
      %p43 = scmp.ne.s32.totalorder %s29, %s30
      %p44 = scmp.eq.s32.totalorder %s22, 1
      %p45 = por %p43, %p44
      %p47 = scmp.ne.s32.totalorder %s30, %s46
      %p48 = scmp.eq.s32.totalorder %s22, 0
      %p49 = por %p47, %p48
      %s50 = ssub.s32 %s16, %s23
      %p51 = scmp.eq.s32.totalorder %s50, 0
      %s53 = sadd.s32 %s52, 1
      %s54 = scalar_select %p51, %s52, %s53
      %p57 = pneg %p51
      %p58 = scmp.eq.s32.totalorder %s16, 1
      %p59 = por %p57, %p58
      %p60 = scmp.ne.s32.totalorder %s52, %s55
      %p61 = scmp.eq.s32.totalorder %s16, 0
      %p62 = por %p60, %p61
      %p63 = scmp.ne.s32.totalorder %s52, %s55
      %p64 = scmp.eq.s32.totalorder %s21, 1
      %p65 = por %p63, %p64
      %p66 = scmp.ne.s32.totalorder %s55, %s56
      %p67 = scmp.eq.s32.totalorder %s21, 0
      %p68 = por %p66, %p67
      %p69 = scmp.ne.s32.totalorder %s55, %s56
      %p70 = scmp.eq.s32.totalorder %s22, 1
      %p71 = por %p69, %p70
      %p73 = scmp.ne.s32.totalorder %s56, %s72
      %p74 = scmp.eq.s32.totalorder %s22, 0
      %p75 = por %p73, %p74
      %s77 = sadd.s32 %s76, 1
      %p80 = scmp.eq.s32.totalorder %s16, 1
      %p81 = scmp.ne.s32.totalorder %s76, %s78
      %p82 = scmp.eq.s32.totalorder %s16, 0
      %p83 = por %p81, %p82
      %p84 = scmp.ne.s32.totalorder %s76, %s78
      %p85 = scmp.eq.s32.totalorder %s21, 1
      %p86 = por %p84, %p85
      %p87 = scmp.ne.s32.totalorder %s78, %s79
      %p88 = scmp.eq.s32.totalorder %s21, 0
      %p89 = por %p87, %p88
      %p90 = scmp.ne.s32.totalorder %s78, %s79
      %p91 = scmp.eq.s32.totalorder %s22, 1
      %p92 = por %p90, %p91
      %p94 = scmp.ne.s32.totalorder %s79, %s93
      %p95 = scmp.eq.s32.totalorder %s22, 0
      %p96 = por %p94, %p95
      %s98 = sadd.s32 %s97, 1
      %p101 = scmp.eq.s32.totalorder %s16, 1
      %p102 = scmp.ne.s32.totalorder %s97, %s99
      %p103 = scmp.eq.s32.totalorder %s16, 0
      %p104 = por %p102, %p103
      %p105 = scmp.ne.s32.totalorder %s97, %s99
      %p106 = scmp.eq.s32.totalorder %s21, 1
      %p107 = por %p105, %p106
      %p108 = scmp.ne.s32.totalorder %s99, %s100
      %p109 = scmp.eq.s32.totalorder %s21, 0
      %p110 = por %p108, %p109
      %p111 = scmp.ne.s32.totalorder %s99, %s100
      %p112 = scmp.eq.s32.totalorder %s22, 1
      %p113 = por %p111, %p112
      %p115 = scmp.ne.s32.totalorder %s100, %s114
      %p116 = scmp.eq.s32.totalorder %s22, 0
      %p117 = por %p115, %p116
      %s119 = sadd.s32 %s118, 1
      %p122 = scmp.eq.s32.totalorder %s16, 1
      %p123 = scmp.ne.s32.totalorder %s118, %s120
      %p124 = scmp.eq.s32.totalorder %s16, 0
      %p125 = por %p123, %p124
      %p126 = scmp.ne.s32.totalorder %s118, %s120
      %p127 = scmp.eq.s32.totalorder %s21, 1
      %p128 = por %p126, %p127
      %p129 = scmp.ne.s32.totalorder %s120, %s121
      %p130 = scmp.eq.s32.totalorder %s21, 0
      %p131 = por %p129, %p130
      %p132 = scmp.ne.s32.totalorder %s120, %s121
      %p133 = scmp.eq.s32.totalorder %s22, 1
      %p134 = por %p132, %p133
      %p136 = scmp.ne.s32.totalorder %s121, %s135
      %p137 = scmp.eq.s32.totalorder %s22, 0
      %p138 = por %p136, %p137
      %s140 = sadd.s32 %s139, 1
      %p143 = scmp.eq.s32.totalorder %s16, 1
      %p144 = scmp.ne.s32.totalorder %s139, %s141
      %p145 = scmp.eq.s32.totalorder %s16, 0
      %p146 = por %p144, %p145
      %p147 = scmp.ne.s32.totalorder %s139, %s141
      %p148 = scmp.eq.s32.totalorder %s21, 1
      %p149 = por %p147, %p148
      %p150 = scmp.ne.s32.totalorder %s141, %s142
      %p151 = scmp.eq.s32.totalorder %s21, 0
      %p152 = por %p150, %p151
      %p153 = scmp.ne.s32.totalorder %s141, %s142
      %p154 = scmp.eq.s32.totalorder %s22, 1
      %p155 = por %p153, %p154
      %p157 = scmp.ne.s32.totalorder %s142, %s156
      %p158 = scmp.eq.s32.totalorder %s22, 0
      %p159 = por %p157, %p158
      %s160 = ssub.s32 %s16, %s23
      %p161 = scmp.eq.s32.totalorder %s160, 0
      %s163 = sadd.s32 %s162, 1
      %s164 = scalar_select %p161, %s162, %s163
      %p167 = pneg %p161
      %p168 = scmp.eq.s32.totalorder %s16, 1
      %p169 = por %p167, %p168
      %p170 = scmp.ne.s32.totalorder %s162, %s165
      %p171 = scmp.eq.s32.totalorder %s16, 0
      %p172 = por %p170, %p171
      %p173 = scmp.ne.s32.totalorder %s162, %s165
      %p174 = scmp.eq.s32.totalorder %s21, 1
      %p175 = por %p173, %p174
      %p176 = scmp.ne.s32.totalorder %s165, %s166
      %p177 = scmp.eq.s32.totalorder %s21, 0
      %p178 = por %p176, %p177
      %p179 = scmp.ne.s32.totalorder %s165, %s166
      %p180 = scmp.eq.s32.totalorder %s22, 1
      %p181 = por %p179, %p180
      %p183 = scmp.ne.s32.totalorder %s166, %s182
      %p184 = scmp.eq.s32.totalorder %s22, 0
      %p185 = por %p183, %p184
      %s186 = ssub.s32 %s16, %s23
      %p187 = scmp.eq.s32.totalorder %s186, 0
      %s189 = sadd.s32 %s188, 1
      %s190 = scalar_select %p187, %s188, %s189
      %p193 = pneg %p187
      %p194 = scmp.eq.s32.totalorder %s16, 1
      %p195 = por %p193, %p194
      %p196 = scmp.ne.s32.totalorder %s188, %s191
      %p197 = scmp.eq.s32.totalorder %s16, 0
      %p198 = por %p196, %p197
      %p199 = scmp.ne.s32.totalorder %s188, %s191
      %p200 = scmp.eq.s32.totalorder %s21, 1
      %p201 = por %p199, %p200
      %p202 = scmp.ne.s32.totalorder %s191, %s192
      %p203 = scmp.eq.s32.totalorder %s21, 0
      %p204 = por %p202, %p203
      %p205 = scmp.ne.s32.totalorder %s191, %s192
      %p206 = scmp.eq.s32.totalorder %s22, 1
      %p207 = por %p205, %p206
      %p209 = scmp.ne.s32.totalorder %s192, %s208
      %p210 = scmp.eq.s32.totalorder %s22, 0
      %p211 = por %p209, %p210
      %p212 = scmp.le.s32.totalorder 1, %s16
      %p213 = scmp.lt.s32.totalorder %s16, 3
      %p214 = pnand %p212, %p213
      %p215 = pneg %p214
      // Predicated region
      $region9: #{ms_gradient_loss.5} parent=5 // pred_check
        _
      $region10: #{ms_gradient_loss.5} parent=5 // pred_check_branch
        %217 = sbr.rel (%p214) target = $region12
      $region11: #{ms_gradient_loss.5} parent=5 // pred_region
        %s218 = ssub.s32 %s16, 1
        // Predicated region
        $region13: #{ms_gradient_loss.5} parent=11 // pred_check
          %p219 = pneg %p89
        $region14: #{ms_gradient_loss.5} parent=11 // pred_check_branch
          %221 = sbr.rel (%p219) target = $region16
        $region15: #{ms_gradient_loss.5} parent=11 // pred_region
          _
        $region16: #{ms_gradient_loss.5} parent=11 // pred_fallthru
          _
        // Predicated region
        $region17: #{ms_gradient_loss.5} parent=11 // pred_check
          %p222 = pneg %p110
        $region18: #{ms_gradient_loss.5} parent=11 // pred_check_branch
          %224 = sbr.rel (%p222) target = $region20
        $region19: #{ms_gradient_loss.5} parent=11 // pred_region
          _
        $region20: #{ms_gradient_loss.5} parent=11 // pred_fallthru
          _
      $region12: #{ms_gradient_loss.5} parent=5 // pred_fallthru
        _
      %p225 = scmp.lt.s32.totalorder %s16, 2
      // Predicated region
      $region21: #{ms_gradient_loss.5} parent=5 // pred_check
        %p226 = pneg %p225
      $region22: #{ms_gradient_loss.5} parent=5 // pred_check_branch
        %228 = sbr.rel (%p226) target = $region24
      $region23: #{ms_gradient_loss.5} parent=5 // pred_region
        // Predicated region
        $region25: #{ms_gradient_loss.5} parent=23 // pred_check
          %p229 = pneg %p36
        $region26: #{ms_gradient_loss.5} parent=23 // pred_check_branch
          %231 = sbr.rel (%p229) target = $region28
        $region27: #{ms_gradient_loss.5} parent=23 // pred_region
          %p232 = scmp.lt.s32.totalorder %s16, 1
          %s233 = scalar_select %p232, %s16, 1
          %s234 = smul.addr %s233, 8
          %s235 = scalar_lea.vmem %s0, %s234
        $region28: #{ms_gradient_loss.5} parent=23 // pred_fallthru
          _
        // Predicated region
        $region29: #{ms_gradient_loss.5} parent=23 // pred_check
          %p236 = pneg %p62
        $region30: #{ms_gradient_loss.5} parent=23 // pred_check_branch
          %238 = sbr.rel (%p236) target = $region32
        $region31: #{ms_gradient_loss.5} parent=23 // pred_region
          %p239 = scmp.lt.s32.totalorder %s16, 1
          %s240 = scalar_select %p239, %s16, 1
          %s241 = smul.addr %s240, 8
          %s242 = scalar_lea.vmem %s1, %s241
        $region32: #{ms_gradient_loss.5} parent=23 // pred_fallthru
          _
      $region24: #{ms_gradient_loss.5} parent=5 // pred_fallthru
        _
      %p243 = scmp.le.s32.totalorder 1, %s16
      %p244 = scmp.lt.s32.totalorder %s16, 3
      %p245 = pnand %p243, %p244
      %p246 = pneg %p245
      // Predicated region
      $region33: #{ms_gradient_loss.5} parent=5 // pred_check
        _
      $region34: #{ms_gradient_loss.5} parent=5 // pred_check_branch
        %248 = sbr.rel (%p245) target = $region36
      $region35: #{ms_gradient_loss.5} parent=5 // pred_region
        %s249 = ssub.s32 %s16, 1
        %p250 = scmp.lt.s32.totalorder %s21, 1
        %s251 = scalar_select %p250, %s21, 1
        %s252 = smul.addr %s251, 8
        %s253 = scalar_lea.vmem %s0, %s252
        %p254 = pneg %p42
        %p255 = pneg %p39
        %p256 = scmp.lt.s32.totalorder %s21, 1
        %s257 = scalar_select %p256, %s21, 1
        %s258 = smul.addr %s257, 8
        %s259 = scalar_lea.vmem %s1, %s258
        %p260 = pneg %p68
        %p261 = pneg %p65
        %p262 = pneg %p89
        %p263 = pneg %p86
        %p264 = pneg %p110
        %p265 = pneg %p107
        %p266 = pneg %p131
        %p267 = pneg %p128
        %p268 = pneg %p152
        %p269 = pneg %p149
        %p270 = pneg %p178
        %p271 = pneg %p175
        %p272 = scmp.lt.s32.totalorder %s21, 1
        %s273 = scalar_select %p272, %s21, 1
        %s274 = smul.addr %s273, 4
        %s275 = scalar_lea.vmem %s6, %s274
        %p276 = pneg %p204
        %p277 = pneg %p201
        %p278 = scmp.lt.s32.totalorder %s21, 1
        %s279 = scalar_select %p278, %s21, 1
        %s280 = smul.addr %s279, 4
        %s281 = scalar_lea.vmem %s7, %s280
        %p282 = scmp.lt.s32.totalorder %s21, 1
        %s283 = scalar_select %p282, %s21, 1
        %s284 = smul.addr %s283, 8
        %s285 = scalar_lea.vmem %s0, %s284
        %p286 = scmp.lt.s32.totalorder %s21, 1
        %s287 = scalar_select %p286, %s21, 1
        %s288 = smul.addr %s287, 8
        %s289 = scalar_lea.vmem %s1, %s288
        %p290 = scmp.lt.s32.totalorder %s21, 1
        %s291 = scalar_select %p290, %s21, 1
        %s292 = smul.addr %s291, 4
        %s293 = scalar_lea.vmem %s6, %s292
        %p294 = scmp.lt.s32.totalorder %s21, 1
        %s295 = scalar_select %p294, %s21, 1
        %s296 = smul.addr %s295, 4
        %s297 = scalar_lea.vmem %s7, %s296
        %p298 = scmp.eq.s32.totalorder %s21, 0
        // Predicated region
        $region37: #{ms_gradient_loss.5} parent=35 // pred_check
          %p299 = pneg %p298
        $region38: #{ms_gradient_loss.5} parent=35 // pred_check_branch
          %301 = sbr.rel (%p299) target = $region40
        $region39: #{ms_gradient_loss.5} parent=35 // pred_region
          %s302 = scalar_lea.smem [#allocation2], 0
          %303 = sst [smem:[%s302]] 0.0
          %s304 = scalar_lea.smem [#allocation2], 1
          %305 = sst [smem:[%s304]] 0.0
        $region40: #{ms_gradient_loss.5} parent=35 // pred_fallthru
          _
        %v306 = vld [vmem:[%s285] sm:$0xff]
        %v307 = vld [vmem:[%s289] sm:$0xff]
        %v308 = vlaneseq
        %v309 = vshrl.u32 %v308, 7
        %vm310 = vcmp.eq.s32.totalorder %v309, 0
        %vm311 = vcmp.eq.s32.totalorder %v309, 7
        %313 = vrot.lane.b32.xlu0 %v306, 127
        %v314 = vpop.permute.xlu0 %313
        %vm316 = vcmask 56320
        %v317 = vsel %vm316, %v314, %v306
        %318 = vrot.lane.b32.xlu0 %v306, 1
        %v319 = vpop.permute.xlu0 %318
        %vm321 = vcmask 7168
        %v322 = vsel %vm321, %v306, %v319
        %v323 = vsub.f32 %v317, %v322
        %v324 = vrot.slane %v323, 7
        %v325 = vsel %vm310, %v323, %v324
        %v326 = vmul.f32 %v323, 2.0
        %v327 = vadd.f32 %v325, %v326
        %v328 = vrot.slane %v323, 1
        %v329 = vsel %vm311, %v323, %v328
        %v330 = vadd.f32 %v327, %v329
        %v331 = vmul.f32 %v330, 0.125
        %v332 = vrot.slane %v306, 1
        %v333 = vsel %vm311, %v306, %v332
        %v334 = vrot.slane %v306, 7
        %v335 = vsel %vm310, %v306, %v334
        %v336 = vsub.f32 %v333, %v335
        %338 = vrot.lane.b32.xlu0 %v336, 1
        %v339 = vpop.permute.xlu0 %338
        %v341 = vsel %vm321, %v336, %v339
        %v342 = vmul.f32 %v336, 2.0
        %v343 = vadd.f32 %v341, %v342
        %344 = vrot.lane.b32.xlu0 %v336, 127
        %v345 = vpop.permute.xlu0 %344
        %v347 = vsel %vm316, %v345, %v336
        %v348 = vadd.f32 %v343, %v347
        %v349 = vmul.f32 %v348, 0.125
        %v350 = vsub.f32 %v307, %v306
        %352 = vrot.lane.b32.xlu0 %v350, 127
        %v353 = vpop.permute.xlu0 %352
        %v355 = vsel %vm316, %v353, %v350
        %356 = vrot.lane.b32.xlu0 %v350, 1
        %v357 = vpop.permute.xlu0 %356
        %v359 = vsel %vm321, %v350, %v357
        %v360 = vsub.f32 %v355, %v359
        %v361 = vrot.slane %v360, 7
        %v362 = vsel %vm310, %v360, %v361
        %v363 = vmul.f32 %v360, 2.0
        %v364 = vadd.f32 %v362, %v363
        %v365 = vrot.slane %v360, 1
        %v366 = vsel %vm311, %v360, %v365
        %v367 = vadd.f32 %v364, %v366
        %v368 = vmul.f32 %v367, 0.125
        %v369 = vrot.slane %v350, 1
        %v370 = vsel %vm311, %v350, %v369
        %v371 = vrot.slane %v350, 7
        %v372 = vsel %vm310, %v350, %v371
        %v373 = vsub.f32 %v370, %v372
        %375 = vrot.lane.b32.xlu0 %v373, 1
        %v376 = vpop.permute.xlu0 %375
        %v378 = vsel %vm321, %v373, %v376
        %v379 = vmul.f32 %v373, 2.0
        %v380 = vadd.f32 %v378, %v379
        %381 = vrot.lane.b32.xlu0 %v373, 127
        %v382 = vpop.permute.xlu0 %381
        %v384 = vsel %vm316, %v382, %v373
        %v385 = vadd.f32 %v380, %v384
        %v386 = vmul.f32 %v385, 0.125
        %v387 = vand.u32 2147483647, %v331
        %vm388 = vcmp.lt.f32.partialorder %v387, inf
        %v389 = vand.u32 2147483647, %v349
        %vm390 = vcmp.lt.f32.partialorder %v389, inf
        %v391 = vand.u32 2147483647, %v368
        %v392 = vsel %vm388, %v391, 0.0
        %v393 = vand.u32 2147483647, %v386
        %v394 = vsel %vm390, %v393, 0.0
        %v395 = vadd.f32 %v392, %v394
        %v396 = vsel %vm388, 1, 0
        %v397 = vcvt.s32.f32 %v396
        %v398 = vsel %vm390, 1, 0
        %v399 = vcvt.s32.f32 %v398
        %v400 = vadd.f32 %v397, %v399
        %vm401 = vcmask 64512
        %v402 = vsel %vm401, %v395, 0.0
        %403 = vadd.xlane.f32.xlu0 %v402
        %v404 = vpop.xlane.xlu0 %403
        %v405 = vrot.slane %v404, 4
        %v406 = vadd.f32 %v404, %v405
        %v407 = vrot.slane %v406, 2
        %v408 = vadd.f32 %v406, %v407
        %v409 = vrot.slane %v408, 1
        %v410 = vadd.f32 %v408, %v409
        %s411 = vtos %v410
        %v412 = vsel %vm401, %v400, 0.0
        %413 = vadd.xlane.f32.xlu0 %v412
        %v414 = vpop.xlane.xlu0 %413
        %v415 = vrot.slane %v414, 4
        %v416 = vadd.f32 %v414, %v415
        %v417 = vrot.slane %v416, 2
        %v418 = vadd.f32 %v416, %v417
        %v419 = vrot.slane %v418, 1
        %v420 = vadd.f32 %v418, %v419
        %s421 = vtos %v420
        %s422 = sld [smem:[#allocation2]]
        %s423 = sadd.f32 %s422, %s411
        %s424 = scalar_lea.smem [#allocation2], 0
        %425 = sst [smem:[%s424]] %s423
        %s426 = sld [smem:[#allocation2 + $0x1]]
        %s427 = sadd.f32 %s426, %s421
        %s428 = scalar_lea.smem [#allocation2], 1
        %429 = sst [smem:[%s428]] %s427
        %v430 = vld [vmem:[%s2] sm:$0xf]
        %v431 = vld [vmem:[%s3] sm:$0xff]
        %v432 = vsel %vm401, %v306, 0
        %434 = vmatprep.subr.mxu0 0.0
        %435 = vmatpush1.msra.mxu0 %v431
        %436 = vmatprep.subr.mxu0 0.0
        %437 = vmatpush1.msra.mxu0 0.0
        %438 = vmatprep.subr.mxu0 0.0
        %439 = vmatpush1.msra.mxu0 0.0
        %440 = vmatprep.subr.mxu0 0.0
        %441 = vmatpush1.msra.mxu0 0.0
        %442 = vmatprep.subr.mxu0 0.0
        %443 = vmatpush1.msra.mxu0 0.0
        %444 = vmatprep.subr.mxu0 0.0
        %445 = vmatpush1.msra.mxu0 0.0
        %446 = vmatprep.subr.mxu0 0.0
        %447 = vmatpush1.msra.mxu0 0.0
        %448 = vmatprep.subr.mxu0 0.0
        %449 = vmatpush1.msra.mxu0 0.0
        %450 = vmatprep.subr.mxu0 0.0
        %451 = vmatpush1.msra.mxu0 0.0
        %452 = vmatprep.subr.mxu0 0.0
        %453 = vmatpush1.msra.mxu0 0.0
        %454 = vmatprep.subr.mxu0 0.0
        %455 = vmatpush1.msra.mxu0 0.0
        %456 = vmatprep.subr.mxu0 0.0
        %457 = vmatpush1.msra.mxu0 0.0
        %458 = vmatprep.subr.mxu0 0.0
        %459 = vmatpush1.msra.mxu0 0.0
        %460 = vmatprep.subr.mxu0 0.0
        %461 = vmatpush1.msra.mxu0 0.0
        %462 = vmatprep.subr.mxu0 0.0
        %463 = vmatpush1.msra.mxu0 0.0
        %464 = vmatprep.subr.mxu0 0.0
        %465 = vmatpush1.msra.mxu0 0.0
        %466 = vmatprep.subr.mxu0 0.0
        %467 = vmatpush1.msra.mxu0 0.0
        %468 = vmatprep.subr.mxu0 0.0
        %469 = vmatpush1.msra.mxu0 0.0
        %470 = vmatprep.subr.mxu0 0.0
        %471 = vmatpush1.msra.mxu0 0.0
        %472 = vmatprep.subr.mxu0 0.0
        %473 = vmatpush1.msra.mxu0 0.0
        %474 = vmatprep.subr.mxu0 0.0
        %475 = vmatpush1.msra.mxu0 0.0
        %476 = vmatprep.subr.mxu0 0.0
        %477 = vmatpush1.msra.mxu0 0.0
        %478 = vmatprep.subr.mxu0 0.0
        %479 = vmatpush1.msra.mxu0 0.0
        %480 = vmatprep.subr.mxu0 0.0
        %481 = vmatpush1.msra.mxu0 0.0
        %482 = vmatprep.subr.mxu0 0.0
        %483 = vmatpush1.msra.mxu0 0.0
        %484 = vmatprep.subr.mxu0 0.0
        %485 = vmatpush1.msra.mxu0 0.0
        %486 = vmatprep.subr.mxu0 0.0
        %487 = vmatpush1.msra.mxu0 0.0
        %488 = vmatprep.subr.mxu0 0.0
        %489 = vmatpush1.msra.mxu0 0.0
        %490 = vmatprep.subr.mxu0 0.0
        %491 = vmatpush1.msra.mxu0 0.0
        %492 = vmatprep.subr.mxu0 0.0
        %493 = vmatpush1.msra.mxu0 0.0
        %494 = vmatprep.subr.mxu0 0.0
        %495 = vmatpush1.msra.mxu0 0.0
        %496 = vmatprep.subr.mxu0 0.0
        %497 = vmatpush1.msra.mxu0 0.0
        %498 = vmatprep.mubr.f32.mxu0 0.0
        %499 = vmatmul.mubr.f32.gmra.mrb[0].mxu0 %v432
        %v500 = vpop.f32.mrb[0].mxu0
        %v501 = vadd.f32 0.0, %v500
        %v502 = vpop.f32.mrb[0].mxu0
        %503 = vdwg.mxu0
        %v505 = vsel %vm401, %v430, 0
        %507 = vmatprep.subr.mxu0 0.0
        %508 = vmatpush1.msra.mxu0 %v501
        %509 = vmatprep.subr.mxu0 0.0
        %510 = vmatpush1.msra.mxu0 0.0
        %511 = vmatprep.subr.mxu0 0.0
        %512 = vmatpush1.msra.mxu0 0.0
        %513 = vmatprep.subr.mxu0 0.0
        %514 = vmatpush1.msra.mxu0 0.0
        %515 = vmatprep.subr.mxu0 0.0
        %516 = vmatpush1.msra.mxu0 0.0
        %517 = vmatprep.subr.mxu0 0.0
        %518 = vmatpush1.msra.mxu0 0.0
        %519 = vmatprep.subr.mxu0 0.0
        %520 = vmatpush1.msra.mxu0 0.0
        %521 = vmatprep.subr.mxu0 0.0
        %522 = vmatpush1.msra.mxu0 0.0
        %523 = vmatprep.subr.mxu0 0.0
        %524 = vmatpush1.msra.mxu0 0.0
        %525 = vmatprep.subr.mxu0 0.0
        %526 = vmatpush1.msra.mxu0 0.0
        %527 = vmatprep.subr.mxu0 0.0
        %528 = vmatpush1.msra.mxu0 0.0
        %529 = vmatprep.subr.mxu0 0.0
        %530 = vmatpush1.msra.mxu0 0.0
        %531 = vmatprep.subr.mxu0 0.0
        %532 = vmatpush1.msra.mxu0 0.0
        %533 = vmatprep.subr.mxu0 0.0
        %534 = vmatpush1.msra.mxu0 0.0
        %535 = vmatprep.subr.mxu0 0.0
        %536 = vmatpush1.msra.mxu0 0.0
        %537 = vmatprep.subr.mxu0 0.0
        %538 = vmatpush1.msra.mxu0 0.0
        %539 = vmatprep.subr.mxu0 0.0
        %540 = vmatpush1.msra.mxu0 0.0
        %541 = vmatprep.subr.mxu0 0.0
        %542 = vmatpush1.msra.mxu0 0.0
        %543 = vmatprep.subr.mxu0 0.0
        %544 = vmatpush1.msra.mxu0 0.0
        %545 = vmatprep.subr.mxu0 0.0
        %546 = vmatpush1.msra.mxu0 0.0
        %547 = vmatprep.subr.mxu0 0.0
        %548 = vmatpush1.msra.mxu0 0.0
        %549 = vmatprep.subr.mxu0 0.0
        %550 = vmatpush1.msra.mxu0 0.0
        %551 = vmatprep.subr.mxu0 0.0
        %552 = vmatpush1.msra.mxu0 0.0
        %553 = vmatprep.subr.mxu0 0.0
        %554 = vmatpush1.msra.mxu0 0.0
        %555 = vmatprep.subr.mxu0 0.0
        %556 = vmatpush1.msra.mxu0 0.0
        %557 = vmatprep.subr.mxu0 0.0
        %558 = vmatpush1.msra.mxu0 0.0
        %559 = vmatprep.subr.mxu0 0.0
        %560 = vmatpush1.msra.mxu0 0.0
        %561 = vmatprep.subr.mxu0 0.0
        %562 = vmatpush1.msra.mxu0 0.0
        %563 = vmatprep.subr.mxu0 0.0
        %564 = vmatpush1.msra.mxu0 0.0
        %565 = vmatprep.subr.mxu0 0.0
        %566 = vmatpush1.msra.mxu0 0.0
        %567 = vmatprep.subr.mxu0 0.0
        %568 = vmatpush1.msra.mxu0 0.0
        %569 = vmatprep.subr.mxu0 0.0
        %570 = vmatpush1.msra.mxu0 0.0
        %571 = vmatprep.mubr.f32.mxu0 0.0
        %572 = vmatmul.mubr.f32.gmra.mrb[0].mxu0 %v505
        %v573 = vpop.f32.mrb[0].mxu0
        %v574 = vadd.f32 0.0, %v573
        %v575 = vpop.f32.mrb[0].mxu0
        %576 = vdwg.mxu0
        %vm577 = vcmask 27648
        %578 = vst.msk [vmem:[%s293] sm:$0xf] %vm577, %v574
        %v579 = vld [vmem:[%s2] sm:$0xf]
        %v580 = vld [vmem:[%s3] sm:$0xff]
        %v582 = vsel %vm401, %v307, 0
        %584 = vmatprep.subr.mxu0 0.0
        %585 = vmatpush1.msra.mxu0 %v580
        %586 = vmatprep.subr.mxu0 0.0
        %587 = vmatpush1.msra.mxu0 0.0
        %588 = vmatprep.subr.mxu0 0.0
        %589 = vmatpush1.msra.mxu0 0.0
        %590 = vmatprep.subr.mxu0 0.0
        %591 = vmatpush1.msra.mxu0 0.0
        %592 = vmatprep.subr.mxu0 0.0
        %593 = vmatpush1.msra.mxu0 0.0
        %594 = vmatprep.subr.mxu0 0.0
        %595 = vmatpush1.msra.mxu0 0.0
        %596 = vmatprep.subr.mxu0 0.0
        %597 = vmatpush1.msra.mxu0 0.0
        %598 = vmatprep.subr.mxu0 0.0
        %599 = vmatpush1.msra.mxu0 0.0
        %600 = vmatprep.subr.mxu0 0.0
        %601 = vmatpush1.msra.mxu0 0.0
        %602 = vmatprep.subr.mxu0 0.0
        %603 = vmatpush1.msra.mxu0 0.0
        %604 = vmatprep.subr.mxu0 0.0
        %605 = vmatpush1.msra.mxu0 0.0
        %606 = vmatprep.subr.mxu0 0.0
        %607 = vmatpush1.msra.mxu0 0.0
        %608 = vmatprep.subr.mxu0 0.0
        %609 = vmatpush1.msra.mxu0 0.0
        %610 = vmatprep.subr.mxu0 0.0
        %611 = vmatpush1.msra.mxu0 0.0
        %612 = vmatprep.subr.mxu0 0.0
        %613 = vmatpush1.msra.mxu0 0.0
        %614 = vmatprep.subr.mxu0 0.0
        %615 = vmatpush1.msra.mxu0 0.0
        %616 = vmatprep.subr.mxu0 0.0
        %617 = vmatpush1.msra.mxu0 0.0
        %618 = vmatprep.subr.mxu0 0.0
        %619 = vmatpush1.msra.mxu0 0.0
        %620 = vmatprep.subr.mxu0 0.0
        %621 = vmatpush1.msra.mxu0 0.0
        %622 = vmatprep.subr.mxu0 0.0
        %623 = vmatpush1.msra.mxu0 0.0
        %624 = vmatprep.subr.mxu0 0.0
        %625 = vmatpush1.msra.mxu0 0.0
        %626 = vmatprep.subr.mxu0 0.0
        %627 = vmatpush1.msra.mxu0 0.0
        %628 = vmatprep.subr.mxu0 0.0
        %629 = vmatpush1.msra.mxu0 0.0
        %630 = vmatprep.subr.mxu0 0.0
        %631 = vmatpush1.msra.mxu0 0.0
        %632 = vmatprep.subr.mxu0 0.0
        %633 = vmatpush1.msra.mxu0 0.0
        %634 = vmatprep.subr.mxu0 0.0
        %635 = vmatpush1.msra.mxu0 0.0
        %636 = vmatprep.subr.mxu0 0.0
        %637 = vmatpush1.msra.mxu0 0.0
        %638 = vmatprep.subr.mxu0 0.0
        %639 = vmatpush1.msra.mxu0 0.0
        %640 = vmatprep.subr.mxu0 0.0
        %641 = vmatpush1.msra.mxu0 0.0
        %642 = vmatprep.subr.mxu0 0.0
        %643 = vmatpush1.msra.mxu0 0.0
        %644 = vmatprep.subr.mxu0 0.0
        %645 = vmatpush1.msra.mxu0 0.0
        %646 = vmatprep.subr.mxu0 0.0
        %647 = vmatpush1.msra.mxu0 0.0
        %648 = vmatprep.mubr.f32.mxu0 0.0
        %649 = vmatmul.mubr.f32.gmra.mrb[0].mxu0 %v582
        %v650 = vpop.f32.mrb[0].mxu0
        %v651 = vadd.f32 0.0, %v650
        %v652 = vpop.f32.mrb[0].mxu0
        %653 = vdwg.mxu0
        %v655 = vsel %vm401, %v579, 0
        %657 = vmatprep.subr.mxu0 0.0
        %658 = vmatpush1.msra.mxu0 %v651
        %659 = vmatprep.subr.mxu0 0.0
        %660 = vmatpush1.msra.mxu0 0.0
        %661 = vmatprep.subr.mxu0 0.0
        %662 = vmatpush1.msra.mxu0 0.0
        %663 = vmatprep.subr.mxu0 0.0
        %664 = vmatpush1.msra.mxu0 0.0
        %665 = vmatprep.subr.mxu0 0.0
        %666 = vmatpush1.msra.mxu0 0.0
        %667 = vmatprep.subr.mxu0 0.0
        %668 = vmatpush1.msra.mxu0 0.0
        %669 = vmatprep.subr.mxu0 0.0
        %670 = vmatpush1.msra.mxu0 0.0
        %671 = vmatprep.subr.mxu0 0.0
        %672 = vmatpush1.msra.mxu0 0.0
        %673 = vmatprep.subr.mxu0 0.0
        %674 = vmatpush1.msra.mxu0 0.0
        %675 = vmatprep.subr.mxu0 0.0
        %676 = vmatpush1.msra.mxu0 0.0
        %677 = vmatprep.subr.mxu0 0.0
        %678 = vmatpush1.msra.mxu0 0.0
        %679 = vmatprep.subr.mxu0 0.0
        %680 = vmatpush1.msra.mxu0 0.0
        %681 = vmatprep.subr.mxu0 0.0
        %682 = vmatpush1.msra.mxu0 0.0
        %683 = vmatprep.subr.mxu0 0.0
        %684 = vmatpush1.msra.mxu0 0.0
        %685 = vmatprep.subr.mxu0 0.0
        %686 = vmatpush1.msra.mxu0 0.0
        %687 = vmatprep.subr.mxu0 0.0
        %688 = vmatpush1.msra.mxu0 0.0
        %689 = vmatprep.subr.mxu0 0.0
        %690 = vmatpush1.msra.mxu0 0.0
        %691 = vmatprep.subr.mxu0 0.0
        %692 = vmatpush1.msra.mxu0 0.0
        %693 = vmatprep.subr.mxu0 0.0
        %694 = vmatpush1.msra.mxu0 0.0
        %695 = vmatprep.subr.mxu0 0.0
        %696 = vmatpush1.msra.mxu0 0.0
        %697 = vmatprep.subr.mxu0 0.0
        %698 = vmatpush1.msra.mxu0 0.0
        %699 = vmatprep.subr.mxu0 0.0
        %700 = vmatpush1.msra.mxu0 0.0
        %701 = vmatprep.subr.mxu0 0.0
        %702 = vmatpush1.msra.mxu0 0.0
        %703 = vmatprep.subr.mxu0 0.0
        %704 = vmatpush1.msra.mxu0 0.0
        %705 = vmatprep.subr.mxu0 0.0
        %706 = vmatpush1.msra.mxu0 0.0
        %707 = vmatprep.subr.mxu0 0.0
        %708 = vmatpush1.msra.mxu0 0.0
        %709 = vmatprep.subr.mxu0 0.0
        %710 = vmatpush1.msra.mxu0 0.0
        %711 = vmatprep.subr.mxu0 0.0
        %712 = vmatpush1.msra.mxu0 0.0
        %713 = vmatprep.subr.mxu0 0.0
        %714 = vmatpush1.msra.mxu0 0.0
        %715 = vmatprep.subr.mxu0 0.0
        %716 = vmatpush1.msra.mxu0 0.0
        %717 = vmatprep.subr.mxu0 0.0
        %718 = vmatpush1.msra.mxu0 0.0
        %719 = vmatprep.subr.mxu0 0.0
        %720 = vmatpush1.msra.mxu0 0.0
        %721 = vmatprep.mubr.f32.mxu0 0.0
        %722 = vmatmul.mubr.f32.gmra.mrb[0].mxu0 %v655
        %v723 = vpop.f32.mrb[0].mxu0
        %v724 = vadd.f32 0.0, %v723
        %v725 = vpop.f32.mrb[0].mxu0
        %726 = vdwg.mxu0
        %727 = vst.msk [vmem:[%s297] sm:$0xf] %vm577, %v724
        %p728 = scmp.eq.s32.totalorder %s21, 1
        // Predicated region
        $region41: #{ms_gradient_loss.5} parent=35 // pred_check
          %p729 = pneg %p728
        $region42: #{ms_gradient_loss.5} parent=35 // pred_check_branch
          %731 = sbr.rel (%p729) target = $region44
        $region43: #{ms_gradient_loss.5} parent=35 // pred_region
          %s732 = sld [smem:[#allocation2]]
          %s733 = scalar_lea.smem [#allocation3], 0
          %734 = sst [smem:[%s733]] %s732
          %s735 = sld [smem:[#allocation2 + $0x1]]
          %s736 = scalar_lea.smem [#allocation5], 0
          %737 = sst [smem:[%s736]] %s735
        $region44: #{ms_gradient_loss.5} parent=35 // pred_fallthru
          _
        %p738 = scmp.lt.s32.totalorder %s21, 1
        %s739 = scalar_select %p738, %s21, 1
        %s740 = smul.addr %s739, 4
        %s741 = scalar_lea.vmem %s6, %s740
        %p742 = scmp.lt.s32.totalorder %s21, 1
        %s743 = scalar_select %p742, %s21, 1
        %s744 = smul.addr %s743, 4
        %s745 = scalar_lea.vmem %s7, %s744
        // Predicated region
        $region45: #{ms_gradient_loss.5} parent=35 // pred_check
          %p746 = pneg %p128
        $region46: #{ms_gradient_loss.5} parent=35 // pred_check_branch
          %748 = sbr.rel (%p746) target = $region48
        $region47: #{ms_gradient_loss.5} parent=35 // pred_region
          %s750 = ssub.s32 16, 16
          %751 = vsyncadd [#allocation4], %s750
          %754 = dma.smem_to_hbm [#allocation3], 16, %s4, [#allocation4]
        $region48: #{ms_gradient_loss.5} parent=35 // pred_fallthru
          _
        // Predicated region
        $region49: #{ms_gradient_loss.5} parent=35 // pred_check
          %p755 = pneg %p149
        $region50: #{ms_gradient_loss.5} parent=35 // pred_check_branch
          %757 = sbr.rel (%p755) target = $region52
        $region51: #{ms_gradient_loss.5} parent=35 // pred_region
          %s759 = ssub.s32 16, 16
          %760 = vsyncadd [#allocation6], %s759
          %763 = dma.smem_to_hbm [#allocation5], 16, %s5, [#allocation6]
        $region52: #{ms_gradient_loss.5} parent=35 // pred_fallthru
          _
        // Predicated region
        $region53: #{ms_gradient_loss.5} parent=35 // pred_check
          %p764 = pneg %p175
        $region54: #{ms_gradient_loss.5} parent=35 // pred_check_branch
          %766 = sbr.rel (%p764) target = $region56
        $region55: #{ms_gradient_loss.5} parent=35 // pred_region
          _
        $region56: #{ms_gradient_loss.5} parent=35 // pred_fallthru
          _
        // Predicated region
        $region57: #{ms_gradient_loss.5} parent=35 // pred_check
          %p767 = pneg %p201
        $region58: #{ms_gradient_loss.5} parent=35 // pred_check_branch
          %769 = sbr.rel (%p767) target = $region60
        $region59: #{ms_gradient_loss.5} parent=35 // pred_region
          _
        $region60: #{ms_gradient_loss.5} parent=35 // pred_fallthru
          _
        // Predicated region
        $region61: #{ms_gradient_loss.5} parent=35 // pred_check
          %p770 = pneg %p128
        $region62: #{ms_gradient_loss.5} parent=35 // pred_check_branch
          %772 = sbr.rel (%p770) target = $region64
        $region63: #{ms_gradient_loss.5} parent=35 // pred_region
          %773 = dma.done [#allocation4], 16
        $region64: #{ms_gradient_loss.5} parent=35 // pred_fallthru
          _
        // Predicated region
        $region65: #{ms_gradient_loss.5} parent=35 // pred_check
          %p774 = pneg %p149
        $region66: #{ms_gradient_loss.5} parent=35 // pred_check_branch
          %776 = sbr.rel (%p774) target = $region68
        $region67: #{ms_gradient_loss.5} parent=35 // pred_region
          %777 = dma.done [#allocation6], 16
        $region68: #{ms_gradient_loss.5} parent=35 // pred_fallthru
          _
        %778 = sfence
      $region36: #{ms_gradient_loss.5} parent=5 // pred_fallthru
        _
      %p779 = scmp.le.s32.totalorder 2, %s16
      // Predicated region
      $region69: #{ms_gradient_loss.5} parent=5 // pred_check
        %p780 = pneg %p779
      $region70: #{ms_gradient_loss.5} parent=5 // pred_check_branch
        %782 = sbr.rel (%p780) target = $region72
      $region71: #{ms_gradient_loss.5} parent=5 // pred_region
        %s783 = ssub.s32 %s16, 2
        // Predicated region
        $region73: #{ms_gradient_loss.5} parent=71 // pred_check
          %p784 = pneg %p181
        $region74: #{ms_gradient_loss.5} parent=71 // pred_check_branch
          %786 = sbr.rel (%p784) target = $region76
        $region75: #{ms_gradient_loss.5} parent=71 // pred_region
          %p787 = scmp.lt.s32.totalorder %s22, 1
          %s788 = scalar_select %p787, %s22, 1
          %s789 = smul.addr %s788, 4
          %s790 = scalar_lea.vmem %s6, %s789
        $region76: #{ms_gradient_loss.5} parent=71 // pred_fallthru
          _
        // Predicated region
        $region77: #{ms_gradient_loss.5} parent=71 // pred_check
          %p791 = pneg %p207
        $region78: #{ms_gradient_loss.5} parent=71 // pred_check_branch
          %793 = sbr.rel (%p791) target = $region80
        $region79: #{ms_gradient_loss.5} parent=71 // pred_region
          %p794 = scmp.lt.s32.totalorder %s22, 1
          %s795 = scalar_select %p794, %s22, 1
          %s796 = smul.addr %s795, 4
          %s797 = scalar_lea.vmem %s7, %s796
        $region80: #{ms_gradient_loss.5} parent=71 // pred_fallthru
          _
      $region72: #{ms_gradient_loss.5} parent=5 // pred_fallthru
        _
    $region6: #{ms_gradient_loss.5} parent=1 // loop_footer
      %s20 = sadd.s32 1, %s16
    $region7: #{ms_gradient_loss.5} parent=1 // loop_footer_branch
      %15 = sbr.rel target = $region3
    $region8: #{ms_gradient_loss.5} parent=1 // loop_exit
      _
    %798 = vsyncpa [#allocation4], 1
    %s799 = scalar_lea.sflag [#allocation4], 1
    %800 = vsyncpa %s799, 1
    %801 = vsyncpa [#allocation6], 1

// kernel: ms_gradient_loss.7
$region0: #{ms_gradient_loss.7}
  #allocation0 [shape = 'u32[]', space=smem, size = 0x4, offset = 0x4, fixed_abs, tag = 'smem constant byte address 0x4 - core index']
  #allocation1 [shape = 'u32[144,128]{1,0:T(1,128)}', space=vmem, size = 0x12000, scoped, tag = 'internal scratch']
  #allocation2 [shape = 'f32[2]{0:T(128)}', space=smem, size = 0x200, scoped, tag = 'scratch operand']
  %s0 = inlined_call_operand.vmem [shape: f32[2,1,2,2], index: 0, kind: input, shape index: {}]
  %s1 = inlined_call_operand.vmem [shape: f32[2,1,2,2], index: 1, kind: input, shape index: {}]
  %s2 = inlined_call_operand.hbm [shape: f32[1], index: 2, kind: output, shape index: {0}]
  %s3 = inlined_call_operand.hbm [shape: f32[1], index: 3, kind: output, shape index: {1}]
  %4 = xla_tuple %s2, %s3
  %s5 = sld [smem:[#allocation0]]
  $region57: #{ms_gradient_loss.7} parent=0
    _
  %s7 = ssub.s32 1, %s5
  %s8 = scalar_select 0, %s7, %s5
  $region1: #{ms_gradient_loss.7} parent=0
    #allocation3 [shape = 'u8[512]{0}', space=smem, size = 0x200, scoped, tag = 'output window, operand 0, single buffered']
    #allocation4 [shape = 's32[2]{0}', space=sflag, size = 0x8, scoped, tag = 'scoped memory for ms_gradient_loss.7']
    #allocation5 [shape = 'u8[512]{0}', space=smem, size = 0x200, scoped, tag = 'output window, operand 1, single buffered']
    #allocation6 [shape = 's32[1]{0}', space=sflag, size = 0x4, scoped, tag = 'scoped memory for ms_gradient_loss.7']
    %9 = vsyncpa [#allocation4], 0
    %10 = vsyncpa [#allocation6], 0
    loop: start=0, step=1, limit=4
    $region2: #{ms_gradient_loss.7} parent=1 // loop_pre_header
      _
    $region3: #{ms_gradient_loss.7} parent=1 // loop_header
      %s12 = sphi 0, %s16
      %p13 = scmp.ge.s32.totalorder %s12, 4
      %s22 = sphi 0, %s24
      %s25 = sphi 0, %s22
      %s26 = sphi 0, %s25
      %s42 = sphi 0, %s26
      %s48 = sphi 0, %s50
      %s51 = sphi 0, %s48
      %s52 = sphi 0, %s51
      %s68 = sphi 0, %s52
      %s72 = sphi 0, %s72
      %s74 = sphi 0, %s72
      %s75 = sphi 0, %s74
      %s89 = sphi 0, %s75
      %s93 = sphi 0, %s93
      %s95 = sphi 0, %s93
      %s96 = sphi 0, %s95
      %s110 = sphi 0, %s96
    $region4: #{ms_gradient_loss.7} parent=1 // loop_header_branch
      %15 = sbr.rel (%p13) target = $region8
    $region5: #{ms_gradient_loss.7} parent=1 // loop_body
      %s17 = ssub.s32 %s12, 1
      %s18 = ssub.s32 %s12, 2
      %s19 = sadd.s32 %s12, 1
      %s20 = ssub.s32 %s12, %s19
      %p21 = scmp.eq.s32.totalorder %s20, 0
      %s23 = sadd.s32 %s22, 1
      %s24 = scalar_select %p21, %s22, %s23
      %p27 = pneg %p21
      %p28 = scmp.eq.s32.totalorder %s12, 1
      %p29 = por %p27, %p28
      %p30 = scmp.ne.s32.totalorder %s22, %s25
      %p31 = scmp.eq.s32.totalorder %s12, 0
      %p32 = por %p30, %p31
      %p33 = scmp.ne.s32.totalorder %s22, %s25
      %p34 = scmp.eq.s32.totalorder %s17, 1
      %p35 = por %p33, %p34
      %p36 = scmp.ne.s32.totalorder %s25, %s26
      %p37 = scmp.eq.s32.totalorder %s17, 0
      %p38 = por %p36, %p37
      %p39 = scmp.ne.s32.totalorder %s25, %s26
      %p40 = scmp.eq.s32.totalorder %s18, 1
      %p41 = por %p39, %p40
      %p43 = scmp.ne.s32.totalorder %s26, %s42
      %p44 = scmp.eq.s32.totalorder %s18, 0
      %p45 = por %p43, %p44
      %s46 = ssub.s32 %s12, %s19
      %p47 = scmp.eq.s32.totalorder %s46, 0
      %s49 = sadd.s32 %s48, 1
      %s50 = scalar_select %p47, %s48, %s49
      %p53 = pneg %p47
      %p54 = scmp.eq.s32.totalorder %s12, 1
      %p55 = por %p53, %p54
      %p56 = scmp.ne.s32.totalorder %s48, %s51
      %p57 = scmp.eq.s32.totalorder %s12, 0
      %p58 = por %p56, %p57
      %p59 = scmp.ne.s32.totalorder %s48, %s51
      %p60 = scmp.eq.s32.totalorder %s17, 1
      %p61 = por %p59, %p60
      %p62 = scmp.ne.s32.totalorder %s51, %s52
      %p63 = scmp.eq.s32.totalorder %s17, 0
      %p64 = por %p62, %p63
      %p65 = scmp.ne.s32.totalorder %s51, %s52
      %p66 = scmp.eq.s32.totalorder %s18, 1
      %p67 = por %p65, %p66
      %p69 = scmp.ne.s32.totalorder %s52, %s68
      %p70 = scmp.eq.s32.totalorder %s18, 0
      %p71 = por %p69, %p70
      %s73 = sadd.s32 %s72, 1
      %p76 = scmp.eq.s32.totalorder %s12, 1
      %p77 = scmp.ne.s32.totalorder %s72, %s74
      %p78 = scmp.eq.s32.totalorder %s12, 0
      %p79 = por %p77, %p78
      %p80 = scmp.ne.s32.totalorder %s72, %s74
      %p81 = scmp.eq.s32.totalorder %s17, 1
      %p82 = por %p80, %p81
      %p83 = scmp.ne.s32.totalorder %s74, %s75
      %p84 = scmp.eq.s32.totalorder %s17, 0
      %p85 = por %p83, %p84
      %p86 = scmp.ne.s32.totalorder %s74, %s75
      %p87 = scmp.eq.s32.totalorder %s18, 1
      %p88 = por %p86, %p87
      %p90 = scmp.ne.s32.totalorder %s75, %s89
      %p91 = scmp.eq.s32.totalorder %s18, 0
      %p92 = por %p90, %p91
      %s94 = sadd.s32 %s93, 1
      %p97 = scmp.eq.s32.totalorder %s12, 1
      %p98 = scmp.ne.s32.totalorder %s93, %s95
      %p99 = scmp.eq.s32.totalorder %s12, 0
      %p100 = por %p98, %p99
      %p101 = scmp.ne.s32.totalorder %s93, %s95
      %p102 = scmp.eq.s32.totalorder %s17, 1
      %p103 = por %p101, %p102
      %p104 = scmp.ne.s32.totalorder %s95, %s96
      %p105 = scmp.eq.s32.totalorder %s17, 0
      %p106 = por %p104, %p105
      %p107 = scmp.ne.s32.totalorder %s95, %s96
      %p108 = scmp.eq.s32.totalorder %s18, 1
      %p109 = por %p107, %p108
      %p111 = scmp.ne.s32.totalorder %s96, %s110
      %p112 = scmp.eq.s32.totalorder %s18, 0
      %p113 = por %p111, %p112
      %p114 = scmp.le.s32.totalorder 1, %s12
      %p115 = scmp.lt.s32.totalorder %s12, 3
      %p116 = pnand %p114, %p115
      %p117 = pneg %p116
      // Predicated region
      $region9: #{ms_gradient_loss.7} parent=5 // pred_check
        _
      $region10: #{ms_gradient_loss.7} parent=5 // pred_check_branch
        %119 = sbr.rel (%p116) target = $region12
      $region11: #{ms_gradient_loss.7} parent=5 // pred_region
        %s120 = ssub.s32 %s12, 1
      $region12: #{ms_gradient_loss.7} parent=5 // pred_fallthru
        _
      %p121 = scmp.lt.s32.totalorder %s12, 2
      // Predicated region
      $region13: #{ms_gradient_loss.7} parent=5 // pred_check
        %p122 = pneg %p121
      $region14: #{ms_gradient_loss.7} parent=5 // pred_check_branch
        %124 = sbr.rel (%p122) target = $region16
      $region15: #{ms_gradient_loss.7} parent=5 // pred_region
        // Predicated region
        $region17: #{ms_gradient_loss.7} parent=15 // pred_check
          %p125 = pneg %p32
        $region18: #{ms_gradient_loss.7} parent=15 // pred_check_branch
          %127 = sbr.rel (%p125) target = $region20
        $region19: #{ms_gradient_loss.7} parent=15 // pred_region
          %p128 = scmp.lt.s32.totalorder %s12, 1
          %s129 = scalar_select %p128, %s12, 1
          %s130 = smul.addr %s129, 2
          %s131 = scalar_lea.vmem %s0, %s130
        $region20: #{ms_gradient_loss.7} parent=15 // pred_fallthru
          _
        // Predicated region
        $region21: #{ms_gradient_loss.7} parent=15 // pred_check
          %p132 = pneg %p58
        $region22: #{ms_gradient_loss.7} parent=15 // pred_check_branch
          %134 = sbr.rel (%p132) target = $region24
        $region23: #{ms_gradient_loss.7} parent=15 // pred_region
          %p135 = scmp.lt.s32.totalorder %s12, 1
          %s136 = scalar_select %p135, %s12, 1
          %s137 = smul.addr %s136, 2
          %s138 = scalar_lea.vmem %s1, %s137
        $region24: #{ms_gradient_loss.7} parent=15 // pred_fallthru
          _
      $region16: #{ms_gradient_loss.7} parent=5 // pred_fallthru
        _
      %p139 = scmp.le.s32.totalorder 1, %s12
      %p140 = scmp.lt.s32.totalorder %s12, 3
      %p141 = pnand %p139, %p140
      %p142 = pneg %p141
      // Predicated region
      $region25: #{ms_gradient_loss.7} parent=5 // pred_check
        _
      $region26: #{ms_gradient_loss.7} parent=5 // pred_check_branch
        %144 = sbr.rel (%p141) target = $region28
      $region27: #{ms_gradient_loss.7} parent=5 // pred_region
        %s145 = ssub.s32 %s12, 1
        %p146 = scmp.lt.s32.totalorder %s17, 1
        %s147 = scalar_select %p146, %s17, 1
        %s148 = smul.addr %s147, 2
        %s149 = scalar_lea.vmem %s0, %s148
        %p150 = pneg %p38
        %p151 = pneg %p35
        %p152 = scmp.lt.s32.totalorder %s17, 1
        %s153 = scalar_select %p152, %s17, 1
        %s154 = smul.addr %s153, 2
        %s155 = scalar_lea.vmem %s1, %s154
        %p156 = pneg %p64
        %p157 = pneg %p61
        %p158 = pneg %p85
        %p159 = pneg %p82
        %p160 = pneg %p106
        %p161 = pneg %p103
        %p162 = scmp.lt.s32.totalorder %s17, 1
        %s163 = scalar_select %p162, %s17, 1
        %s164 = smul.addr %s163, 2
        %s165 = scalar_lea.vmem %s0, %s164
        %p166 = scmp.lt.s32.totalorder %s17, 1
        %s167 = scalar_select %p166, %s17, 1
        %s168 = smul.addr %s167, 2
        %s169 = scalar_lea.vmem %s1, %s168
        %p170 = scmp.eq.s32.totalorder %s17, 0
        // Predicated region
        $region29: #{ms_gradient_loss.7} parent=27 // pred_check
          %p171 = pneg %p170
        $region30: #{ms_gradient_loss.7} parent=27 // pred_check_branch
          %173 = sbr.rel (%p171) target = $region32
        $region31: #{ms_gradient_loss.7} parent=27 // pred_region
          %s174 = scalar_lea.smem [#allocation2], 0
          %175 = sst [smem:[%s174]] 0.0
          %s176 = scalar_lea.smem [#allocation2], 1
          %177 = sst [smem:[%s176]] 0.0
        $region32: #{ms_gradient_loss.7} parent=27 // pred_fallthru
          _
        %v178 = vld [vmem:[%s165] sm:$0x3]
        %v179 = vld [vmem:[%s169] sm:$0x3]
        %181 = vrot.lane.b32.xlu0 %v178, 127
        %v182 = vpop.permute.xlu0 %181
        %vm184 = vcmask 7168
        %v185 = vsel %vm184, %v182, %v178
        %186 = vrot.lane.b32.xlu0 %v178, 1
        %v187 = vpop.permute.xlu0 %186
        %v189 = vsel %vm184, %v178, %v187
        %v190 = vsub.f32 %v185, %v189
        %v192 = vrot.slane %v190, 7
        %vm194 = vcmask 1040384
        %v195 = vsel %vm194, %v190, %v192
        %v196 = vmul.f32 %v190, 2.0
        %v197 = vadd.f32 %v195, %v196
        %v198 = vrot.slane %v190, 1
        %v200 = vsel %vm194, %v198, %v190
        %v201 = vadd.f32 %v197, %v200
        %v202 = vmul.f32 %v201, 0.125
        %v203 = vrot.slane %v178, 1
        %v205 = vsel %vm194, %v203, %v178
        %v206 = vrot.slane %v178, 7
        %v208 = vsel %vm194, %v178, %v206
        %v209 = vsub.f32 %v205, %v208
        %211 = vrot.lane.b32.xlu0 %v209, 1
        %v212 = vpop.permute.xlu0 %211
        %v214 = vsel %vm184, %v209, %v212
        %v215 = vmul.f32 %v209, 2.0
        %v216 = vadd.f32 %v214, %v215
        %217 = vrot.lane.b32.xlu0 %v209, 127
        %v218 = vpop.permute.xlu0 %217
        %v220 = vsel %vm184, %v218, %v209
        %v221 = vadd.f32 %v216, %v220
        %v222 = vmul.f32 %v221, 0.125
        %v223 = vsub.f32 %v179, %v178
        %225 = vrot.lane.b32.xlu0 %v223, 127
        %v226 = vpop.permute.xlu0 %225
        %v228 = vsel %vm184, %v226, %v223
        %229 = vrot.lane.b32.xlu0 %v223, 1
        %v230 = vpop.permute.xlu0 %229
        %v232 = vsel %vm184, %v223, %v230
        %v233 = vsub.f32 %v228, %v232
        %v235 = vrot.slane %v233, 7
        %v237 = vsel %vm194, %v233, %v235
        %v238 = vmul.f32 %v233, 2.0
        %v239 = vadd.f32 %v237, %v238
        %v240 = vrot.slane %v233, 1
        %v242 = vsel %vm194, %v240, %v233
        %v243 = vadd.f32 %v239, %v242
        %v244 = vmul.f32 %v243, 0.125
        %v245 = vrot.slane %v223, 1
        %v247 = vsel %vm194, %v245, %v223
        %v248 = vrot.slane %v223, 7
        %v250 = vsel %vm194, %v223, %v248
        %v251 = vsub.f32 %v247, %v250
        %253 = vrot.lane.b32.xlu0 %v251, 1
        %v254 = vpop.permute.xlu0 %253
        %v256 = vsel %vm184, %v251, %v254
        %v257 = vmul.f32 %v251, 2.0
        %v258 = vadd.f32 %v256, %v257
        %259 = vrot.lane.b32.xlu0 %v251, 127
        %v260 = vpop.permute.xlu0 %259
        %v262 = vsel %vm184, %v260, %v251
        %v263 = vadd.f32 %v258, %v262
        %v264 = vmul.f32 %v263, 0.125
        %v265 = vand.u32 2147483647, %v202
        %vm266 = vcmp.lt.f32.partialorder %v265, inf
        %v267 = vand.u32 2147483647, %v222
        %vm268 = vcmp.lt.f32.partialorder %v267, inf
        %v269 = vand.u32 2147483647, %v244
        %v270 = vsel %vm266, %v269, 0.0
        %v271 = vand.u32 2147483647, %v264
        %v272 = vsel %vm268, %v271, 0.0
        %v273 = vadd.f32 %v270, %v272
        %v274 = vsel %vm266, 1, 0
        %v275 = vcvt.s32.f32 %v274
        %v276 = vsel %vm268, 1, 0
        %v277 = vcvt.s32.f32 %v276
        %v278 = vadd.f32 %v275, %v277
        %vm279 = vcmask 9216
        %v280 = vsel %vm279, %v273, 0.0
        %281 = vadd.xlane.f32.xlu0 %v280
        %v282 = vpop.xlane.xlu0 %281
        %v283 = vrot.slane %v282, 4
        %v284 = vadd.f32 %v282, %v283
        %v285 = vrot.slane %v284, 2
        %v286 = vadd.f32 %v284, %v285
        %v287 = vrot.slane %v286, 1
        %v288 = vadd.f32 %v286, %v287
        %s289 = vtos %v288
        %v290 = vsel %vm279, %v278, 0.0
        %291 = vadd.xlane.f32.xlu0 %v290
        %v292 = vpop.xlane.xlu0 %291
        %v293 = vrot.slane %v292, 4
        %v294 = vadd.f32 %v292, %v293
        %v295 = vrot.slane %v294, 2
        %v296 = vadd.f32 %v294, %v295
        %v297 = vrot.slane %v296, 1
        %v298 = vadd.f32 %v296, %v297
        %s299 = vtos %v298
        %s300 = sld [smem:[#allocation2]]
        %s301 = sadd.f32 %s300, %s289
        %s302 = scalar_lea.smem [#allocation2], 0
        %303 = sst [smem:[%s302]] %s301
        %s304 = sld [smem:[#allocation2 + $0x1]]
        %s305 = sadd.f32 %s304, %s299
        %s306 = scalar_lea.smem [#allocation2], 1
        %307 = sst [smem:[%s306]] %s305
        %p308 = scmp.eq.s32.totalorder %s17, 1
        // Predicated region
        $region33: #{ms_gradient_loss.7} parent=27 // pred_check
          %p309 = pneg %p308
        $region34: #{ms_gradient_loss.7} parent=27 // pred_check_branch
          %311 = sbr.rel (%p309) target = $region36
        $region35: #{ms_gradient_loss.7} parent=27 // pred_region
          %s312 = sld [smem:[#allocation2]]
          %s313 = scalar_lea.smem [#allocation3], 0
          %314 = sst [smem:[%s313]] %s312
          %s315 = sld [smem:[#allocation2 + $0x1]]
          %s316 = scalar_lea.smem [#allocation5], 0
          %317 = sst [smem:[%s316]] %s315
        $region36: #{ms_gradient_loss.7} parent=27 // pred_fallthru
          _
        // Predicated region
        $region37: #{ms_gradient_loss.7} parent=27 // pred_check
          %p318 = pneg %p82
        $region38: #{ms_gradient_loss.7} parent=27 // pred_check_branch
          %320 = sbr.rel (%p318) target = $region40
        $region39: #{ms_gradient_loss.7} parent=27 // pred_region
          %s322 = ssub.s32 16, 16
          %323 = vsyncadd [#allocation4], %s322
          %326 = dma.smem_to_hbm [#allocation3], 16, %s2, [#allocation4]
        $region40: #{ms_gradient_loss.7} parent=27 // pred_fallthru
          _
        // Predicated region
        $region41: #{ms_gradient_loss.7} parent=27 // pred_check
          %p327 = pneg %p103
        $region42: #{ms_gradient_loss.7} parent=27 // pred_check_branch
          %329 = sbr.rel (%p327) target = $region44
        $region43: #{ms_gradient_loss.7} parent=27 // pred_region
          %s331 = ssub.s32 16, 16
          %332 = vsyncadd [#allocation6], %s331
          %335 = dma.smem_to_hbm [#allocation5], 16, %s3, [#allocation6]
        $region44: #{ms_gradient_loss.7} parent=27 // pred_fallthru
          _
        // Predicated region
        $region45: #{ms_gradient_loss.7} parent=27 // pred_check
          %p336 = pneg %p82
        $region46: #{ms_gradient_loss.7} parent=27 // pred_check_branch
          %338 = sbr.rel (%p336) target = $region48
        $region47: #{ms_gradient_loss.7} parent=27 // pred_region
          %339 = dma.done [#allocation4], 16
        $region48: #{ms_gradient_loss.7} parent=27 // pred_fallthru
          _
        // Predicated region
        $region49: #{ms_gradient_loss.7} parent=27 // pred_check
          %p340 = pneg %p103
        $region50: #{ms_gradient_loss.7} parent=27 // pred_check_branch
          %342 = sbr.rel (%p340) target = $region52
        $region51: #{ms_gradient_loss.7} parent=27 // pred_region
          %343 = dma.done [#allocation6], 16
        $region52: #{ms_gradient_loss.7} parent=27 // pred_fallthru
          _
        %344 = sfence
      $region28: #{ms_gradient_loss.7} parent=5 // pred_fallthru
        _
      %p345 = scmp.le.s32.totalorder 2, %s12
      // Predicated region
      $region53: #{ms_gradient_loss.7} parent=5 // pred_check
        %p346 = pneg %p345
      $region54: #{ms_gradient_loss.7} parent=5 // pred_check_branch
        %348 = sbr.rel (%p346) target = $region56
      $region55: #{ms_gradient_loss.7} parent=5 // pred_region
        %s349 = ssub.s32 %s12, 2
      $region56: #{ms_gradient_loss.7} parent=5 // pred_fallthru
        _
    $region6: #{ms_gradient_loss.7} parent=1 // loop_footer
      %s16 = sadd.s32 1, %s12
    $region7: #{ms_gradient_loss.7} parent=1 // loop_footer_branch
      %11 = sbr.rel target = $region3
    $region8: #{ms_gradient_loss.7} parent=1 // loop_exit
      _
    %350 = vsyncpa [#allocation4], 1
    %s351 = scalar_lea.sflag [#allocation4], 1
    %352 = vsyncpa %s351, 1
    %353 = vsyncpa [#allocation6], 1

// kernel: ms_gradient_loss.6
$region0: #{ms_gradient_loss.6}
  #allocation0 [shape = 'u32[]', space=smem, size = 0x4, offset = 0x4, fixed_abs, tag = 'smem constant byte address 0x4 - core index']
  #allocation1 [shape = 'u32[144,128]{1,0:T(1,128)}', space=vmem, size = 0x12000, scoped, tag = 'internal scratch']
  #allocation2 [shape = 'f32[2]{0:T(128)}', space=smem, size = 0x200, scoped, tag = 'scratch operand']
  %s0 = inlined_call_operand.vmem [shape: f32[2,1,4,4], index: 0, kind: input, shape index: {}]
  %s1 = inlined_call_operand.vmem [shape: f32[2,1,4,4], index: 1, kind: input, shape index: {}]
  %s2 = inlined_call_operand.vmem [shape: f32[2,4], index: 2, kind: input, shape index: {}]
  %s3 = inlined_call_operand.vmem [shape: f32[4,2], index: 3, kind: input, shape index: {}]
  %s4 = inlined_call_operand.hbm [shape: f32[1], index: 4, kind: output, shape index: {0}]
  %s5 = inlined_call_operand.hbm [shape: f32[1], index: 5, kind: output, shape index: {1}]
  %s6 = inlined_call_operand.vmem [shape: f32[2,1,2,2], index: 6, kind: output, shape index: {2}]
  %s7 = inlined_call_operand.vmem [shape: f32[2,1,2,2], index: 7, kind: output, shape index: {3}]
  %8 = xla_tuple %s4, %s5, %s6, %s7
  %s9 = sld [smem:[#allocation0]]
  $region81: #{ms_gradient_loss.6} parent=0
    _
  %s11 = ssub.s32 1, %s9
  %s12 = scalar_select 0, %s11, %s9
  $region1: #{ms_gradient_loss.6} parent=0
    #allocation3 [shape = 'u8[512]{0}', space=smem, size = 0x200, scoped, tag = 'output window, operand 0, single buffered']
    #allocation4 [shape = 's32[2]{0}', space=sflag, size = 0x8, scoped, tag = 'scoped memory for ms_gradient_loss.6']
    #allocation5 [shape = 'u8[512]{0}', space=smem, size = 0x200, scoped, tag = 'output window, operand 1, single buffered']
    #allocation6 [shape = 's32[1]{0}', space=sflag, size = 0x4, scoped, tag = 'scoped memory for ms_gradient_loss.6']
    %13 = vsyncpa [#allocation4], 0
    %14 = vsyncpa [#allocation6], 0
    loop: start=0, step=1, limit=4
    $region2: #{ms_gradient_loss.6} parent=1 // loop_pre_header
      _
    $region3: #{ms_gradient_loss.6} parent=1 // loop_header
      %s16 = sphi 0, %s20
      %p17 = scmp.ge.s32.totalorder %s16, 4
      %s26 = sphi 0, %s28
      %s29 = sphi 0, %s26
      %s30 = sphi 0, %s29
      %s46 = sphi 0, %s30
      %s52 = sphi 0, %s54
      %s55 = sphi 0, %s52
      %s56 = sphi 0, %s55
      %s72 = sphi 0, %s56
      %s76 = sphi 0, %s76
      %s78 = sphi 0, %s76
      %s79 = sphi 0, %s78
      %s93 = sphi 0, %s79
      %s97 = sphi 0, %s97
      %s99 = sphi 0, %s97
      %s100 = sphi 0, %s99
      %s114 = sphi 0, %s100
      %s118 = sphi 0, %s118
      %s120 = sphi 0, %s118
      %s121 = sphi 0, %s120
      %s135 = sphi 0, %s121
      %s139 = sphi 0, %s139
      %s141 = sphi 0, %s139
      %s142 = sphi 0, %s141
      %s156 = sphi 0, %s142
      %s162 = sphi 0, %s164
      %s165 = sphi 0, %s162
      %s166 = sphi 0, %s165
      %s182 = sphi 0, %s166
      %s188 = sphi 0, %s190
      %s191 = sphi 0, %s188
      %s192 = sphi 0, %s191
      %s208 = sphi 0, %s192
    $region4: #{ms_gradient_loss.6} parent=1 // loop_header_branch
      %19 = sbr.rel (%p17) target = $region8
    $region5: #{ms_gradient_loss.6} parent=1 // loop_body
      %s21 = ssub.s32 %s16, 1
      %s22 = ssub.s32 %s16, 2
      %s23 = sadd.s32 %s16, 1
      %s24 = ssub.s32 %s16, %s23
      %p25 = scmp.eq.s32.totalorder %s24, 0
      %s27 = sadd.s32 %s26, 1
      %s28 = scalar_select %p25, %s26, %s27
      %p31 = pneg %p25
      %p32 = scmp.eq.s32.totalorder %s16, 1
      %p33 = por %p31, %p32
      %p34 = scmp.ne.s32.totalorder %s26, %s29
      %p35 = scmp.eq.s32.totalorder %s16, 0
      %p36 = por %p34, %p35
      %p37 = scmp.ne.s32.totalorder %s26, %s29
      %p38 = scmp.eq.s32.totalorder %s21, 1
      %p39 = por %p37, %p38
      %p40 = scmp.ne.s32.totalorder %s29, %s30
      %p41 = scmp.eq.s32.totalorder %s21, 0
      %p42 = por %p40, %p41
      %p43 = scmp.ne.s32.totalorder %s29, %s30
      %p44 = scmp.eq.s32.totalorder %s22, 1
      %p45 = por %p43, %p44
      %p47 = scmp.ne.s32.totalorder %s30, %s46
      %p48 = scmp.eq.s32.totalorder %s22, 0
      %p49 = por %p47, %p48
      %s50 = ssub.s32 %s16, %s23
      %p51 = scmp.eq.s32.totalorder %s50, 0
      %s53 = sadd.s32 %s52, 1
      %s54 = scalar_select %p51, %s52, %s53
      %p57 = pneg %p51
      %p58 = scmp.eq.s32.totalorder %s16, 1
      %p59 = por %p57, %p58
      %p60 = scmp.ne.s32.totalorder %s52, %s55
      %p61 = scmp.eq.s32.totalorder %s16, 0
      %p62 = por %p60, %p61
      %p63 = scmp.ne.s32.totalorder %s52, %s55
      %p64 = scmp.eq.s32.totalorder %s21, 1
      %p65 = por %p63, %p64
      %p66 = scmp.ne.s32.totalorder %s55, %s56
      %p67 = scmp.eq.s32.totalorder %s21, 0
      %p68 = por %p66, %p67
      %p69 = scmp.ne.s32.totalorder %s55, %s56
      %p70 = scmp.eq.s32.totalorder %s22, 1
      %p71 = por %p69, %p70
      %p73 = scmp.ne.s32.totalorder %s56, %s72
      %p74 = scmp.eq.s32.totalorder %s22, 0
      %p75 = por %p73, %p74
      %s77 = sadd.s32 %s76, 1
      %p80 = scmp.eq.s32.totalorder %s16, 1
      %p81 = scmp.ne.s32.totalorder %s76, %s78
      %p82 = scmp.eq.s32.totalorder %s16, 0
      %p83 = por %p81, %p82
      %p84 = scmp.ne.s32.totalorder %s76, %s78
      %p85 = scmp.eq.s32.totalorder %s21, 1
      %p86 = por %p84, %p85
      %p87 = scmp.ne.s32.totalorder %s78, %s79
      %p88 = scmp.eq.s32.totalorder %s21, 0
      %p89 = por %p87, %p88
      %p90 = scmp.ne.s32.totalorder %s78, %s79
      %p91 = scmp.eq.s32.totalorder %s22, 1
      %p92 = por %p90, %p91
      %p94 = scmp.ne.s32.totalorder %s79, %s93
      %p95 = scmp.eq.s32.totalorder %s22, 0
      %p96 = por %p94, %p95
      %s98 = sadd.s32 %s97, 1
      %p101 = scmp.eq.s32.totalorder %s16, 1
      %p102 = scmp.ne.s32.totalorder %s97, %s99
      %p103 = scmp.eq.s32.totalorder %s16, 0
      %p104 = por %p102, %p103
      %p105 = scmp.ne.s32.totalorder %s97, %s99
      %p106 = scmp.eq.s32.totalorder %s21, 1
      %p107 = por %p105, %p106
      %p108 = scmp.ne.s32.totalorder %s99, %s100
      %p109 = scmp.eq.s32.totalorder %s21, 0
      %p110 = por %p108, %p109
      %p111 = scmp.ne.s32.totalorder %s99, %s100
      %p112 = scmp.eq.s32.totalorder %s22, 1
      %p113 = por %p111, %p112
      %p115 = scmp.ne.s32.totalorder %s100, %s114
      %p116 = scmp.eq.s32.totalorder %s22, 0
      %p117 = por %p115, %p116
      %s119 = sadd.s32 %s118, 1
      %p122 = scmp.eq.s32.totalorder %s16, 1
      %p123 = scmp.ne.s32.totalorder %s118, %s120
      %p124 = scmp.eq.s32.totalorder %s16, 0
      %p125 = por %p123, %p124
      %p126 = scmp.ne.s32.totalorder %s118, %s120
      %p127 = scmp.eq.s32.totalorder %s21, 1
      %p128 = por %p126, %p127
      %p129 = scmp.ne.s32.totalorder %s120, %s121
      %p130 = scmp.eq.s32.totalorder %s21, 0
      %p131 = por %p129, %p130
      %p132 = scmp.ne.s32.totalorder %s120, %s121
      %p133 = scmp.eq.s32.totalorder %s22, 1
      %p134 = por %p132, %p133
      %p136 = scmp.ne.s32.totalorder %s121, %s135
      %p137 = scmp.eq.s32.totalorder %s22, 0
      %p138 = por %p136, %p137
      %s140 = sadd.s32 %s139, 1
      %p143 = scmp.eq.s32.totalorder %s16, 1
      %p144 = scmp.ne.s32.totalorder %s139, %s141
      %p145 = scmp.eq.s32.totalorder %s16, 0
      %p146 = por %p144, %p145
      %p147 = scmp.ne.s32.totalorder %s139, %s141
      %p148 = scmp.eq.s32.totalorder %s21, 1
      %p149 = por %p147, %p148
      %p150 = scmp.ne.s32.totalorder %s141, %s142
      %p151 = scmp.eq.s32.totalorder %s21, 0
      %p152 = por %p150, %p151
      %p153 = scmp.ne.s32.totalorder %s141, %s142
      %p154 = scmp.eq.s32.totalorder %s22, 1
      %p155 = por %p153, %p154
      %p157 = scmp.ne.s32.totalorder %s142, %s156
      %p158 = scmp.eq.s32.totalorder %s22, 0
      %p159 = por %p157, %p158
      %s160 = ssub.s32 %s16, %s23
      %p161 = scmp.eq.s32.totalorder %s160, 0
      %s163 = sadd.s32 %s162, 1
      %s164 = scalar_select %p161, %s162, %s163
      %p167 = pneg %p161
      %p168 = scmp.eq.s32.totalorder %s16, 1
      %p169 = por %p167, %p168
      %p170 = scmp.ne.s32.totalorder %s162, %s165
      %p171 = scmp.eq.s32.totalorder %s16, 0
      %p172 = por %p170, %p171
      %p173 = scmp.ne.s32.totalorder %s162, %s165
      %p174 = scmp.eq.s32.totalorder %s21, 1
      %p175 = por %p173, %p174
      %p176 = scmp.ne.s32.totalorder %s165, %s166
      %p177 = scmp.eq.s32.totalorder %s21, 0
      %p178 = por %p176, %p177
      %p179 = scmp.ne.s32.totalorder %s165, %s166
      %p180 = scmp.eq.s32.totalorder %s22, 1
      %p181 = por %p179, %p180
      %p183 = scmp.ne.s32.totalorder %s166, %s182
      %p184 = scmp.eq.s32.totalorder %s22, 0
      %p185 = por %p183, %p184
      %s186 = ssub.s32 %s16, %s23
      %p187 = scmp.eq.s32.totalorder %s186, 0
      %s189 = sadd.s32 %s188, 1
      %s190 = scalar_select %p187, %s188, %s189
      %p193 = pneg %p187
      %p194 = scmp.eq.s32.totalorder %s16, 1
      %p195 = por %p193, %p194
      %p196 = scmp.ne.s32.totalorder %s188, %s191
      %p197 = scmp.eq.s32.totalorder %s16, 0
      %p198 = por %p196, %p197
      %p199 = scmp.ne.s32.totalorder %s188, %s191
      %p200 = scmp.eq.s32.totalorder %s21, 1
      %p201 = por %p199, %p200
      %p202 = scmp.ne.s32.totalorder %s191, %s192
      %p203 = scmp.eq.s32.totalorder %s21, 0
      %p204 = por %p202, %p203
      %p205 = scmp.ne.s32.totalorder %s191, %s192
      %p206 = scmp.eq.s32.totalorder %s22, 1
      %p207 = por %p205, %p206
      %p209 = scmp.ne.s32.totalorder %s192, %s208
      %p210 = scmp.eq.s32.totalorder %s22, 0
      %p211 = por %p209, %p210
      %p212 = scmp.le.s32.totalorder 1, %s16
      %p213 = scmp.lt.s32.totalorder %s16, 3
      %p214 = pnand %p212, %p213
      %p215 = pneg %p214
      // Predicated region
      $region9: #{ms_gradient_loss.6} parent=5 // pred_check
        _
      $region10: #{ms_gradient_loss.6} parent=5 // pred_check_branch
        %217 = sbr.rel (%p214) target = $region12
      $region11: #{ms_gradient_loss.6} parent=5 // pred_region
        %s218 = ssub.s32 %s16, 1
        // Predicated region
        $region13: #{ms_gradient_loss.6} parent=11 // pred_check
          %p219 = pneg %p89
        $region14: #{ms_gradient_loss.6} parent=11 // pred_check_branch
          %221 = sbr.rel (%p219) target = $region16
        $region15: #{ms_gradient_loss.6} parent=11 // pred_region
          _
        $region16: #{ms_gradient_loss.6} parent=11 // pred_fallthru
          _
        // Predicated region
        $region17: #{ms_gradient_loss.6} parent=11 // pred_check
          %p222 = pneg %p110
        $region18: #{ms_gradient_loss.6} parent=11 // pred_check_branch
          %224 = sbr.rel (%p222) target = $region20
        $region19: #{ms_gradient_loss.6} parent=11 // pred_region
          _
        $region20: #{ms_gradient_loss.6} parent=11 // pred_fallthru
          _
      $region12: #{ms_gradient_loss.6} parent=5 // pred_fallthru
        _
      %p225 = scmp.lt.s32.totalorder %s16, 2
      // Predicated region
      $region21: #{ms_gradient_loss.6} parent=5 // pred_check
        %p226 = pneg %p225
      $region22: #{ms_gradient_loss.6} parent=5 // pred_check_branch
        %228 = sbr.rel (%p226) target = $region24
      $region23: #{ms_gradient_loss.6} parent=5 // pred_region
        // Predicated region
        $region25: #{ms_gradient_loss.6} parent=23 // pred_check
          %p229 = pneg %p36
        $region26: #{ms_gradient_loss.6} parent=23 // pred_check_branch
          %231 = sbr.rel (%p229) target = $region28
        $region27: #{ms_gradient_loss.6} parent=23 // pred_region
          %p232 = scmp.lt.s32.totalorder %s16, 1
          %s233 = scalar_select %p232, %s16, 1
          %s234 = smul.addr %s233, 4
          %s235 = scalar_lea.vmem %s0, %s234
        $region28: #{ms_gradient_loss.6} parent=23 // pred_fallthru
          _
        // Predicated region
        $region29: #{ms_gradient_loss.6} parent=23 // pred_check
          %p236 = pneg %p62
        $region30: #{ms_gradient_loss.6} parent=23 // pred_check_branch
          %238 = sbr.rel (%p236) target = $region32
        $region31: #{ms_gradient_loss.6} parent=23 // pred_region
          %p239 = scmp.lt.s32.totalorder %s16, 1
          %s240 = scalar_select %p239, %s16, 1
          %s241 = smul.addr %s240, 4
          %s242 = scalar_lea.vmem %s1, %s241
        $region32: #{ms_gradient_loss.6} parent=23 // pred_fallthru
          _
      $region24: #{ms_gradient_loss.6} parent=5 // pred_fallthru
        _
      %p243 = scmp.le.s32.totalorder 1, %s16
      %p244 = scmp.lt.s32.totalorder %s16, 3
      %p245 = pnand %p243, %p244
      %p246 = pneg %p245
      // Predicated region
      $region33: #{ms_gradient_loss.6} parent=5 // pred_check
        _
      $region34: #{ms_gradient_loss.6} parent=5 // pred_check_branch
        %248 = sbr.rel (%p245) target = $region36
      $region35: #{ms_gradient_loss.6} parent=5 // pred_region
        %s249 = ssub.s32 %s16, 1
        %p250 = scmp.lt.s32.totalorder %s21, 1
        %s251 = scalar_select %p250, %s21, 1
        %s252 = smul.addr %s251, 4
        %s253 = scalar_lea.vmem %s0, %s252
        %p254 = pneg %p42
        %p255 = pneg %p39
        %p256 = scmp.lt.s32.totalorder %s21, 1
        %s257 = scalar_select %p256, %s21, 1
        %s258 = smul.addr %s257, 4
        %s259 = scalar_lea.vmem %s1, %s258
        %p260 = pneg %p68
        %p261 = pneg %p65
        %p262 = pneg %p89
        %p263 = pneg %p86
        %p264 = pneg %p110
        %p265 = pneg %p107
        %p266 = pneg %p131
        %p267 = pneg %p128
        %p268 = pneg %p152
        %p269 = pneg %p149
        %p270 = pneg %p178
        %p271 = pneg %p175
        %p272 = scmp.lt.s32.totalorder %s21, 1
        %s273 = scalar_select %p272, %s21, 1
        %s274 = smul.addr %s273, 2
        %s275 = scalar_lea.vmem %s6, %s274
        %p276 = pneg %p204
        %p277 = pneg %p201
        %p278 = scmp.lt.s32.totalorder %s21, 1
        %s279 = scalar_select %p278, %s21, 1
        %s280 = smul.addr %s279, 2
        %s281 = scalar_lea.vmem %s7, %s280
        %p282 = scmp.lt.s32.totalorder %s21, 1
        %s283 = scalar_select %p282, %s21, 1
        %s284 = smul.addr %s283, 4
        %s285 = scalar_lea.vmem %s0, %s284
        %p286 = scmp.lt.s32.totalorder %s21, 1
        %s287 = scalar_select %p286, %s21, 1
        %s288 = smul.addr %s287, 4
        %s289 = scalar_lea.vmem %s1, %s288
        %p290 = scmp.lt.s32.totalorder %s21, 1
        %s291 = scalar_select %p290, %s21, 1
        %s292 = smul.addr %s291, 2
        %s293 = scalar_lea.vmem %s6, %s292
        %p294 = scmp.lt.s32.totalorder %s21, 1
        %s295 = scalar_select %p294, %s21, 1
        %s296 = smul.addr %s295, 2
        %s297 = scalar_lea.vmem %s7, %s296
        %p298 = scmp.eq.s32.totalorder %s21, 0
        // Predicated region
        $region37: #{ms_gradient_loss.6} parent=35 // pred_check
          %p299 = pneg %p298
        $region38: #{ms_gradient_loss.6} parent=35 // pred_check_branch
          %301 = sbr.rel (%p299) target = $region40
        $region39: #{ms_gradient_loss.6} parent=35 // pred_region
          %s302 = scalar_lea.smem [#allocation2], 0
          %303 = sst [smem:[%s302]] 0.0
          %s304 = scalar_lea.smem [#allocation2], 1
          %305 = sst [smem:[%s304]] 0.0
        $region40: #{ms_gradient_loss.6} parent=35 // pred_fallthru
          _
        %v306 = vld [vmem:[%s285] sm:$0xf]
        %v307 = vld [vmem:[%s289] sm:$0xf]
        %309 = vrot.lane.b32.xlu0 %v306, 127
        %v310 = vpop.permute.xlu0 %309
        %vm312 = vcmask 23552
        %v313 = vsel %vm312, %v310, %v306
        %314 = vrot.lane.b32.xlu0 %v306, 1
        %v315 = vpop.permute.xlu0 %314
        %vm317 = vcmask 7168
        %v318 = vsel %vm317, %v306, %v315
        %v319 = vsub.f32 %v313, %v318
        %v321 = vrot.slane %v319, 7
        %vm323 = vcmask 1040384
        %v324 = vsel %vm323, %v319, %v321
        %v325 = vmul.f32 %v319, 2.0
        %v326 = vadd.f32 %v324, %v325
        %v327 = vrot.slane %v319, 1
        %vm329 = vcmask 1042432
        %v330 = vsel %vm329, %v327, %v319
        %v331 = vadd.f32 %v326, %v330
        %v332 = vmul.f32 %v331, 0.125
        %v333 = vrot.slane %v306, 1
        %v335 = vsel %vm329, %v333, %v306
        %v336 = vrot.slane %v306, 7
        %v338 = vsel %vm323, %v306, %v336
        %v339 = vsub.f32 %v335, %v338
        %341 = vrot.lane.b32.xlu0 %v339, 1
        %v342 = vpop.permute.xlu0 %341
        %v344 = vsel %vm317, %v339, %v342
        %v345 = vmul.f32 %v339, 2.0
        %v346 = vadd.f32 %v344, %v345
        %347 = vrot.lane.b32.xlu0 %v339, 127
        %v348 = vpop.permute.xlu0 %347
        %v350 = vsel %vm312, %v348, %v339
        %v351 = vadd.f32 %v346, %v350
        %v352 = vmul.f32 %v351, 0.125
        %v353 = vsub.f32 %v307, %v306
        %355 = vrot.lane.b32.xlu0 %v353, 127
        %v356 = vpop.permute.xlu0 %355
        %v358 = vsel %vm312, %v356, %v353
        %359 = vrot.lane.b32.xlu0 %v353, 1
        %v360 = vpop.permute.xlu0 %359
        %v362 = vsel %vm317, %v353, %v360
        %v363 = vsub.f32 %v358, %v362
        %v365 = vrot.slane %v363, 7
        %v367 = vsel %vm323, %v363, %v365
        %v368 = vmul.f32 %v363, 2.0
        %v369 = vadd.f32 %v367, %v368
        %v370 = vrot.slane %v363, 1
        %v372 = vsel %vm329, %v370, %v363
        %v373 = vadd.f32 %v369, %v372
        %v374 = vmul.f32 %v373, 0.125
        %v375 = vrot.slane %v353, 1
        %v377 = vsel %vm329, %v375, %v353
        %v378 = vrot.slane %v353, 7
        %v380 = vsel %vm323, %v353, %v378
        %v381 = vsub.f32 %v377, %v380
        %383 = vrot.lane.b32.xlu0 %v381, 1
        %v384 = vpop.permute.xlu0 %383
        %v386 = vsel %vm317, %v381, %v384
        %v387 = vmul.f32 %v381, 2.0
        %v388 = vadd.f32 %v386, %v387
        %389 = vrot.lane.b32.xlu0 %v381, 127
        %v390 = vpop.permute.xlu0 %389
        %v392 = vsel %vm312, %v390, %v381
        %v393 = vadd.f32 %v388, %v392
        %v394 = vmul.f32 %v393, 0.125
        %v395 = vand.u32 2147483647, %v332
        %vm396 = vcmp.lt.f32.partialorder %v395, inf
        %v397 = vand.u32 2147483647, %v352
        %vm398 = vcmp.lt.f32.partialorder %v397, inf
        %v399 = vand.u32 2147483647, %v374
        %v400 = vsel %vm396, %v399, 0.0
        %v401 = vand.u32 2147483647, %v394
        %v402 = vsel %vm398, %v401, 0.0
        %v403 = vadd.f32 %v400, %v402
        %v404 = vsel %vm396, 1, 0
        %v405 = vcvt.s32.f32 %v404
        %v406 = vsel %vm398, 1, 0
        %v407 = vcvt.s32.f32 %v406
        %v408 = vadd.f32 %v405, %v407
        %vm409 = vcmask 27648
        %v410 = vsel %vm409, %v403, 0.0
        %411 = vadd.xlane.f32.xlu0 %v410
        %v412 = vpop.xlane.xlu0 %411
        %v413 = vrot.slane %v412, 4
        %v414 = vadd.f32 %v412, %v413
        %v415 = vrot.slane %v414, 2
        %v416 = vadd.f32 %v414, %v415
        %v417 = vrot.slane %v416, 1
        %v418 = vadd.f32 %v416, %v417
        %s419 = vtos %v418
        %v420 = vsel %vm409, %v408, 0.0
        %421 = vadd.xlane.f32.xlu0 %v420
        %v422 = vpop.xlane.xlu0 %421
        %v423 = vrot.slane %v422, 4
        %v424 = vadd.f32 %v422, %v423
        %v425 = vrot.slane %v424, 2
        %v426 = vadd.f32 %v424, %v425
        %v427 = vrot.slane %v426, 1
        %v428 = vadd.f32 %v426, %v427
        %s429 = vtos %v428
        %s430 = sld [smem:[#allocation2]]
        %s431 = sadd.f32 %s430, %s419
        %s432 = scalar_lea.smem [#allocation2], 0
        %433 = sst [smem:[%s432]] %s431
        %s434 = sld [smem:[#allocation2 + $0x1]]
        %s435 = sadd.f32 %s434, %s429
        %s436 = scalar_lea.smem [#allocation2], 1
        %437 = sst [smem:[%s436]] %s435
        %v438 = vld [vmem:[%s2] sm:$0x3]
        %v439 = vld [vmem:[%s3] sm:$0xf]
        %vm440 = vcmask 31744
        %v441 = vsel %vm440, %v306, 0
        %vm443 = vcmask 1043456
        %v445 = vsel %vm443, %v439, 0
        %447 = vmatprep.subr.mxu0 0.0
        %448 = vmatpush1.msra.mxu0 %v445
        %449 = vmatprep.subr.mxu0 0.0
        %450 = vmatpush1.msra.mxu0 0.0
        %451 = vmatprep.subr.mxu0 0.0
        %452 = vmatpush1.msra.mxu0 0.0
        %453 = vmatprep.subr.mxu0 0.0
        %454 = vmatpush1.msra.mxu0 0.0
        %455 = vmatprep.subr.mxu0 0.0
        %456 = vmatpush1.msra.mxu0 0.0
        %457 = vmatprep.subr.mxu0 0.0
        %458 = vmatpush1.msra.mxu0 0.0
        %459 = vmatprep.subr.mxu0 0.0
        %460 = vmatpush1.msra.mxu0 0.0
        %461 = vmatprep.subr.mxu0 0.0
        %462 = vmatpush1.msra.mxu0 0.0
        %463 = vmatprep.subr.mxu0 0.0
        %464 = vmatpush1.msra.mxu0 0.0
        %465 = vmatprep.subr.mxu0 0.0
        %466 = vmatpush1.msra.mxu0 0.0
        %467 = vmatprep.subr.mxu0 0.0
        %468 = vmatpush1.msra.mxu0 0.0
        %469 = vmatprep.subr.mxu0 0.0
        %470 = vmatpush1.msra.mxu0 0.0
        %471 = vmatprep.subr.mxu0 0.0
        %472 = vmatpush1.msra.mxu0 0.0
        %473 = vmatprep.subr.mxu0 0.0
        %474 = vmatpush1.msra.mxu0 0.0
        %475 = vmatprep.subr.mxu0 0.0
        %476 = vmatpush1.msra.mxu0 0.0
        %477 = vmatprep.subr.mxu0 0.0
        %478 = vmatpush1.msra.mxu0 0.0
        %479 = vmatprep.subr.mxu0 0.0
        %480 = vmatpush1.msra.mxu0 0.0
        %481 = vmatprep.subr.mxu0 0.0
        %482 = vmatpush1.msra.mxu0 0.0
        %483 = vmatprep.subr.mxu0 0.0
        %484 = vmatpush1.msra.mxu0 0.0
        %485 = vmatprep.subr.mxu0 0.0
        %486 = vmatpush1.msra.mxu0 0.0
        %487 = vmatprep.subr.mxu0 0.0
        %488 = vmatpush1.msra.mxu0 0.0
        %489 = vmatprep.subr.mxu0 0.0
        %490 = vmatpush1.msra.mxu0 0.0
        %491 = vmatprep.subr.mxu0 0.0
        %492 = vmatpush1.msra.mxu0 0.0
        %493 = vmatprep.subr.mxu0 0.0
        %494 = vmatpush1.msra.mxu0 0.0
        %495 = vmatprep.subr.mxu0 0.0
        %496 = vmatpush1.msra.mxu0 0.0
        %497 = vmatprep.subr.mxu0 0.0
        %498 = vmatpush1.msra.mxu0 0.0
        %499 = vmatprep.subr.mxu0 0.0
        %500 = vmatpush1.msra.mxu0 0.0
        %501 = vmatprep.subr.mxu0 0.0
        %502 = vmatpush1.msra.mxu0 0.0
        %503 = vmatprep.subr.mxu0 0.0
        %504 = vmatpush1.msra.mxu0 0.0
        %505 = vmatprep.subr.mxu0 0.0
        %506 = vmatpush1.msra.mxu0 0.0
        %507 = vmatprep.subr.mxu0 0.0
        %508 = vmatpush1.msra.mxu0 0.0
        %509 = vmatprep.subr.mxu0 0.0
        %510 = vmatpush1.msra.mxu0 0.0
        %511 = vmatprep.mubr.f32.mxu0 0.0
        %512 = vmatmul.mubr.f32.gmra.mrb[0].mxu0 %v441
        %v513 = vpop.f32.mrb[0].mxu0
        %v514 = vadd.f32 0.0, %v513
        %v515 = vpop.f32.mrb[0].mxu0
        %516 = vdwg.mxu0
        %v518 = vsel %vm440, %v438, 0
        %v521 = vsel %vm443, %v514, 0
        %523 = vmatprep.subr.mxu0 0.0
        %524 = vmatpush1.msra.mxu0 %v521
        %525 = vmatprep.subr.mxu0 0.0
        %526 = vmatpush1.msra.mxu0 0.0
        %527 = vmatprep.subr.mxu0 0.0
        %528 = vmatpush1.msra.mxu0 0.0
        %529 = vmatprep.subr.mxu0 0.0
        %530 = vmatpush1.msra.mxu0 0.0
        %531 = vmatprep.subr.mxu0 0.0
        %532 = vmatpush1.msra.mxu0 0.0
        %533 = vmatprep.subr.mxu0 0.0
        %534 = vmatpush1.msra.mxu0 0.0
        %535 = vmatprep.subr.mxu0 0.0
        %536 = vmatpush1.msra.mxu0 0.0
        %537 = vmatprep.subr.mxu0 0.0
        %538 = vmatpush1.msra.mxu0 0.0
        %539 = vmatprep.subr.mxu0 0.0
        %540 = vmatpush1.msra.mxu0 0.0
        %541 = vmatprep.subr.mxu0 0.0
        %542 = vmatpush1.msra.mxu0 0.0
        %543 = vmatprep.subr.mxu0 0.0
        %544 = vmatpush1.msra.mxu0 0.0
        %545 = vmatprep.subr.mxu0 0.0
        %546 = vmatpush1.msra.mxu0 0.0
        %547 = vmatprep.subr.mxu0 0.0
        %548 = vmatpush1.msra.mxu0 0.0
        %549 = vmatprep.subr.mxu0 0.0
        %550 = vmatpush1.msra.mxu0 0.0
        %551 = vmatprep.subr.mxu0 0.0
        %552 = vmatpush1.msra.mxu0 0.0
        %553 = vmatprep.subr.mxu0 0.0
        %554 = vmatpush1.msra.mxu0 0.0
        %555 = vmatprep.subr.mxu0 0.0
        %556 = vmatpush1.msra.mxu0 0.0
        %557 = vmatprep.subr.mxu0 0.0
        %558 = vmatpush1.msra.mxu0 0.0
        %559 = vmatprep.subr.mxu0 0.0
        %560 = vmatpush1.msra.mxu0 0.0
        %561 = vmatprep.subr.mxu0 0.0
        %562 = vmatpush1.msra.mxu0 0.0
        %563 = vmatprep.subr.mxu0 0.0
        %564 = vmatpush1.msra.mxu0 0.0
        %565 = vmatprep.subr.mxu0 0.0
        %566 = vmatpush1.msra.mxu0 0.0
        %567 = vmatprep.subr.mxu0 0.0
        %568 = vmatpush1.msra.mxu0 0.0
        %569 = vmatprep.subr.mxu0 0.0
        %570 = vmatpush1.msra.mxu0 0.0
        %571 = vmatprep.subr.mxu0 0.0
        %572 = vmatpush1.msra.mxu0 0.0
        %573 = vmatprep.subr.mxu0 0.0
        %574 = vmatpush1.msra.mxu0 0.0
        %575 = vmatprep.subr.mxu0 0.0
        %576 = vmatpush1.msra.mxu0 0.0
        %577 = vmatprep.subr.mxu0 0.0
        %578 = vmatpush1.msra.mxu0 0.0
        %579 = vmatprep.subr.mxu0 0.0
        %580 = vmatpush1.msra.mxu0 0.0
        %581 = vmatprep.subr.mxu0 0.0
        %582 = vmatpush1.msra.mxu0 0.0
        %583 = vmatprep.subr.mxu0 0.0
        %584 = vmatpush1.msra.mxu0 0.0
        %585 = vmatprep.subr.mxu0 0.0
        %586 = vmatpush1.msra.mxu0 0.0
        %587 = vmatprep.mubr.f32.mxu0 0.0
        %588 = vmatmul.mubr.f32.gmra.mrb[0].mxu0 %v518
        %v589 = vpop.f32.mrb[0].mxu0
        %v590 = vadd.f32 0.0, %v589
        %v591 = vpop.f32.mrb[0].mxu0
        %592 = vdwg.mxu0
        %vm593 = vcmask 9216
        %594 = vst.msk [vmem:[%s293] sm:$0x3] %vm593, %v590
        %v595 = vld [vmem:[%s2] sm:$0x3]
        %v596 = vld [vmem:[%s3] sm:$0xf]
        %v598 = vsel %vm440, %v307, 0
        %v601 = vsel %vm443, %v596, 0
        %603 = vmatprep.subr.mxu0 0.0
        %604 = vmatpush1.msra.mxu0 %v601
        %605 = vmatprep.subr.mxu0 0.0
        %606 = vmatpush1.msra.mxu0 0.0
        %607 = vmatprep.subr.mxu0 0.0
        %608 = vmatpush1.msra.mxu0 0.0
        %609 = vmatprep.subr.mxu0 0.0
        %610 = vmatpush1.msra.mxu0 0.0
        %611 = vmatprep.subr.mxu0 0.0
        %612 = vmatpush1.msra.mxu0 0.0
        %613 = vmatprep.subr.mxu0 0.0
        %614 = vmatpush1.msra.mxu0 0.0
        %615 = vmatprep.subr.mxu0 0.0
        %616 = vmatpush1.msra.mxu0 0.0
        %617 = vmatprep.subr.mxu0 0.0
        %618 = vmatpush1.msra.mxu0 0.0
        %619 = vmatprep.subr.mxu0 0.0
        %620 = vmatpush1.msra.mxu0 0.0
        %621 = vmatprep.subr.mxu0 0.0
        %622 = vmatpush1.msra.mxu0 0.0
        %623 = vmatprep.subr.mxu0 0.0
        %624 = vmatpush1.msra.mxu0 0.0
        %625 = vmatprep.subr.mxu0 0.0
        %626 = vmatpush1.msra.mxu0 0.0
        %627 = vmatprep.subr.mxu0 0.0
        %628 = vmatpush1.msra.mxu0 0.0
        %629 = vmatprep.subr.mxu0 0.0
        %630 = vmatpush1.msra.mxu0 0.0
        %631 = vmatprep.subr.mxu0 0.0
        %632 = vmatpush1.msra.mxu0 0.0
        %633 = vmatprep.subr.mxu0 0.0
        %634 = vmatpush1.msra.mxu0 0.0
        %635 = vmatprep.subr.mxu0 0.0
        %636 = vmatpush1.msra.mxu0 0.0
        %637 = vmatprep.subr.mxu0 0.0
        %638 = vmatpush1.msra.mxu0 0.0
        %639 = vmatprep.subr.mxu0 0.0
        %640 = vmatpush1.msra.mxu0 0.0
        %641 = vmatprep.subr.mxu0 0.0
        %642 = vmatpush1.msra.mxu0 0.0
        %643 = vmatprep.subr.mxu0 0.0
        %644 = vmatpush1.msra.mxu0 0.0
        %645 = vmatprep.subr.mxu0 0.0
        %646 = vmatpush1.msra.mxu0 0.0
        %647 = vmatprep.subr.mxu0 0.0
        %648 = vmatpush1.msra.mxu0 0.0
        %649 = vmatprep.subr.mxu0 0.0
        %650 = vmatpush1.msra.mxu0 0.0
        %651 = vmatprep.subr.mxu0 0.0
        %652 = vmatpush1.msra.mxu0 0.0
        %653 = vmatprep.subr.mxu0 0.0
        %654 = vmatpush1.msra.mxu0 0.0
        %655 = vmatprep.subr.mxu0 0.0
        %656 = vmatpush1.msra.mxu0 0.0
        %657 = vmatprep.subr.mxu0 0.0
        %658 = vmatpush1.msra.mxu0 0.0
        %659 = vmatprep.subr.mxu0 0.0
        %660 = vmatpush1.msra.mxu0 0.0
        %661 = vmatprep.subr.mxu0 0.0
        %662 = vmatpush1.msra.mxu0 0.0
        %663 = vmatprep.subr.mxu0 0.0
        %664 = vmatpush1.msra.mxu0 0.0
        %665 = vmatprep.subr.mxu0 0.0
        %666 = vmatpush1.msra.mxu0 0.0
        %667 = vmatprep.mubr.f32.mxu0 0.0
        %668 = vmatmul.mubr.f32.gmra.mrb[0].mxu0 %v598
        %v669 = vpop.f32.mrb[0].mxu0
        %v670 = vadd.f32 0.0, %v669
        %v671 = vpop.f32.mrb[0].mxu0
        %672 = vdwg.mxu0
        %v674 = vsel %vm440, %v595, 0
        %v677 = vsel %vm443, %v670, 0
        %679 = vmatprep.subr.mxu0 0.0
        %680 = vmatpush1.msra.mxu0 %v677
        %681 = vmatprep.subr.mxu0 0.0
        %682 = vmatpush1.msra.mxu0 0.0
        %683 = vmatprep.subr.mxu0 0.0
        %684 = vmatpush1.msra.mxu0 0.0
        %685 = vmatprep.subr.mxu0 0.0
        %686 = vmatpush1.msra.mxu0 0.0
        %687 = vmatprep.subr.mxu0 0.0
        %688 = vmatpush1.msra.mxu0 0.0
        %689 = vmatprep.subr.mxu0 0.0
        %690 = vmatpush1.msra.mxu0 0.0
        %691 = vmatprep.subr.mxu0 0.0
        %692 = vmatpush1.msra.mxu0 0.0
        %693 = vmatprep.subr.mxu0 0.0
        %694 = vmatpush1.msra.mxu0 0.0
        %695 = vmatprep.subr.mxu0 0.0
        %696 = vmatpush1.msra.mxu0 0.0
        %697 = vmatprep.subr.mxu0 0.0
        %698 = vmatpush1.msra.mxu0 0.0
        %699 = vmatprep.subr.mxu0 0.0
        %700 = vmatpush1.msra.mxu0 0.0
        %701 = vmatprep.subr.mxu0 0.0
        %702 = vmatpush1.msra.mxu0 0.0
        %703 = vmatprep.subr.mxu0 0.0
        %704 = vmatpush1.msra.mxu0 0.0
        %705 = vmatprep.subr.mxu0 0.0
        %706 = vmatpush1.msra.mxu0 0.0
        %707 = vmatprep.subr.mxu0 0.0
        %708 = vmatpush1.msra.mxu0 0.0
        %709 = vmatprep.subr.mxu0 0.0
        %710 = vmatpush1.msra.mxu0 0.0
        %711 = vmatprep.subr.mxu0 0.0
        %712 = vmatpush1.msra.mxu0 0.0
        %713 = vmatprep.subr.mxu0 0.0
        %714 = vmatpush1.msra.mxu0 0.0
        %715 = vmatprep.subr.mxu0 0.0
        %716 = vmatpush1.msra.mxu0 0.0
        %717 = vmatprep.subr.mxu0 0.0
        %718 = vmatpush1.msra.mxu0 0.0
        %719 = vmatprep.subr.mxu0 0.0
        %720 = vmatpush1.msra.mxu0 0.0
        %721 = vmatprep.subr.mxu0 0.0
        %722 = vmatpush1.msra.mxu0 0.0
        %723 = vmatprep.subr.mxu0 0.0
        %724 = vmatpush1.msra.mxu0 0.0
        %725 = vmatprep.subr.mxu0 0.0
        %726 = vmatpush1.msra.mxu0 0.0
        %727 = vmatprep.subr.mxu0 0.0
        %728 = vmatpush1.msra.mxu0 0.0
        %729 = vmatprep.subr.mxu0 0.0
        %730 = vmatpush1.msra.mxu0 0.0
        %731 = vmatprep.subr.mxu0 0.0
        %732 = vmatpush1.msra.mxu0 0.0
        %733 = vmatprep.subr.mxu0 0.0
        %734 = vmatpush1.msra.mxu0 0.0
        %735 = vmatprep.subr.mxu0 0.0
        %736 = vmatpush1.msra.mxu0 0.0
        %737 = vmatprep.subr.mxu0 0.0
        %738 = vmatpush1.msra.mxu0 0.0
        %739 = vmatprep.subr.mxu0 0.0
        %740 = vmatpush1.msra.mxu0 0.0
        %741 = vmatprep.subr.mxu0 0.0
        %742 = vmatpush1.msra.mxu0 0.0
        %743 = vmatprep.mubr.f32.mxu0 0.0
        %744 = vmatmul.mubr.f32.gmra.mrb[0].mxu0 %v674
        %v745 = vpop.f32.mrb[0].mxu0
        %v746 = vadd.f32 0.0, %v745
        %v747 = vpop.f32.mrb[0].mxu0
        %748 = vdwg.mxu0
        %749 = vst.msk [vmem:[%s297] sm:$0x3] %vm593, %v746
        %p750 = scmp.eq.s32.totalorder %s21, 1
        // Predicated region
        $region41: #{ms_gradient_loss.6} parent=35 // pred_check
          %p751 = pneg %p750
        $region42: #{ms_gradient_loss.6} parent=35 // pred_check_branch
          %753 = sbr.rel (%p751) target = $region44
        $region43: #{ms_gradient_loss.6} parent=35 // pred_region
          %s754 = sld [smem:[#allocation2]]
          %s755 = scalar_lea.smem [#allocation3], 0
          %756 = sst [smem:[%s755]] %s754
          %s757 = sld [smem:[#allocation2 + $0x1]]
          %s758 = scalar_lea.smem [#allocation5], 0
          %759 = sst [smem:[%s758]] %s757
        $region44: #{ms_gradient_loss.6} parent=35 // pred_fallthru
          _
        %p760 = scmp.lt.s32.totalorder %s21, 1
        %s761 = scalar_select %p760, %s21, 1
        %s762 = smul.addr %s761, 2
        %s763 = scalar_lea.vmem %s6, %s762
        %p764 = scmp.lt.s32.totalorder %s21, 1
        %s765 = scalar_select %p764, %s21, 1
        %s766 = smul.addr %s765, 2
        %s767 = scalar_lea.vmem %s7, %s766
        // Predicated region
        $region45: #{ms_gradient_loss.6} parent=35 // pred_check
          %p768 = pneg %p128
        $region46: #{ms_gradient_loss.6} parent=35 // pred_check_branch
          %770 = sbr.rel (%p768) target = $region48
        $region47: #{ms_gradient_loss.6} parent=35 // pred_region
          %s772 = ssub.s32 16, 16
          %773 = vsyncadd [#allocation4], %s772
          %776 = dma.smem_to_hbm [#allocation3], 16, %s4, [#allocation4]
        $region48: #{ms_gradient_loss.6} parent=35 // pred_fallthru
          _
        // Predicated region
        $region49: #{ms_gradient_loss.6} parent=35 // pred_check
          %p777 = pneg %p149
        $region50: #{ms_gradient_loss.6} parent=35 // pred_check_branch
          %779 = sbr.rel (%p777) target = $region52
        $region51: #{ms_gradient_loss.6} parent=35 // pred_region
          %s781 = ssub.s32 16, 16
          %782 = vsyncadd [#allocation6], %s781
          %785 = dma.smem_to_hbm [#allocation5], 16, %s5, [#allocation6]
        $region52: #{ms_gradient_loss.6} parent=35 // pred_fallthru
          _
        // Predicated region
        $region53: #{ms_gradient_loss.6} parent=35 // pred_check
          %p786 = pneg %p175
        $region54: #{ms_gradient_loss.6} parent=35 // pred_check_branch
          %788 = sbr.rel (%p786) target = $region56
        $region55: #{ms_gradient_loss.6} parent=35 // pred_region
          _
        $region56: #{ms_gradient_loss.6} parent=35 // pred_fallthru
          _
        // Predicated region
        $region57: #{ms_gradient_loss.6} parent=35 // pred_check
          %p789 = pneg %p201
        $region58: #{ms_gradient_loss.6} parent=35 // pred_check_branch
          %791 = sbr.rel (%p789) target = $region60
        $region59: #{ms_gradient_loss.6} parent=35 // pred_region
          _
        $region60: #{ms_gradient_loss.6} parent=35 // pred_fallthru
          _
        // Predicated region
        $region61: #{ms_gradient_loss.6} parent=35 // pred_check
          %p792 = pneg %p128
        $region62: #{ms_gradient_loss.6} parent=35 // pred_check_branch
          %794 = sbr.rel (%p792) target = $region64
        $region63: #{ms_gradient_loss.6} parent=35 // pred_region
          %795 = dma.done [#allocation4], 16
        $region64: #{ms_gradient_loss.6} parent=35 // pred_fallthru
          _
        // Predicated region
        $region65: #{ms_gradient_loss.6} parent=35 // pred_check
          %p796 = pneg %p149
        $region66: #{ms_gradient_loss.6} parent=35 // pred_check_branch
          %798 = sbr.rel (%p796) target = $region68
        $region67: #{ms_gradient_loss.6} parent=35 // pred_region
          %799 = dma.done [#allocation6], 16
        $region68: #{ms_gradient_loss.6} parent=35 // pred_fallthru
          _
        %800 = sfence
      $region36: #{ms_gradient_loss.6} parent=5 // pred_fallthru
        _
      %p801 = scmp.le.s32.totalorder 2, %s16
      // Predicated region
      $region69: #{ms_gradient_loss.6} parent=5 // pred_check
        %p802 = pneg %p801
      $region70: #{ms_gradient_loss.6} parent=5 // pred_check_branch
        %804 = sbr.rel (%p802) target = $region72
      $region71: #{ms_gradient_loss.6} parent=5 // pred_region
        %s805 = ssub.s32 %s16, 2
        // Predicated region
        $region73: #{ms_gradient_loss.6} parent=71 // pred_check
          %p806 = pneg %p181
        $region74: #{ms_gradient_loss.6} parent=71 // pred_check_branch
          %808 = sbr.rel (%p806) target = $region76
        $region75: #{ms_gradient_loss.6} parent=71 // pred_region
          %p809 = scmp.lt.s32.totalorder %s22, 1
          %s810 = scalar_select %p809, %s22, 1
          %s811 = smul.addr %s810, 2
          %s812 = scalar_lea.vmem %s6, %s811
        $region76: #{ms_gradient_loss.6} parent=71 // pred_fallthru
          _
        // Predicated region
        $region77: #{ms_gradient_loss.6} parent=71 // pred_check
          %p813 = pneg %p207
        $region78: #{ms_gradient_loss.6} parent=71 // pred_check_branch
          %815 = sbr.rel (%p813) target = $region80
        $region79: #{ms_gradient_loss.6} parent=71 // pred_region
          %p816 = scmp.lt.s32.totalorder %s22, 1
          %s817 = scalar_select %p816, %s22, 1
          %s818 = smul.addr %s817, 2
          %s819 = scalar_lea.vmem %s7, %s818
        $region80: #{ms_gradient_loss.6} parent=71 // pred_fallthru
          _
      $region72: #{ms_gradient_loss.6} parent=5 // pred_fallthru
        _
    $region6: #{ms_gradient_loss.6} parent=1 // loop_footer
      %s20 = sadd.s32 1, %s16
    $region7: #{ms_gradient_loss.6} parent=1 // loop_footer_branch
      %15 = sbr.rel target = $region3
    $region8: #{ms_gradient_loss.6} parent=1 // loop_exit
      _
    %820 = vsyncpa [#allocation4], 1
    %s821 = scalar_lea.sflag [#allocation4], 1
    %822 = vsyncpa %s821, 1
    %823 = vsyncpa [#allocation6], 1

// kernel: ms_gradient_loss.4
$region0: #{ms_gradient_loss.4}
  #allocation0 [shape = 'u32[]', space=smem, size = 0x4, offset = 0x4, fixed_abs, tag = 'smem constant byte address 0x4 - core index']
  #allocation1 [shape = 'u32[144,128]{1,0:T(1,128)}', space=vmem, size = 0x12000, scoped, tag = 'internal scratch']
  #allocation2 [shape = 'f32[2]{0:T(128)}', space=smem, size = 0x200, scoped, tag = 'scratch operand']
  %s0 = inlined_call_operand.hbm [shape: f32[2,1,16,16], index: 0, kind: input, shape index: {}]
  %s1 = inlined_call_operand.hbm [shape: f32[2,1,16,16], index: 1, kind: input, shape index: {}]
  %s2 = inlined_call_operand.vmem [shape: f32[8,16], index: 2, kind: input, shape index: {}]
  %s3 = inlined_call_operand.vmem [shape: f32[16,8], index: 3, kind: input, shape index: {}]
  %s4 = inlined_call_operand.hbm [shape: f32[1], index: 4, kind: output, shape index: {0}]
  %s5 = inlined_call_operand.hbm [shape: f32[1], index: 5, kind: output, shape index: {1}]
  %s6 = inlined_call_operand.vmem [shape: f32[2,1,8,8], index: 6, kind: output, shape index: {2}]
  %s7 = inlined_call_operand.vmem [shape: f32[2,1,8,8], index: 7, kind: output, shape index: {3}]
  %8 = xla_tuple %s4, %s5, %s6, %s7
  %s9 = sld [smem:[#allocation0]]
  $region89: #{ms_gradient_loss.4} parent=0
    _
  %s11 = ssub.s32 1, %s9
  %s12 = scalar_select 0, %s11, %s9
  $region1: #{ms_gradient_loss.4} parent=0
    #allocation3 [shape = 'u8[16384]{0}', space=vmem, size = 0x4000, scoped, tag = 'input window, operand 0']
    #allocation4 [shape = 's32[2]{0}', space=sflag, size = 0x8, scoped, tag = 'scoped memory for ms_gradient_loss.4']
    #allocation5 [shape = 's32[2]{0}', space=sflag, size = 0x8, scoped, tag = 'scoped memory for ms_gradient_loss.4']
    #allocation6 [shape = 'u8[16384]{0}', space=vmem, size = 0x4000, scoped, tag = 'input window, operand 1']
    #allocation7 [shape = 's32[2]{0}', space=sflag, size = 0x8, scoped, tag = 'scoped memory for ms_gradient_loss.4']
    #allocation8 [shape = 'u8[512]{0}', space=smem, size = 0x200, scoped, tag = 'output window, operand 0, single buffered']
    #allocation9 [shape = 'u8[512]{0}', space=smem, size = 0x200, scoped, tag = 'output window, operand 1, single buffered']
    #allocation10 [shape = 's32[1]{0}', space=sflag, size = 0x4, scoped, tag = 'scoped memory for ms_gradient_loss.4']
    %13 = vsyncpa [#allocation4], 0
    %s14 = scalar_lea.sflag [#allocation4], 1
    %15 = vsyncpa %s14, 0
    %16 = vsyncpa [#allocation7], 0
    %s17 = scalar_lea.sflag [#allocation7], 1
    %18 = vsyncpa %s17, 0
    %19 = vsyncpa [#allocation5], 0
    %20 = vsyncpa [#allocation10], 0
    loop: start=0, step=1, limit=4
    $region2: #{ms_gradient_loss.4} parent=1 // loop_pre_header
      _
    $region3: #{ms_gradient_loss.4} parent=1 // loop_header
      %s22 = sphi 0, %s26
      %p23 = scmp.ge.s32.totalorder %s22, 4
      %s32 = sphi 0, %s34
      %s35 = sphi 0, %s32
      %s36 = sphi 0, %s35
      %s52 = sphi 0, %s36
      %s58 = sphi 0, %s60
      %s61 = sphi 0, %s58
      %s62 = sphi 0, %s61
      %s78 = sphi 0, %s62
      %s82 = sphi 0, %s82
      %s84 = sphi 0, %s82
      %s85 = sphi 0, %s84
      %s99 = sphi 0, %s85
      %s103 = sphi 0, %s103
      %s105 = sphi 0, %s103
      %s106 = sphi 0, %s105
      %s120 = sphi 0, %s106
      %s124 = sphi 0, %s124
      %s126 = sphi 0, %s124
      %s127 = sphi 0, %s126
      %s141 = sphi 0, %s127
      %s145 = sphi 0, %s145
      %s147 = sphi 0, %s145
      %s148 = sphi 0, %s147
      %s162 = sphi 0, %s148
      %s168 = sphi 0, %s170
      %s171 = sphi 0, %s168
      %s172 = sphi 0, %s171
      %s188 = sphi 0, %s172
      %s194 = sphi 0, %s196
      %s197 = sphi 0, %s194
      %s198 = sphi 0, %s197
      %s214 = sphi 0, %s198
    $region4: #{ms_gradient_loss.4} parent=1 // loop_header_branch
      %25 = sbr.rel (%p23) target = $region8
    $region5: #{ms_gradient_loss.4} parent=1 // loop_body
      %s27 = ssub.s32 %s22, 1
      %s28 = ssub.s32 %s22, 2
      %s29 = sadd.s32 %s22, 1
      %s30 = ssub.s32 %s22, %s29
      %p31 = scmp.eq.s32.totalorder %s30, 0
      %s33 = sadd.s32 %s32, 1
      %s34 = scalar_select %p31, %s32, %s33
      %p37 = pneg %p31
      %p38 = scmp.eq.s32.totalorder %s22, 1
      %p39 = por %p37, %p38
      %p40 = scmp.ne.s32.totalorder %s32, %s35
      %p41 = scmp.eq.s32.totalorder %s22, 0
      %p42 = por %p40, %p41
      %p43 = scmp.ne.s32.totalorder %s32, %s35
      %p44 = scmp.eq.s32.totalorder %s27, 1
      %p45 = por %p43, %p44
      %p46 = scmp.ne.s32.totalorder %s35, %s36
      %p47 = scmp.eq.s32.totalorder %s27, 0
      %p48 = por %p46, %p47
      %p49 = scmp.ne.s32.totalorder %s35, %s36
      %p50 = scmp.eq.s32.totalorder %s28, 1
      %p51 = por %p49, %p50
      %p53 = scmp.ne.s32.totalorder %s36, %s52
      %p54 = scmp.eq.s32.totalorder %s28, 0
      %p55 = por %p53, %p54
      %s56 = ssub.s32 %s22, %s29
      %p57 = scmp.eq.s32.totalorder %s56, 0
      %s59 = sadd.s32 %s58, 1
      %s60 = scalar_select %p57, %s58, %s59
      %p63 = pneg %p57
      %p64 = scmp.eq.s32.totalorder %s22, 1
      %p65 = por %p63, %p64
      %p66 = scmp.ne.s32.totalorder %s58, %s61
      %p67 = scmp.eq.s32.totalorder %s22, 0
      %p68 = por %p66, %p67
      %p69 = scmp.ne.s32.totalorder %s58, %s61
      %p70 = scmp.eq.s32.totalorder %s27, 1
      %p71 = por %p69, %p70
      %p72 = scmp.ne.s32.totalorder %s61, %s62
      %p73 = scmp.eq.s32.totalorder %s27, 0
      %p74 = por %p72, %p73
      %p75 = scmp.ne.s32.totalorder %s61, %s62
      %p76 = scmp.eq.s32.totalorder %s28, 1
      %p77 = por %p75, %p76
      %p79 = scmp.ne.s32.totalorder %s62, %s78
      %p80 = scmp.eq.s32.totalorder %s28, 0
      %p81 = por %p79, %p80
      %s83 = sadd.s32 %s82, 1
      %p86 = scmp.eq.s32.totalorder %s22, 1
      %p87 = scmp.ne.s32.totalorder %s82, %s84
      %p88 = scmp.eq.s32.totalorder %s22, 0
      %p89 = por %p87, %p88
      %p90 = scmp.ne.s32.totalorder %s82, %s84
      %p91 = scmp.eq.s32.totalorder %s27, 1
      %p92 = por %p90, %p91
      %p93 = scmp.ne.s32.totalorder %s84, %s85
      %p94 = scmp.eq.s32.totalorder %s27, 0
      %p95 = por %p93, %p94
      %p96 = scmp.ne.s32.totalorder %s84, %s85
      %p97 = scmp.eq.s32.totalorder %s28, 1
      %p98 = por %p96, %p97
      %p100 = scmp.ne.s32.totalorder %s85, %s99
      %p101 = scmp.eq.s32.totalorder %s28, 0
      %p102 = por %p100, %p101
      %s104 = sadd.s32 %s103, 1
      %p107 = scmp.eq.s32.totalorder %s22, 1
      %p108 = scmp.ne.s32.totalorder %s103, %s105
      %p109 = scmp.eq.s32.totalorder %s22, 0
      %p110 = por %p108, %p109
      %p111 = scmp.ne.s32.totalorder %s103, %s105
      %p112 = scmp.eq.s32.totalorder %s27, 1
      %p113 = por %p111, %p112
      %p114 = scmp.ne.s32.totalorder %s105, %s106
      %p115 = scmp.eq.s32.totalorder %s27, 0
      %p116 = por %p114, %p115
      %p117 = scmp.ne.s32.totalorder %s105, %s106
      %p118 = scmp.eq.s32.totalorder %s28, 1
      %p119 = por %p117, %p118
      %p121 = scmp.ne.s32.totalorder %s106, %s120
      %p122 = scmp.eq.s32.totalorder %s28, 0
      %p123 = por %p121, %p122
      %s125 = sadd.s32 %s124, 1
      %p128 = scmp.eq.s32.totalorder %s22, 1
      %p129 = scmp.ne.s32.totalorder %s124, %s126
      %p130 = scmp.eq.s32.totalorder %s22, 0
      %p131 = por %p129, %p130
      %p132 = scmp.ne.s32.totalorder %s124, %s126
      %p133 = scmp.eq.s32.totalorder %s27, 1
      %p134 = por %p132, %p133
      %p135 = scmp.ne.s32.totalorder %s126, %s127
      %p136 = scmp.eq.s32.totalorder %s27, 0
      %p137 = por %p135, %p136
      %p138 = scmp.ne.s32.totalorder %s126, %s127
      %p139 = scmp.eq.s32.totalorder %s28, 1
      %p140 = por %p138, %p139
      %p142 = scmp.ne.s32.totalorder %s127, %s141
      %p143 = scmp.eq.s32.totalorder %s28, 0
      %p144 = por %p142, %p143
      %s146 = sadd.s32 %s145, 1
      %p149 = scmp.eq.s32.totalorder %s22, 1
      %p150 = scmp.ne.s32.totalorder %s145, %s147
      %p151 = scmp.eq.s32.totalorder %s22, 0
      %p152 = por %p150, %p151
      %p153 = scmp.ne.s32.totalorder %s145, %s147
      %p154 = scmp.eq.s32.totalorder %s27, 1
      %p155 = por %p153, %p154
      %p156 = scmp.ne.s32.totalorder %s147, %s148
      %p157 = scmp.eq.s32.totalorder %s27, 0
      %p158 = por %p156, %p157
      %p159 = scmp.ne.s32.totalorder %s147, %s148
      %p160 = scmp.eq.s32.totalorder %s28, 1
      %p161 = por %p159, %p160
      %p163 = scmp.ne.s32.totalorder %s148, %s162
      %p164 = scmp.eq.s32.totalorder %s28, 0
      %p165 = por %p163, %p164
      %s166 = ssub.s32 %s22, %s29
      %p167 = scmp.eq.s32.totalorder %s166, 0
      %s169 = sadd.s32 %s168, 1
      %s170 = scalar_select %p167, %s168, %s169
      %p173 = pneg %p167
      %p174 = scmp.eq.s32.totalorder %s22, 1
      %p175 = por %p173, %p174
      %p176 = scmp.ne.s32.totalorder %s168, %s171
      %p177 = scmp.eq.s32.totalorder %s22, 0
      %p178 = por %p176, %p177
      %p179 = scmp.ne.s32.totalorder %s168, %s171
      %p180 = scmp.eq.s32.totalorder %s27, 1
      %p181 = por %p179, %p180
      %p182 = scmp.ne.s32.totalorder %s171, %s172
      %p183 = scmp.eq.s32.totalorder %s27, 0
      %p184 = por %p182, %p183
      %p185 = scmp.ne.s32.totalorder %s171, %s172
      %p186 = scmp.eq.s32.totalorder %s28, 1
      %p187 = por %p185, %p186
      %p189 = scmp.ne.s32.totalorder %s172, %s188
      %p190 = scmp.eq.s32.totalorder %s28, 0
      %p191 = por %p189, %p190
      %s192 = ssub.s32 %s22, %s29
      %p193 = scmp.eq.s32.totalorder %s192, 0
      %s195 = sadd.s32 %s194, 1
      %s196 = scalar_select %p193, %s194, %s195
      %p199 = pneg %p193
      %p200 = scmp.eq.s32.totalorder %s22, 1
      %p201 = por %p199, %p200
      %p202 = scmp.ne.s32.totalorder %s194, %s197
      %p203 = scmp.eq.s32.totalorder %s22, 0
      %p204 = por %p202, %p203
      %p205 = scmp.ne.s32.totalorder %s194, %s197
      %p206 = scmp.eq.s32.totalorder %s27, 1
      %p207 = por %p205, %p206
      %p208 = scmp.ne.s32.totalorder %s197, %s198
      %p209 = scmp.eq.s32.totalorder %s27, 0
      %p210 = por %p208, %p209
      %p211 = scmp.ne.s32.totalorder %s197, %s198
      %p212 = scmp.eq.s32.totalorder %s28, 1
      %p213 = por %p211, %p212
      %p215 = scmp.ne.s32.totalorder %s198, %s214
      %p216 = scmp.eq.s32.totalorder %s28, 0
      %p217 = por %p215, %p216
      %p218 = scmp.le.s32.totalorder 1, %s22
      %p219 = scmp.lt.s32.totalorder %s22, 3
      %p220 = pnand %p218, %p219
      %p221 = pneg %p220
      // Predicated region
      $region9: #{ms_gradient_loss.4} parent=5 // pred_check
        _
      $region10: #{ms_gradient_loss.4} parent=5 // pred_check_branch
        %223 = sbr.rel (%p220) target = $region12
      $region11: #{ms_gradient_loss.4} parent=5 // pred_region
        %s224 = ssub.s32 %s22, 1
        // Predicated region
        $region13: #{ms_gradient_loss.4} parent=11 // pred_check
          %p225 = pneg %p95
        $region14: #{ms_gradient_loss.4} parent=11 // pred_check_branch
          %227 = sbr.rel (%p225) target = $region16
        $region15: #{ms_gradient_loss.4} parent=11 // pred_region
          _
        $region16: #{ms_gradient_loss.4} parent=11 // pred_fallthru
          _
        // Predicated region
        $region17: #{ms_gradient_loss.4} parent=11 // pred_check
          %p228 = pneg %p116
        $region18: #{ms_gradient_loss.4} parent=11 // pred_check_branch
          %230 = sbr.rel (%p228) target = $region20
        $region19: #{ms_gradient_loss.4} parent=11 // pred_region
          _
        $region20: #{ms_gradient_loss.4} parent=11 // pred_fallthru
          _
      $region12: #{ms_gradient_loss.4} parent=5 // pred_fallthru
        _
      %p231 = scmp.lt.s32.totalorder %s22, 2
      // Predicated region
      $region21: #{ms_gradient_loss.4} parent=5 // pred_check
        %p232 = pneg %p231
      $region22: #{ms_gradient_loss.4} parent=5 // pred_check_branch
        %234 = sbr.rel (%p232) target = $region24
      $region23: #{ms_gradient_loss.4} parent=5 // pred_region
        // Predicated region
        $region25: #{ms_gradient_loss.4} parent=23 // pred_check
          %p235 = pneg %p42
        $region26: #{ms_gradient_loss.4} parent=23 // pred_check_branch
          %237 = sbr.rel (%p235) target = $region28
        $region27: #{ms_gradient_loss.4} parent=23 // pred_region
          %s238 = sand.u32 %s32, 1
          %s239 = scalar_lea.sflag [#allocation4], %s238
          %s240 = sand.u32 %s32, 1
          %s241 = smul.addr %s240, 16
          %s242 = scalar_lea.vmem [#allocation3], %s241
          %s244 = ssub.s32 256, 256
          %245 = vsyncadd %s239, %s244
          %s246 = smul.addr %s22, 2
          %s247 = smul.addr %s246, 128
          %s248 = scalar_lea.hbm %s0, %s247
          %s249 = sshll.u32 %s242, 4
          %s250 = int_to_ptr.vmem [resolvable:$true] %s249
          %255 = dma.hbm_to_vmem [thread:$0]  %s248, 256, %s250, %s239, 128, 128, 8
        $region28: #{ms_gradient_loss.4} parent=23 // pred_fallthru
          _
        // Predicated region
        $region29: #{ms_gradient_loss.4} parent=23 // pred_check
          %p256 = pneg %p68
        $region30: #{ms_gradient_loss.4} parent=23 // pred_check_branch
          %258 = sbr.rel (%p256) target = $region32
        $region31: #{ms_gradient_loss.4} parent=23 // pred_region
          %s259 = sand.u32 %s58, 1
          %s260 = scalar_lea.sflag [#allocation7], %s259
          %s261 = sand.u32 %s58, 1
          %s262 = smul.addr %s261, 16
          %s263 = scalar_lea.vmem [#allocation6], %s262
          %s265 = ssub.s32 256, 256
          %266 = vsyncadd %s260, %s265
          %s267 = smul.addr %s22, 2
          %s268 = smul.addr %s267, 128
          %s269 = scalar_lea.hbm %s1, %s268
          %s270 = sshll.u32 %s263, 4
          %s271 = int_to_ptr.vmem [resolvable:$true] %s270
          %276 = dma.hbm_to_vmem [thread:$0]  %s269, 256, %s271, %s260, 128, 128, 8
        $region32: #{ms_gradient_loss.4} parent=23 // pred_fallthru
          _
      $region24: #{ms_gradient_loss.4} parent=5 // pred_fallthru
        _
      %p277 = scmp.le.s32.totalorder 1, %s22
      %p278 = scmp.lt.s32.totalorder %s22, 3
      %p279 = pnand %p277, %p278
      %p280 = pneg %p279
      // Predicated region
      $region33: #{ms_gradient_loss.4} parent=5 // pred_check
        _
      $region34: #{ms_gradient_loss.4} parent=5 // pred_check_branch
        %282 = sbr.rel (%p279) target = $region36
      $region35: #{ms_gradient_loss.4} parent=5 // pred_region
        %s283 = ssub.s32 %s22, 1
        %s284 = sand.u32 %s35, 1
        %s285 = scalar_lea.sflag [#allocation4], %s284
        %s286 = sand.u32 %s35, 1
        %s287 = smul.addr %s286, 16
        %s288 = scalar_lea.vmem [#allocation3], %s287
        // Predicated region
        $region37: #{ms_gradient_loss.4} parent=35 // pred_check
          %p289 = pneg %p48
        $region38: #{ms_gradient_loss.4} parent=35 // pred_check_branch
          %291 = sbr.rel (%p289) target = $region40
        $region39: #{ms_gradient_loss.4} parent=35 // pred_region
          %292 = dma.done %s285, 256
        $region40: #{ms_gradient_loss.4} parent=35 // pred_fallthru
          _
        %s293 = sand.u32 %s61, 1
        %s294 = scalar_lea.sflag [#allocation7], %s293
        %s295 = sand.u32 %s61, 1
        %s296 = smul.addr %s295, 16
        %s297 = scalar_lea.vmem [#allocation6], %s296
        // Predicated region
        $region41: #{ms_gradient_loss.4} parent=35 // pred_check
          %p298 = pneg %p74
        $region42: #{ms_gradient_loss.4} parent=35 // pred_check_branch
          %300 = sbr.rel (%p298) target = $region44
        $region43: #{ms_gradient_loss.4} parent=35 // pred_region
          %301 = dma.done %s294, 256
        $region44: #{ms_gradient_loss.4} parent=35 // pred_fallthru
          _
        %s302 = sand.u32 %s35, 1
        %s303 = scalar_lea.sflag [#allocation4], %s302
        %s304 = sand.u32 %s35, 1
        %s305 = smul.addr %s304, 16
        %s306 = scalar_lea.vmem [#allocation3], %s305
        %p307 = pneg %p48
        %p308 = pneg %p45
        %s309 = sand.u32 %s61, 1
        %s310 = scalar_lea.sflag [#allocation7], %s309
        %s311 = sand.u32 %s61, 1
        %s312 = smul.addr %s311, 16
        %s313 = scalar_lea.vmem [#allocation6], %s312
        %p314 = pneg %p74
        %p315 = pneg %p71
        %p316 = pneg %p95
        %p317 = pneg %p92
        %p318 = pneg %p116
        %p319 = pneg %p113
        %p320 = pneg %p137
        %p321 = pneg %p134
        %p322 = pneg %p158
        %p323 = pneg %p155
        %p324 = pneg %p184
        %p325 = pneg %p181
        %p326 = scmp.lt.s32.totalorder %s27, 1
        %s327 = scalar_select %p326, %s27, 1
        %s328 = smul.addr %s327, 8
        %s329 = scalar_lea.vmem %s6, %s328
        %p330 = pneg %p210
        %p331 = pneg %p207
        %p332 = scmp.lt.s32.totalorder %s27, 1
        %s333 = scalar_select %p332, %s27, 1
        %s334 = smul.addr %s333, 8
        %s335 = scalar_lea.vmem %s7, %s334
        %p336 = scmp.lt.s32.totalorder %s27, 1
        %s337 = scalar_select %p336, %s27, 1
        %s338 = smul.addr %s337, 8
        %s339 = scalar_lea.vmem %s6, %s338
        %p340 = scmp.lt.s32.totalorder %s27, 1
        %s341 = scalar_select %p340, %s27, 1
        %s342 = smul.addr %s341, 8
        %s343 = scalar_lea.vmem %s7, %s342
        %p344 = scmp.eq.s32.totalorder %s27, 0
        // Predicated region
        $region45: #{ms_gradient_loss.4} parent=35 // pred_check
          %p345 = pneg %p344
        $region46: #{ms_gradient_loss.4} parent=35 // pred_check_branch
          %347 = sbr.rel (%p345) target = $region48
        $region47: #{ms_gradient_loss.4} parent=35 // pred_region
          %s348 = scalar_lea.smem [#allocation2], 0
          %349 = sst [smem:[%s348]] 0.0
          %s350 = scalar_lea.smem [#allocation2], 1
          %351 = sst [smem:[%s350]] 0.0
        $region48: #{ms_gradient_loss.4} parent=35 // pred_fallthru
          _
        %v352 = vld [vmem:[%s288] sm:$0xff]
        %v353 = vld [vmem:[%s288 + $0x8] sm:$0xff]
        %v354 = vld [vmem:[%s297] sm:$0xff]
        %v355 = vld [vmem:[%s297 + $0x8] sm:$0xff]
        %v356 = vlaneseq
        %v357 = vshrl.u32 %v356, 7
        %v358 = vadd.s32 %v357, 8
        %vm359 = vcmp.eq.s32.totalorder %v357, 0
        %vm360 = vcmp.eq.s32.totalorder %v358, 0
        %vm361 = vcmp.eq.s32.totalorder %v357, 15
        %vm362 = vcmp.eq.s32.totalorder %v358, 15
        %365 = vrot.lane.b32.xlu0 %v352, 127
        %v366 = vpop.permute.xlu0 %365
        %367 = vrot.lane.b32.xlu0 %v353, 127
        %v368 = vpop.permute.xlu0 %367
        %vm371 = vcmask 121856
        %v372 = vsel %vm371, %v366, %v352
        %v373 = vsel %vm371, %v368, %v353
        %374 = vrot.lane.b32.xlu0 %v352, 1
        %v375 = vpop.permute.xlu0 %374
        %376 = vrot.lane.b32.xlu0 %v353, 1
        %v377 = vpop.permute.xlu0 %376
        %vm380 = vcmask 7168
        %v381 = vsel %vm380, %v352, %v375
        %v382 = vsel %vm380, %v353, %v377
        %v383 = vsub.f32 %v372, %v381
        %v384 = vsub.f32 %v373, %v382
        %v385 = vrot.slane %v383, 7
        %v386 = vrot.slane %v384, 7
        %vm387 = vcmp.lt.s32.totalorder %v357, 1
        %v388 = vsel %vm387, %v385, %v386
        %v389 = vsel %vm387, %v386, %v385
        %v390 = vsel %vm359, %v383, %v389
        %v391 = vsel %vm360, %v384, %v388
        %v392 = vmul.f32 %v383, 2.0
        %v393 = vmul.f32 %v384, 2.0
        %v394 = vadd.f32 %v390, %v392
        %v395 = vadd.f32 %v391, %v393
        %v396 = vrot.slane %v383, 1
        %v397 = vrot.slane %v384, 1
        %vm398 = vcmp.lt.s32.totalorder %v357, 7
        %v399 = vsel %vm398, %v396, %v397
        %v400 = vsel %vm398, %v397, %v396
        %v401 = vsel %vm361, %v383, %v399
        %v402 = vsel %vm362, %v384, %v400
        %v403 = vadd.f32 %v394, %v401
        %v404 = vadd.f32 %v395, %v402
        %v405 = vmul.f32 %v403, 0.125
        %v406 = vmul.f32 %v404, 0.125
        %v407 = vrot.slane %v352, 1
        %v408 = vrot.slane %v353, 1
        %v409 = vsel %vm398, %v407, %v408
        %v410 = vsel %vm398, %v408, %v407
        %v411 = vsel %vm361, %v352, %v409
        %v412 = vsel %vm362, %v353, %v410
        %v413 = vrot.slane %v352, 7
        %v414 = vrot.slane %v353, 7
        %v415 = vsel %vm387, %v413, %v414
        %v416 = vsel %vm387, %v414, %v413
        %v417 = vsel %vm359, %v352, %v416
        %v418 = vsel %vm360, %v353, %v415
        %v419 = vsub.f32 %v411, %v417
        %v420 = vsub.f32 %v412, %v418
        %423 = vrot.lane.b32.xlu0 %v419, 1
        %v424 = vpop.permute.xlu0 %423
        %425 = vrot.lane.b32.xlu0 %v420, 1
        %v426 = vpop.permute.xlu0 %425
        %v429 = vsel %vm380, %v419, %v424
        %v430 = vsel %vm380, %v420, %v426
        %v431 = vmul.f32 %v419, 2.0
        %v432 = vmul.f32 %v420, 2.0
        %v433 = vadd.f32 %v429, %v431
        %v434 = vadd.f32 %v430, %v432
        %435 = vrot.lane.b32.xlu0 %v419, 127
        %v436 = vpop.permute.xlu0 %435
        %437 = vrot.lane.b32.xlu0 %v420, 127
        %v438 = vpop.permute.xlu0 %437
        %v441 = vsel %vm371, %v436, %v419
        %v442 = vsel %vm371, %v438, %v420
        %v443 = vadd.f32 %v433, %v441
        %v444 = vadd.f32 %v434, %v442
        %v445 = vmul.f32 %v443, 0.125
        %v446 = vmul.f32 %v444, 0.125
        %v447 = vsub.f32 %v354, %v352
        %v448 = vsub.f32 %v355, %v353
        %451 = vrot.lane.b32.xlu0 %v447, 127
        %v452 = vpop.permute.xlu0 %451
        %453 = vrot.lane.b32.xlu0 %v448, 127
        %v454 = vpop.permute.xlu0 %453
        %v457 = vsel %vm371, %v452, %v447
        %v458 = vsel %vm371, %v454, %v448
        %459 = vrot.lane.b32.xlu0 %v447, 1
        %v460 = vpop.permute.xlu0 %459
        %461 = vrot.lane.b32.xlu0 %v448, 1
        %v462 = vpop.permute.xlu0 %461
        %v465 = vsel %vm380, %v447, %v460
        %v466 = vsel %vm380, %v448, %v462
        %v467 = vsub.f32 %v457, %v465
        %v468 = vsub.f32 %v458, %v466
        %v469 = vrot.slane %v467, 7
        %v470 = vrot.slane %v468, 7
        %v471 = vsel %vm387, %v469, %v470
        %v472 = vsel %vm387, %v470, %v469
        %v473 = vsel %vm359, %v467, %v472
        %v474 = vsel %vm360, %v468, %v471
        %v475 = vmul.f32 %v467, 2.0
        %v476 = vmul.f32 %v468, 2.0
        %v477 = vadd.f32 %v473, %v475
        %v478 = vadd.f32 %v474, %v476
        %v479 = vrot.slane %v467, 1
        %v480 = vrot.slane %v468, 1
        %v481 = vsel %vm398, %v479, %v480
        %v482 = vsel %vm398, %v480, %v479
        %v483 = vsel %vm361, %v467, %v481
        %v484 = vsel %vm362, %v468, %v482
        %v485 = vadd.f32 %v477, %v483
        %v486 = vadd.f32 %v478, %v484
        %v487 = vmul.f32 %v485, 0.125
        %v488 = vmul.f32 %v486, 0.125
        %v489 = vrot.slane %v447, 1
        %v490 = vrot.slane %v448, 1
        %v491 = vsel %vm398, %v489, %v490
        %v492 = vsel %vm398, %v490, %v489
        %v493 = vsel %vm361, %v447, %v491
        %v494 = vsel %vm362, %v448, %v492
        %v495 = vrot.slane %v447, 7
        %v496 = vrot.slane %v448, 7
        %v497 = vsel %vm387, %v495, %v496
        %v498 = vsel %vm387, %v496, %v495
        %v499 = vsel %vm359, %v447, %v498
        %v500 = vsel %vm360, %v448, %v497
        %v501 = vsub.f32 %v493, %v499
        %v502 = vsub.f32 %v494, %v500
        %505 = vrot.lane.b32.xlu0 %v501, 1
        %v506 = vpop.permute.xlu0 %505
        %507 = vrot.lane.b32.xlu0 %v502, 1
        %v508 = vpop.permute.xlu0 %507
        %v511 = vsel %vm380, %v501, %v506
        %v512 = vsel %vm380, %v502, %v508
        %v513 = vmul.f32 %v501, 2.0
        %v514 = vmul.f32 %v502, 2.0
        %v515 = vadd.f32 %v511, %v513
        %v516 = vadd.f32 %v512, %v514
        %517 = vrot.lane.b32.xlu0 %v501, 127
        %v518 = vpop.permute.xlu0 %517
        %519 = vrot.lane.b32.xlu0 %v502, 127
        %v520 = vpop.permute.xlu0 %519
        %v523 = vsel %vm371, %v518, %v501
        %v524 = vsel %vm371, %v520, %v502
        %v525 = vadd.f32 %v515, %v523
        %v526 = vadd.f32 %v516, %v524
        %v527 = vmul.f32 %v525, 0.125
        %v528 = vmul.f32 %v526, 0.125
        %v529 = vand.u32 2147483647, %v405
        %v530 = vand.u32 2147483647, %v406
        %vm531 = vcmp.lt.f32.partialorder %v529, inf
        %vm532 = vcmp.lt.f32.partialorder %v530, inf
        %v533 = vand.u32 2147483647, %v445
        %v534 = vand.u32 2147483647, %v446
        %vm535 = vcmp.lt.f32.partialorder %v533, inf
        %vm536 = vcmp.lt.f32.partialorder %v534, inf
        %v537 = vand.u32 2147483647, %v487
        %v538 = vand.u32 2147483647, %v488
        %v539 = vsel %vm531, %v537, 0.0
        %v540 = vsel %vm532, %v538, 0.0
        %v541 = vand.u32 2147483647, %v527
        %v542 = vand.u32 2147483647, %v528
        %v543 = vsel %vm535, %v541, 0.0
        %v544 = vsel %vm536, %v542, 0.0
        %v545 = vadd.f32 %v539, %v543
        %v546 = vadd.f32 %v540, %v544
        %v547 = vsel %vm531, 1, 0
        %v548 = vsel %vm532, 1, 0
        %v549 = vcvt.s32.f32 %v547
        %v550 = vcvt.s32.f32 %v548
        %v551 = vsel %vm535, 1, 0
        %v552 = vsel %vm536, 1, 0
        %v553 = vcvt.s32.f32 %v551
        %v554 = vcvt.s32.f32 %v552
        %v555 = vadd.f32 %v549, %v553
        %v556 = vadd.f32 %v550, %v554
        %vm557 = vcmask 130048
        %v558 = vsel %vm557, %v545, 0.0
        %v559 = vsel %vm557, %v546, 0.0
        %v560 = vadd.f32 %v558, %v559
        %561 = vadd.xlane.f32.xlu0 %v560
        %v562 = vpop.xlane.xlu0 %561
        %v563 = vrot.slane %v562, 4
        %v564 = vadd.f32 %v562, %v563
        %v565 = vrot.slane %v564, 2
        %v566 = vadd.f32 %v564, %v565
        %v567 = vrot.slane %v566, 1
        %v568 = vadd.f32 %v566, %v567
        %s569 = vtos %v568
        %v570 = vsel %vm557, %v555, 0.0
        %v571 = vsel %vm557, %v556, 0.0
        %v572 = vadd.f32 %v570, %v571
        %573 = vadd.xlane.f32.xlu0 %v572
        %v574 = vpop.xlane.xlu0 %573
        %v575 = vrot.slane %v574, 4
        %v576 = vadd.f32 %v574, %v575
        %v577 = vrot.slane %v576, 2
        %v578 = vadd.f32 %v576, %v577
        %v579 = vrot.slane %v578, 1
        %v580 = vadd.f32 %v578, %v579
        %s581 = vtos %v580
        %s582 = sld [smem:[#allocation2]]
        %s583 = sadd.f32 %s582, %s569
        %s584 = scalar_lea.smem [#allocation2], 0
        %585 = sst [smem:[%s584]] %s583
        %s586 = sld [smem:[#allocation2 + $0x1]]
        %s587 = sadd.f32 %s586, %s581
        %s588 = scalar_lea.smem [#allocation2], 1
        %589 = sst [smem:[%s588]] %s587
        %v590 = vld [vmem:[%s2] sm:$0xff]
        %v591 = vld [vmem:[%s3] sm:$0xff]
        %v592 = vld [vmem:[%s3 + $0x8] sm:$0xff]
        %v593 = vsel %vm557, %v352, 0
        %v595 = vsel %vm557, %v353, 0
        %597 = vmatprep.subr.mxu0 0.0
        %598 = vmatpush1.msra.mxu0 %v591
        %599 = vmatprep.subr.mxu0 0.0
        %600 = vmatpush1.msra.mxu0 %v592
        %601 = vmatprep.subr.mxu0 0.0
        %602 = vmatpush1.msra.mxu0 0.0
        %603 = vmatprep.subr.mxu0 0.0
        %604 = vmatpush1.msra.mxu0 0.0
        %605 = vmatprep.subr.mxu0 0.0
        %606 = vmatpush1.msra.mxu0 0.0
        %607 = vmatprep.subr.mxu0 0.0
        %608 = vmatpush1.msra.mxu0 0.0
        %609 = vmatprep.subr.mxu0 0.0
        %610 = vmatpush1.msra.mxu0 0.0
        %611 = vmatprep.subr.mxu0 0.0
        %612 = vmatpush1.msra.mxu0 0.0
        %613 = vmatprep.subr.mxu0 0.0
        %614 = vmatpush1.msra.mxu0 0.0
        %615 = vmatprep.subr.mxu0 0.0
        %616 = vmatpush1.msra.mxu0 0.0
        %617 = vmatprep.subr.mxu0 0.0
        %618 = vmatpush1.msra.mxu0 0.0
        %619 = vmatprep.subr.mxu0 0.0
        %620 = vmatpush1.msra.mxu0 0.0
        %621 = vmatprep.subr.mxu0 0.0
        %622 = vmatpush1.msra.mxu0 0.0
        %623 = vmatprep.subr.mxu0 0.0
        %624 = vmatpush1.msra.mxu0 0.0
        %625 = vmatprep.subr.mxu0 0.0
        %626 = vmatpush1.msra.mxu0 0.0
        %627 = vmatprep.subr.mxu0 0.0
        %628 = vmatpush1.msra.mxu0 0.0
        %629 = vmatprep.subr.mxu0 0.0
        %630 = vmatpush1.msra.mxu0 0.0
        %631 = vmatprep.subr.mxu0 0.0
        %632 = vmatpush1.msra.mxu0 0.0
        %633 = vmatprep.subr.mxu0 0.0
        %634 = vmatpush1.msra.mxu0 0.0
        %635 = vmatprep.subr.mxu0 0.0
        %636 = vmatpush1.msra.mxu0 0.0
        %637 = vmatprep.subr.mxu0 0.0
        %638 = vmatpush1.msra.mxu0 0.0
        %639 = vmatprep.subr.mxu0 0.0
        %640 = vmatpush1.msra.mxu0 0.0
        %641 = vmatprep.subr.mxu0 0.0
        %642 = vmatpush1.msra.mxu0 0.0
        %643 = vmatprep.subr.mxu0 0.0
        %644 = vmatpush1.msra.mxu0 0.0
        %645 = vmatprep.subr.mxu0 0.0
        %646 = vmatpush1.msra.mxu0 0.0
        %647 = vmatprep.subr.mxu0 0.0
        %648 = vmatpush1.msra.mxu0 0.0
        %649 = vmatprep.subr.mxu0 0.0
        %650 = vmatpush1.msra.mxu0 0.0
        %651 = vmatprep.subr.mxu0 0.0
        %652 = vmatpush1.msra.mxu0 0.0
        %653 = vmatprep.subr.mxu0 0.0
        %654 = vmatpush1.msra.mxu0 0.0
        %655 = vmatprep.subr.mxu0 0.0
        %656 = vmatpush1.msra.mxu0 0.0
        %657 = vmatprep.subr.mxu0 0.0
        %658 = vmatpush1.msra.mxu0 0.0
        %659 = vmatprep.subr.mxu0 0.0
        %660 = vmatpush1.msra.mxu0 0.0
        %661 = vmatprep.mubr.f32.mxu0 0.0
        %662 = vmatmul.mubr.f32.gmra.mrb[0].mxu0 %v593
        %v663 = vpop.f32.mrb[0].mxu0
        %v664 = vadd.f32 0.0, %v663
        %v665 = vpop.f32.mrb[0].mxu0
        %666 = vmatprep.mubr.f32.mxu0 0.0
        %667 = vmatmul.mubr.f32.gmra.mrb[0].mxu0 %v595
        %v668 = vpop.f32.mrb[0].mxu0
        %v669 = vadd.f32 0.0, %v668
        %v670 = vpop.f32.mrb[0].mxu0
        %671 = vdwg.mxu0
        %v673 = vsel %vm557, %v590, 0
        %675 = vmatprep.subr.mxu0 0.0
        %676 = vmatpush1.msra.mxu0 %v664
        %677 = vmatprep.subr.mxu0 0.0
        %678 = vmatpush1.msra.mxu0 %v669
        %679 = vmatprep.subr.mxu0 0.0
        %680 = vmatpush1.msra.mxu0 0.0
        %681 = vmatprep.subr.mxu0 0.0
        %682 = vmatpush1.msra.mxu0 0.0
        %683 = vmatprep.subr.mxu0 0.0
        %684 = vmatpush1.msra.mxu0 0.0
        %685 = vmatprep.subr.mxu0 0.0
        %686 = vmatpush1.msra.mxu0 0.0
        %687 = vmatprep.subr.mxu0 0.0
        %688 = vmatpush1.msra.mxu0 0.0
        %689 = vmatprep.subr.mxu0 0.0
        %690 = vmatpush1.msra.mxu0 0.0
        %691 = vmatprep.subr.mxu0 0.0
        %692 = vmatpush1.msra.mxu0 0.0
        %693 = vmatprep.subr.mxu0 0.0
        %694 = vmatpush1.msra.mxu0 0.0
        %695 = vmatprep.subr.mxu0 0.0
        %696 = vmatpush1.msra.mxu0 0.0
        %697 = vmatprep.subr.mxu0 0.0
        %698 = vmatpush1.msra.mxu0 0.0
        %699 = vmatprep.subr.mxu0 0.0
        %700 = vmatpush1.msra.mxu0 0.0
        %701 = vmatprep.subr.mxu0 0.0
        %702 = vmatpush1.msra.mxu0 0.0
        %703 = vmatprep.subr.mxu0 0.0
        %704 = vmatpush1.msra.mxu0 0.0
        %705 = vmatprep.subr.mxu0 0.0
        %706 = vmatpush1.msra.mxu0 0.0
        %707 = vmatprep.subr.mxu0 0.0
        %708 = vmatpush1.msra.mxu0 0.0
        %709 = vmatprep.subr.mxu0 0.0
        %710 = vmatpush1.msra.mxu0 0.0
        %711 = vmatprep.subr.mxu0 0.0
        %712 = vmatpush1.msra.mxu0 0.0
        %713 = vmatprep.subr.mxu0 0.0
        %714 = vmatpush1.msra.mxu0 0.0
        %715 = vmatprep.subr.mxu0 0.0
        %716 = vmatpush1.msra.mxu0 0.0
        %717 = vmatprep.subr.mxu0 0.0
        %718 = vmatpush1.msra.mxu0 0.0
        %719 = vmatprep.subr.mxu0 0.0
        %720 = vmatpush1.msra.mxu0 0.0
        %721 = vmatprep.subr.mxu0 0.0
        %722 = vmatpush1.msra.mxu0 0.0
        %723 = vmatprep.subr.mxu0 0.0
        %724 = vmatpush1.msra.mxu0 0.0
        %725 = vmatprep.subr.mxu0 0.0
        %726 = vmatpush1.msra.mxu0 0.0
        %727 = vmatprep.subr.mxu0 0.0
        %728 = vmatpush1.msra.mxu0 0.0
        %729 = vmatprep.subr.mxu0 0.0
        %730 = vmatpush1.msra.mxu0 0.0
        %731 = vmatprep.subr.mxu0 0.0
        %732 = vmatpush1.msra.mxu0 0.0
        %733 = vmatprep.subr.mxu0 0.0
        %734 = vmatpush1.msra.mxu0 0.0
        %735 = vmatprep.subr.mxu0 0.0
        %736 = vmatpush1.msra.mxu0 0.0
        %737 = vmatprep.subr.mxu0 0.0
        %738 = vmatpush1.msra.mxu0 0.0
        %739 = vmatprep.mubr.f32.mxu0 0.0
        %740 = vmatmul.mubr.f32.gmra.mrb[0].mxu0 %v673
        %v741 = vpop.f32.mrb[0].mxu0
        %v742 = vadd.f32 0.0, %v741
        %v743 = vpop.f32.mrb[0].mxu0
        %744 = vdwg.mxu0
        %vm745 = vcmask 64512
        %746 = vst.msk [vmem:[%s339] sm:$0xff] %vm745, %v742
        %v747 = vld [vmem:[%s2] sm:$0xff]
        %v748 = vld [vmem:[%s3] sm:$0xff]
        %v749 = vld [vmem:[%s3 + $0x8] sm:$0xff]
        %v751 = vsel %vm557, %v354, 0
        %v754 = vsel %vm557, %v355, 0
        %756 = vmatprep.subr.mxu0 0.0
        %757 = vmatpush1.msra.mxu0 %v748
        %758 = vmatprep.subr.mxu0 0.0
        %759 = vmatpush1.msra.mxu0 %v749
        %760 = vmatprep.subr.mxu0 0.0
        %761 = vmatpush1.msra.mxu0 0.0
        %762 = vmatprep.subr.mxu0 0.0
        %763 = vmatpush1.msra.mxu0 0.0
        %764 = vmatprep.subr.mxu0 0.0
        %765 = vmatpush1.msra.mxu0 0.0
        %766 = vmatprep.subr.mxu0 0.0
        %767 = vmatpush1.msra.mxu0 0.0
        %768 = vmatprep.subr.mxu0 0.0
        %769 = vmatpush1.msra.mxu0 0.0
        %770 = vmatprep.subr.mxu0 0.0
        %771 = vmatpush1.msra.mxu0 0.0
        %772 = vmatprep.subr.mxu0 0.0
        %773 = vmatpush1.msra.mxu0 0.0
        %774 = vmatprep.subr.mxu0 0.0
        %775 = vmatpush1.msra.mxu0 0.0
        %776 = vmatprep.subr.mxu0 0.0
        %777 = vmatpush1.msra.mxu0 0.0
        %778 = vmatprep.subr.mxu0 0.0
        %779 = vmatpush1.msra.mxu0 0.0
        %780 = vmatprep.subr.mxu0 0.0
        %781 = vmatpush1.msra.mxu0 0.0
        %782 = vmatprep.subr.mxu0 0.0
        %783 = vmatpush1.msra.mxu0 0.0
        %784 = vmatprep.subr.mxu0 0.0
        %785 = vmatpush1.msra.mxu0 0.0
        %786 = vmatprep.subr.mxu0 0.0
        %787 = vmatpush1.msra.mxu0 0.0
        %788 = vmatprep.subr.mxu0 0.0
        %789 = vmatpush1.msra.mxu0 0.0
        %790 = vmatprep.subr.mxu0 0.0
        %791 = vmatpush1.msra.mxu0 0.0
        %792 = vmatprep.subr.mxu0 0.0
        %793 = vmatpush1.msra.mxu0 0.0
        %794 = vmatprep.subr.mxu0 0.0
        %795 = vmatpush1.msra.mxu0 0.0
        %796 = vmatprep.subr.mxu0 0.0
        %797 = vmatpush1.msra.mxu0 0.0
        %798 = vmatprep.subr.mxu0 0.0
        %799 = vmatpush1.msra.mxu0 0.0
        %800 = vmatprep.subr.mxu0 0.0
        %801 = vmatpush1.msra.mxu0 0.0
        %802 = vmatprep.subr.mxu0 0.0
        %803 = vmatpush1.msra.mxu0 0.0
        %804 = vmatprep.subr.mxu0 0.0
        %805 = vmatpush1.msra.mxu0 0.0
        %806 = vmatprep.subr.mxu0 0.0
        %807 = vmatpush1.msra.mxu0 0.0
        %808 = vmatprep.subr.mxu0 0.0
        %809 = vmatpush1.msra.mxu0 0.0
        %810 = vmatprep.subr.mxu0 0.0
        %811 = vmatpush1.msra.mxu0 0.0
        %812 = vmatprep.subr.mxu0 0.0
        %813 = vmatpush1.msra.mxu0 0.0
        %814 = vmatprep.subr.mxu0 0.0
        %815 = vmatpush1.msra.mxu0 0.0
        %816 = vmatprep.subr.mxu0 0.0
        %817 = vmatpush1.msra.mxu0 0.0
        %818 = vmatprep.subr.mxu0 0.0
        %819 = vmatpush1.msra.mxu0 0.0
        %820 = vmatprep.mubr.f32.mxu0 0.0
        %821 = vmatmul.mubr.f32.gmra.mrb[0].mxu0 %v751
        %v822 = vpop.f32.mrb[0].mxu0
        %v823 = vadd.f32 0.0, %v822
        %v824 = vpop.f32.mrb[0].mxu0
        %825 = vmatprep.mubr.f32.mxu0 0.0
        %826 = vmatmul.mubr.f32.gmra.mrb[0].mxu0 %v754
        %v827 = vpop.f32.mrb[0].mxu0
        %v828 = vadd.f32 0.0, %v827
        %v829 = vpop.f32.mrb[0].mxu0
        %830 = vdwg.mxu0
        %v832 = vsel %vm557, %v747, 0
        %834 = vmatprep.subr.mxu0 0.0
        %835 = vmatpush1.msra.mxu0 %v823
        %836 = vmatprep.subr.mxu0 0.0
        %837 = vmatpush1.msra.mxu0 %v828
        %838 = vmatprep.subr.mxu0 0.0
        %839 = vmatpush1.msra.mxu0 0.0
        %840 = vmatprep.subr.mxu0 0.0
        %841 = vmatpush1.msra.mxu0 0.0
        %842 = vmatprep.subr.mxu0 0.0
        %843 = vmatpush1.msra.mxu0 0.0
        %844 = vmatprep.subr.mxu0 0.0
        %845 = vmatpush1.msra.mxu0 0.0
        %846 = vmatprep.subr.mxu0 0.0
        %847 = vmatpush1.msra.mxu0 0.0
        %848 = vmatprep.subr.mxu0 0.0
        %849 = vmatpush1.msra.mxu0 0.0
        %850 = vmatprep.subr.mxu0 0.0
        %851 = vmatpush1.msra.mxu0 0.0
        %852 = vmatprep.subr.mxu0 0.0
        %853 = vmatpush1.msra.mxu0 0.0
        %854 = vmatprep.subr.mxu0 0.0
        %855 = vmatpush1.msra.mxu0 0.0
        %856 = vmatprep.subr.mxu0 0.0
        %857 = vmatpush1.msra.mxu0 0.0
        %858 = vmatprep.subr.mxu0 0.0
        %859 = vmatpush1.msra.mxu0 0.0
        %860 = vmatprep.subr.mxu0 0.0
        %861 = vmatpush1.msra.mxu0 0.0
        %862 = vmatprep.subr.mxu0 0.0
        %863 = vmatpush1.msra.mxu0 0.0
        %864 = vmatprep.subr.mxu0 0.0
        %865 = vmatpush1.msra.mxu0 0.0
        %866 = vmatprep.subr.mxu0 0.0
        %867 = vmatpush1.msra.mxu0 0.0
        %868 = vmatprep.subr.mxu0 0.0
        %869 = vmatpush1.msra.mxu0 0.0
        %870 = vmatprep.subr.mxu0 0.0
        %871 = vmatpush1.msra.mxu0 0.0
        %872 = vmatprep.subr.mxu0 0.0
        %873 = vmatpush1.msra.mxu0 0.0
        %874 = vmatprep.subr.mxu0 0.0
        %875 = vmatpush1.msra.mxu0 0.0
        %876 = vmatprep.subr.mxu0 0.0
        %877 = vmatpush1.msra.mxu0 0.0
        %878 = vmatprep.subr.mxu0 0.0
        %879 = vmatpush1.msra.mxu0 0.0
        %880 = vmatprep.subr.mxu0 0.0
        %881 = vmatpush1.msra.mxu0 0.0
        %882 = vmatprep.subr.mxu0 0.0
        %883 = vmatpush1.msra.mxu0 0.0
        %884 = vmatprep.subr.mxu0 0.0
        %885 = vmatpush1.msra.mxu0 0.0
        %886 = vmatprep.subr.mxu0 0.0
        %887 = vmatpush1.msra.mxu0 0.0
        %888 = vmatprep.subr.mxu0 0.0
        %889 = vmatpush1.msra.mxu0 0.0
        %890 = vmatprep.subr.mxu0 0.0
        %891 = vmatpush1.msra.mxu0 0.0
        %892 = vmatprep.subr.mxu0 0.0
        %893 = vmatpush1.msra.mxu0 0.0
        %894 = vmatprep.subr.mxu0 0.0
        %895 = vmatpush1.msra.mxu0 0.0
        %896 = vmatprep.subr.mxu0 0.0
        %897 = vmatpush1.msra.mxu0 0.0
        %898 = vmatprep.mubr.f32.mxu0 0.0
        %899 = vmatmul.mubr.f32.gmra.mrb[0].mxu0 %v832
        %v900 = vpop.f32.mrb[0].mxu0
        %v901 = vadd.f32 0.0, %v900
        %v902 = vpop.f32.mrb[0].mxu0
        %903 = vdwg.mxu0
        %904 = vst.msk [vmem:[%s343] sm:$0xff] %vm745, %v901
        %p905 = scmp.eq.s32.totalorder %s27, 1
        // Predicated region
        $region49: #{ms_gradient_loss.4} parent=35 // pred_check
          %p906 = pneg %p905
        $region50: #{ms_gradient_loss.4} parent=35 // pred_check_branch
          %908 = sbr.rel (%p906) target = $region52
        $region51: #{ms_gradient_loss.4} parent=35 // pred_region
          %s909 = sld [smem:[#allocation2]]
          %s910 = scalar_lea.smem [#allocation8], 0
          %911 = sst [smem:[%s910]] %s909
          %s912 = sld [smem:[#allocation2 + $0x1]]
          %s913 = scalar_lea.smem [#allocation9], 0
          %914 = sst [smem:[%s913]] %s912
        $region52: #{ms_gradient_loss.4} parent=35 // pred_fallthru
          _
        %p915 = scmp.lt.s32.totalorder %s27, 1
        %s916 = scalar_select %p915, %s27, 1
        %s917 = smul.addr %s916, 8
        %s918 = scalar_lea.vmem %s6, %s917
        %p919 = scmp.lt.s32.totalorder %s27, 1
        %s920 = scalar_select %p919, %s27, 1
        %s921 = smul.addr %s920, 8
        %s922 = scalar_lea.vmem %s7, %s921
        // Predicated region
        $region53: #{ms_gradient_loss.4} parent=35 // pred_check
          %p923 = pneg %p134
        $region54: #{ms_gradient_loss.4} parent=35 // pred_check_branch
          %925 = sbr.rel (%p923) target = $region56
        $region55: #{ms_gradient_loss.4} parent=35 // pred_region
          %s927 = ssub.s32 16, 16
          %928 = vsyncadd [#allocation5], %s927
          %931 = dma.smem_to_hbm [#allocation8], 16, %s4, [#allocation5]
        $region56: #{ms_gradient_loss.4} parent=35 // pred_fallthru
          _
        // Predicated region
        $region57: #{ms_gradient_loss.4} parent=35 // pred_check
          %p932 = pneg %p155
        $region58: #{ms_gradient_loss.4} parent=35 // pred_check_branch
          %934 = sbr.rel (%p932) target = $region60
        $region59: #{ms_gradient_loss.4} parent=35 // pred_region
          %s936 = ssub.s32 16, 16
          %937 = vsyncadd [#allocation10], %s936
          %940 = dma.smem_to_hbm [#allocation9], 16, %s5, [#allocation10]
        $region60: #{ms_gradient_loss.4} parent=35 // pred_fallthru
          _
        // Predicated region
        $region61: #{ms_gradient_loss.4} parent=35 // pred_check
          %p941 = pneg %p181
        $region62: #{ms_gradient_loss.4} parent=35 // pred_check_branch
          %943 = sbr.rel (%p941) target = $region64
        $region63: #{ms_gradient_loss.4} parent=35 // pred_region
          _
        $region64: #{ms_gradient_loss.4} parent=35 // pred_fallthru
          _
        // Predicated region
        $region65: #{ms_gradient_loss.4} parent=35 // pred_check
          %p944 = pneg %p207
        $region66: #{ms_gradient_loss.4} parent=35 // pred_check_branch
          %946 = sbr.rel (%p944) target = $region68
        $region67: #{ms_gradient_loss.4} parent=35 // pred_region
          _
        $region68: #{ms_gradient_loss.4} parent=35 // pred_fallthru
          _
        // Predicated region
        $region69: #{ms_gradient_loss.4} parent=35 // pred_check
          %p947 = pneg %p134
        $region70: #{ms_gradient_loss.4} parent=35 // pred_check_branch
          %949 = sbr.rel (%p947) target = $region72
        $region71: #{ms_gradient_loss.4} parent=35 // pred_region
          %950 = dma.done [#allocation5], 16
        $region72: #{ms_gradient_loss.4} parent=35 // pred_fallthru
          _
        // Predicated region
        $region73: #{ms_gradient_loss.4} parent=35 // pred_check
          %p951 = pneg %p155
        $region74: #{ms_gradient_loss.4} parent=35 // pred_check_branch
          %953 = sbr.rel (%p951) target = $region76
        $region75: #{ms_gradient_loss.4} parent=35 // pred_region
          %954 = dma.done [#allocation10], 16
        $region76: #{ms_gradient_loss.4} parent=35 // pred_fallthru
          _
        %955 = sfence
      $region36: #{ms_gradient_loss.4} parent=5 // pred_fallthru
        _
      %p956 = scmp.le.s32.totalorder 2, %s22
      // Predicated region
      $region77: #{ms_gradient_loss.4} parent=5 // pred_check
        %p957 = pneg %p956
      $region78: #{ms_gradient_loss.4} parent=5 // pred_check_branch
        %959 = sbr.rel (%p957) target = $region80
      $region79: #{ms_gradient_loss.4} parent=5 // pred_region
        %s960 = ssub.s32 %s22, 2
        // Predicated region
        $region81: #{ms_gradient_loss.4} parent=79 // pred_check
          %p961 = pneg %p187
        $region82: #{ms_gradient_loss.4} parent=79 // pred_check_branch
          %963 = sbr.rel (%p961) target = $region84
        $region83: #{ms_gradient_loss.4} parent=79 // pred_region
          %p964 = scmp.lt.s32.totalorder %s28, 1
          %s965 = scalar_select %p964, %s28, 1
          %s966 = smul.addr %s965, 8
          %s967 = scalar_lea.vmem %s6, %s966
        $region84: #{ms_gradient_loss.4} parent=79 // pred_fallthru
          _
        // Predicated region
        $region85: #{ms_gradient_loss.4} parent=79 // pred_check
          %p968 = pneg %p213
        $region86: #{ms_gradient_loss.4} parent=79 // pred_check_branch
          %970 = sbr.rel (%p968) target = $region88
        $region87: #{ms_gradient_loss.4} parent=79 // pred_region
          %p971 = scmp.lt.s32.totalorder %s28, 1
          %s972 = scalar_select %p971, %s28, 1
          %s973 = smul.addr %s972, 8
          %s974 = scalar_lea.vmem %s7, %s973
        $region88: #{ms_gradient_loss.4} parent=79 // pred_fallthru
          _
      $region80: #{ms_gradient_loss.4} parent=5 // pred_fallthru
        _
    $region6: #{ms_gradient_loss.4} parent=1 // loop_footer
      %s26 = sadd.s32 1, %s22
    $region7: #{ms_gradient_loss.4} parent=1 // loop_footer_branch
      %21 = sbr.rel target = $region3
    $region8: #{ms_gradient_loss.4} parent=1 // loop_exit
      _
    %975 = vsyncpa [#allocation4], 1
    %s976 = scalar_lea.sflag [#allocation4], 1
    %977 = vsyncpa %s976, 1
    %978 = vsyncpa [#allocation7], 1
    %s979 = scalar_lea.sflag [#allocation7], 1
    %980 = vsyncpa %s979, 1
    %981 = vsyncpa [#allocation5], 1
    %s982 = scalar_lea.sflag [#allocation5], 1
    %983 = vsyncpa %s982, 1
    %984 = vsyncpa [#allocation10], 1

</llo_original>
